<compile_context>
chip_gen: v6e
topology: v6e:2x2x1
jax: 0.10.0
libtpu: 0.0.40
codegen_flags: <defaults>
</compile_context>

<pallas_src>
import functools

import numpy as np
import jax
import jax.numpy as jnp
from jax.experimental import pallas as pl
from jax.experimental.pallas import tpu as pltpu

PATCH = 14
HIDDEN = 128              # scaled-down hidden size, lane-dense (dinov2-base uses 768)
HEADS = 2
HEAD_DIM = HIDDEN // HEADS  # 64 == real dinov2-base head_dim
MLP = 4 * HIDDEN
LAYERS = 2                # scaled-down depth (dinov2-base uses 12)
LN_EPS = 1e-6             # Dinov2 layer_norm_eps

_LAYER_PARAMS = ("ln1_g", "ln1_b", "qkv_w", "qkv_b", "o_w", "o_b", "ls1",
                 "ln2_g", "ln2_b", "fc1_w", "fc1_b", "fc2_w", "fc2_b", "ls2")


# ----------------------------- in-kernel helpers (pure jnp on values) -----------------------------

def _mm(x, w):
    """(N, K) @ (K, F) with bf16 MXU operands and f32 accumulation."""
    return jnp.dot(x.astype(jnp.bfloat16), w.astype(jnp.bfloat16),
                   preferred_element_type=jnp.float32)


def _layernorm(x, g, b):
    # x: (N, D) f32; g, b: (1, D) f32 -- statistics kept in f32.
    mu = jnp.mean(x, axis=-1, keepdims=True)
    var = jnp.mean(jnp.square(x - mu), axis=-1, keepdims=True)
    return (x - mu) * jax.lax.rsqrt(var + LN_EPS) * g + b


def _gelu_tanh(x):
    # tanh-form GELU: the transcendental goes to the EUP slot instead of a long VALU polynomial.
    # NOTE: deviates from HF Dinov2's exact erf GELU by <~1e-3 abs (flagged trade-off).
    c = 0.7978845608028654  # sqrt(2/pi)
    return 0.5 * x * (1.0 + jnp.tanh(c * (x + 0.044715 * x * x * x)))


# ----------------------------- fused transformer kernel: grid = (batch, layer) -----------------------------

def _encoder_kernel(
    patches_ref, patch_w_ref, patch_b_ref, pos_ref,
    ln1_g_ref, ln1_b_ref, qkv_w_ref, qkv_b_ref, o_w_ref, o_b_ref, ls1_ref,
    ln2_g_ref, ln2_b_ref, fc1_w_ref, fc1_b_ref, fc2_w_ref, fc2_b_ref, ls2_ref,
    lnf_g_ref, lnf_b_ref,
    out_ref, h_ref, *, n_tok, n_tok_pad,
):
    d = HIDDEN
    layer = pl.program_id(1)

    # --- layer-0 prologue: patch embed (+ CLS-last + zero pad rows, folded into pos table) ---
    @pl.when(layer == 0)
    def _init():
        # patches are pre-padded to n_tok_pad rows in the wrapper (pad rows = 0), so this is a
        # single sublane-aligned matmul + add; pos_ref already carries CLS-last and -bias rows.
        h_ref[...] = _mm(patches_ref[0], patch_w_ref[...]) + patch_b_ref[...] + pos_ref[...]

    h = h_ref[...]                                                        # (Np, D) f32

    # --- MHSA (pre-LN); 1/sqrt(head_dim) is folded into the Q weights/bias ---
    x = _layernorm(h, ln1_g_ref[0], ln1_b_ref[0])
    qkv = _mm(x, qkv_w_ref[0]) + qkv_b_ref[0]                             # (Np, 3D) f32
    o_w = o_w_ref[0]                                                      # (D, D) bf16
    kmask = jax.lax.broadcasted_iota(jnp.int32, (1, n_tok_pad), 1) < n_tok  # mask padded keys
    attn = jnp.zeros((n_tok_pad, d), jnp.float32)
    for hd in range(HEADS):        # HEADS=2, trace-time unrolled; all slices 64-lane aligned
        lo = hd * HEAD_DIM
        q = qkv[:, lo:lo + HEAD_DIM]
        k = qkv[:, d + lo:d + lo + HEAD_DIM]
        v = qkv[:, 2 * d + lo:2 * d + lo + HEAD_DIM]
        s = jnp.einsum('qc,kc->qk', q.astype(jnp.bfloat16), k.astype(jnp.bfloat16),
                       preferred_element_type=jnp.float32)                # (Np, Np)
        s = jnp.where(kmask, s, -1e30)
        s = s - jnp.max(s, axis=-1, keepdims=True)
        p = jnp.exp(s)
        p = p * pl.reciprocal(jnp.sum(p, axis=-1, keepdims=True), approx=True)
        ctx = _mm(p, v)                                                   # (Np, HEAD_DIM)
        # per-head row-slice of the output projection: fuses head-merge + out-proj (no concat).
        attn = attn + _mm(ctx, o_w[lo:lo + HEAD_DIM, :])
    attn = attn + o_b_ref[0]
    h = h + attn * ls1_ref[0]                                             # LayerScale1 + residual
    # TODO(synk): for realistic token counts (~1370) this full-score attention should become an
    #             online-softmax (flash) pattern tiled over a KV grid axis.

    # --- MLP (pre-LN) ---
    x = _layernorm(h, ln2_g_ref[0], ln2_b_ref[0])
    x = _mm(x, fc1_w_ref[0]) + fc1_b_ref[0]
    x = _gelu_tanh(x)
    x = _mm(x, fc2_w_ref[0]) + fc2_b_ref[0]
    h = h + x * ls2_ref[0]                                                # LayerScale2 + residual

    h_ref[...] = h

    # --- epilogue: final LayerNorm, write the full aligned slab (CLS/pad dropped in the wrapper) ---
    @pl.when(layer == pl.num_programs(1) - 1)
    def _fin():
        out_ref[0] = _layernorm(h, lnf_g_ref[...], lnf_b_ref[...])


# ----------------------------- bilinear resize kernel (one plane per parallel grid step) -----------------------------

def _bilinear_kernel(a_ref, bt_ref, img_ref, o_ref):
    # out = A @ plane @ B^T ; interpolation matrices are NOT replicated (constant-resident blocks).
    plane = img_ref[0]                                                    # (H, W)
    tmp = jnp.dot(a_ref[...], plane, preferred_element_type=jnp.float32)  # (h_out, W)
    o_ref[0] = jnp.dot(tmp, bt_ref[...], preferred_element_type=jnp.float32)


def _interp_matrix(in_size, out_size):
    # Row-stochastic matrix reproducing torch F.interpolate bilinear, align_corners=False.
    i = np.arange(out_size)
    scale = in_size / out_size
    src = np.maximum((i + 0.5) * scale - 0.5, 0.0)
    x0 = np.minimum(np.floor(src).astype(np.int64), in_size - 1)
    x1 = np.minimum(x0 + 1, in_size - 1)
    lam = (src - x0).astype(np.float32)
    m = np.zeros((out_size, in_size), np.float32)
    m[i, x0] += (1.0 - lam)
    m[i, x1] += lam
    return m


def bilinear_resize(images, h_out, w_out):
    b, c, h, w = images.shape
    a_mat = jnp.asarray(_interp_matrix(h, h_out))            # (h_out, h)
    bt_mat = jnp.asarray(_interp_matrix(w, w_out).T)         # (w, w_out)
    planes = images.reshape(b * c, h, w)
    out = pl.pallas_call(
        _bilinear_kernel,
        grid=(b * c,),
        in_specs=[pl.BlockSpec((h_out, h), lambda p: (0, 0)),
                  pl.BlockSpec((w, w_out), lambda p: (0, 0)),
                  pl.BlockSpec((1, h, w), lambda p: (p, 0, 0))],
        out_specs=pl.BlockSpec((1, h_out, w_out), lambda p: (p, 0, 0)),
        out_shape=jax.ShapeDtypeStruct((b * c, h_out, w_out), jnp.float32),
        compiler_params=pltpu.CompilerParams(
            dimension_semantics=("parallel",),
            vmem_limit_bytes=32 * 1024 * 1024),
    )(a_mat, bt_mat, planes)
    return out.reshape(b, c, h_out, w_out)


# ----------------------------- parameters (synthetic, deterministic) -----------------------------

def init_params(key, num_patches, in_channels):
    keys = jax.random.split(key, 4 + LAYERS)

    def nrm(k, shape, s=0.02, dtype=jnp.float32):
        return (s * jax.random.normal(k, shape, jnp.float32)).astype(dtype)

    scale = 1.0 / float(np.sqrt(HEAD_DIM))
    n_tok = 1 + num_patches
    n_tok_pad = -(-n_tok // 8) * 8

    per = {n: [] for n in _LAYER_PARAMS}
    for l in range(LAYERS):
        lk = jax.random.split(keys[4 + l], 6)
        q_w = nrm(lk[0], (HIDDEN, HIDDEN))
        k_w = nrm(lk[1], (HIDDEN, HIDDEN))
        v_w = nrm(lk[2], (HIDDEN, HIDDEN))
        # Fused QKV with the 1/sqrt(head_dim) attention scale folded into Q (bias is zero here):
        # softmax((xWq')(xWk)^T) == softmax(((xWq)(xWk)^T) / sqrt(dh)).
        per["qkv_w"].append(jnp.concatenate([q_w * scale, k_w, v_w], axis=1).astype(jnp.bfloat16))
        per["qkv_b"].append(jnp.zeros((1, 3 * HIDDEN), jnp.float32))
        per["ln1_g"].append(jnp.ones((1, HIDDEN), jnp.float32))
        per["ln1_b"].append(jnp.zeros((1, HIDDEN), jnp.float32))
        per["o_w"].append(nrm(lk[3], (HIDDEN, HIDDEN), dtype=jnp.bfloat16))
        per["o_b"].append(jnp.zeros((1, HIDDEN), jnp.float32))
        per["ls1"].append(jnp.ones((1, HIDDEN), jnp.float32))   # Dinov2 layerscale_value = 1.0
        per["ln2_g"].append(jnp.ones((1, HIDDEN), jnp.float32))
        per["ln2_b"].append(jnp.zeros((1, HIDDEN), jnp.float32))
        per["fc1_w"].append(nrm(lk[4], (HIDDEN, MLP), dtype=jnp.bfloat16))
        per["fc1_b"].append(jnp.zeros((1, MLP), jnp.float32))
        per["fc2_w"].append(nrm(lk[5], (MLP, HIDDEN), dtype=jnp.bfloat16))
        per["fc2_b"].append(jnp.zeros((1, HIDDEN), jnp.float32))
        per["ls2"].append(jnp.ones((1, HIDDEN), jnp.float32))

    patch_b = jnp.zeros((1, HIDDEN), jnp.float32)
    cls_tok = nrm(keys[1], (1, HIDDEN))
    # TODO(synk): real DINOv2 bicubic-interpolates pretrain-resolution pos-embeds; synthetic
    #             pos-embeds are created directly at the runtime patch count here.
    pos_patch = nrm(keys[2], (num_patches, HIDDEN))
    pos_cls = nrm(keys[3], (1, HIDDEN))
    # Token-constant table with CLS kept LAST and conv-bias compensation on CLS/pad rows, so the
    # kernel prologue is a single aligned matmul + add (rows: pos_i | cls+pos_cls-b | -b ...).
    rows = [pos_patch, cls_tok + pos_cls - patch_b]
    if n_tok_pad > n_tok:
        rows.append(jnp.tile(-patch_b, (n_tok_pad - n_tok, 1)))
    pos = jnp.concatenate(rows, axis=0)

    params = {
        "patch_w": nrm(keys[0], (in_channels * PATCH * PATCH, HIDDEN), dtype=jnp.bfloat16),
        "patch_b": patch_b,
        "pos": pos,
        "lnf_g": jnp.ones((1, HIDDEN), jnp.float32),
        "lnf_b": jnp.zeros((1, HIDDEN), jnp.float32),
    }
    params.update({n: jnp.stack(v) for n, v in per.items()})
    return params


# ----------------------------- forward -----------------------------

def dino_v2_encoder(images, params):
    b, c, h, w = images.shape
    h_t, w_t = h + h % PATCH, w + w % PATCH

    # 1) F.interpolate(..., mode='bilinear'): one Pallas call, parallel grid over B*C planes.
    x = bilinear_resize(images, h_t, w_t)                               # (B, C, h_t, w_t)

    # 2) patch extraction.
    # TODO(synk): patchify glue stays in XLA (fusing it into the resize kernel needs an in-kernel
    #             5-D transpose with no guaranteed Mosaic lowering); costs ~2 extra HBM passes.
    nh, nw = h_t // PATCH, w_t // PATCH
    np_tok = nh * nw
    n_tok = 1 + np_tok
    n_tok_pad = -(-n_tok // 8) * 8
    patches = x[:, :, :nh * PATCH, :nw * PATCH]
    patches = patches.reshape(b, c, nh, PATCH, nw, PATCH)
    patches = patches.transpose(0, 2, 4, 1, 3, 5).reshape(b, np_tok, c * PATCH * PATCH)
    # pad the token (sublane) axis to a multiple of 8; pad rows are zero and key-masked in-kernel.
    patches = jnp.pad(patches, ((0, 0), (0, n_tok_pad - np_tok), (0, 0)))

    # 3) the entire transformer stack in ONE pallas_call; grid = (batch, layer).
    def full(shape):
        return pl.BlockSpec(shape, lambda bb, ll: (0,) * len(shape))

    def per_layer(shape):
        return pl.BlockSpec((1,) + shape[1:], lambda bb, ll: (ll,) + (0,) * (len(shape) - 1))

    in_specs = (
        [pl.BlockSpec((1, n_tok_pad, patches.shape[-1]), lambda bb, ll: (bb, 0, 0)),
         full(params["patch_w"].shape), full(params["patch_b"].shape), full(params["pos"].shape)]
        + [per_layer(params[n].shape) for n in _LAYER_PARAMS]
        + [full(params["lnf_g"].shape), full(params["lnf_b"].shape)]
    )

    feats = pl.pallas_call(
        functools.partial(_encoder_kernel, n_tok=n_tok, n_tok_pad=n_tok_pad),
        grid=(b, LAYERS),
        in_specs=in_specs,
        out_specs=pl.BlockSpec((1, n_tok_pad, HIDDEN), lambda bb, ll: (bb, 0, 0)),
        out_shape=jax.ShapeDtypeStruct((b, n_tok_pad, HIDDEN), jnp.float32),
        scratch_shapes=[pltpu.VMEM((n_tok_pad, HIDDEN), jnp.float32)],
        compiler_params=pltpu.CompilerParams(
            dimension_semantics=("parallel", "arbitrary"),
            vmem_limit_bytes=48 * 1024 * 1024),
    )(patches, params["patch_w"], params["patch_b"], params["pos"],
      *[params[n] for n in _LAYER_PARAMS],
      params["lnf_g"], params["lnf_b"])

    # 4) drop CLS (last real token) + pad rows, Dinov2Backbone output layout (B, D, nh, nw).
    feats = feats[:, :np_tok, :]
    return feats.reshape(b, nh, nw, HIDDEN).transpose(0, 3, 1, 2)


if __name__ == "__main__":
    key = jax.random.PRNGKey(0)
    k_img, k_par = jax.random.split(key)

    B, C, H, W = 2, 3, 30, 30                 # small NCHW input; 30 -> 32 (=30 + 30%14)
    images = jax.random.normal(k_img, (B, C, H, W), jnp.float32)

    h_t, w_t = H + H % PATCH, W + W % PATCH
    num_patches = (h_t // PATCH) * (w_t // PATCH)
    params = init_params(k_par, num_patches, C)

    out = jax.jit(dino_v2_encoder)(images, params)
    out = jax.block_until_ready(out)

    assert out.shape == (B, HIDDEN, h_t // PATCH, w_t // PATCH), out.shape
    assert out.dtype == jnp.float32
    assert bool(jnp.all(jnp.isfinite(out)))
    print("KERNEL_OK")
</pallas_src>

<mosaic_0001>
module attributes {stable_mosaic.version = 11 : i64} {
  func.func @_bilinear_kernel(%arg0: i32, %arg1: memref<32x30xf32, #tpu.memory_space<vmem>>, %arg2: memref<30x32xf32, #tpu.memory_space<vmem>>, %arg3: memref<1x30x30xf32, #tpu.memory_space<vmem>>, %arg4: memref<1x32x32xf32, #tpu.memory_space<vmem>>) attributes {dimension_semantics = [#tpu.dimension_semantics<parallel>], iteration_bounds = array<i64: 6>, scalar_prefetch = 0 : i64, scratch_operands = 0 : i64, tpu.core_type = #tpu.core_type<tc>, window_params = [{pipeline_mode = #tpu.pipeline_mode<synchronous>, transform_indices = @transform_0, window_bounds = array<i64: 32, 30>}, {pipeline_mode = #tpu.pipeline_mode<synchronous>, transform_indices = @transform_1, window_bounds = array<i64: 30, 32>}, {transform_indices = @transform_2, window_bounds = array<i64: 1, 30, 30>}, {transform_indices = @transform_3, window_bounds = array<i64: 1, 32, 32>}]} {
    %c0 = arith.constant 0 : index
    %c0_0 = arith.constant 0 : index
    %c0_1 = arith.constant 0 : index
    %0 = vector.load %arg3[%c0, %c0_0, %c0_1] : memref<1x30x30xf32, #tpu.memory_space<vmem>>, vector<1x30x30xf32>
    %1 = vector.shape_cast %0 : vector<1x30x30xf32> to vector<30x30xf32>
    %c0_2 = arith.constant 0 : index
    %c0_3 = arith.constant 0 : index
    %2 = vector.load %arg1[%c0_2, %c0_3] : memref<32x30xf32, #tpu.memory_space<vmem>>, vector<32x30xf32>
    %cst = arith.constant dense<0.000000e+00> : vector<32x30xf32>
    %3 = tpu.matmul %2, %1, %cst {dimension_numbers = #tpu.dot_dimension_numbers<[1], [0], [0], [1], [0, 0, 1, 1], [], []>} : vector<32x30xf32>, vector<30x30xf32>, vector<32x30xf32> -> vector<32x30xf32>
    %c0_4 = arith.constant 0 : index
    %c0_5 = arith.constant 0 : index
    %4 = vector.load %arg2[%c0_4, %c0_5] : memref<30x32xf32, #tpu.memory_space<vmem>>, vector<30x32xf32>
    %cst_6 = arith.constant dense<0.000000e+00> : vector<32x32xf32>
    %5 = tpu.matmul %3, %4, %cst_6 {dimension_numbers = #tpu.dot_dimension_numbers<[1], [0], [0], [1], [0, 0, 1, 1], [], []>} : vector<32x30xf32>, vector<30x32xf32>, vector<32x32xf32> -> vector<32x32xf32>
    %c0_7 = arith.constant 0 : index
    %c0_8 = arith.constant 0 : index
    %c0_9 = arith.constant 0 : index
    %6 = vector.load %arg4[%c0_7, %c0_8, %c0_9] : memref<1x32x32xf32, #tpu.memory_space<vmem>>, vector<1x32x32xf32>
    %7 = vector.shape_cast %6 : vector<1x32x32xf32> to vector<32x32xf32>
    %8 = vector.shape_cast %5 : vector<32x32xf32> to vector<1x32x32xf32>
    tpu.vector_store %arg4[%c0_7, %c0_8, %c0_9], %8 {strides = array<i32>} : memref<1x32x32xf32, #tpu.memory_space<vmem>>, vector<1x32x32xf32>,
    return
  }
  func.func @transform_0(%arg0: i32) -> (i32, i32) {
    %c0_i32 = arith.constant 0 : i32
    %c0_i32_0 = arith.constant 0 : i32
    %c0_i32_1 = arith.constant 0 : i32
    return %c0_i32, %c0_i32_0 : i32, i32
  }
  func.func @transform_1(%arg0: i32) -> (i32, i32) {
    %c0_i32 = arith.constant 0 : i32
    %c0_i32_0 = arith.constant 0 : i32
    %c0_i32_1 = arith.constant 0 : i32
    return %c0_i32, %c0_i32_0 : i32, i32
  }
  func.func @transform_2(%arg0: i32) -> (i32, i32, i32) {
    %c0_i32 = arith.constant 0 : i32
    %c0_i32_0 = arith.constant 0 : i32
    %c0_i32_1 = arith.constant 0 : i32
    return %arg0, %c0_i32, %c0_i32_0 : i32, i32, i32
  }
  func.func @transform_3(%arg0: i32) -> (i32, i32, i32) {
    %c0_i32 = arith.constant 0 : i32
    %c0_i32_0 = arith.constant 0 : i32
    %c0_i32_1 = arith.constant 0 : i32
    return %arg0, %c0_i32, %c0_i32_0 : i32, i32, i32
  }
}

module attributes {stable_mosaic.version = 11 : i64} {
  func.func @_encoder_kernel(%arg0: i32, %arg1: i32, %arg2: memref<1x8x588xf32, #tpu.memory_space<vmem>>, %arg3: memref<588x128xbf16, #tpu.memory_space<vmem>>, %arg4: memref<1x128xf32, #tpu.memory_space<vmem>>, %arg5: memref<8x128xf32, #tpu.memory_space<vmem>>, %arg6: memref<1x1x128xf32, #tpu.memory_space<vmem>>, %arg7: memref<1x1x128xf32, #tpu.memory_space<vmem>>, %arg8: memref<1x128x384xbf16, #tpu.memory_space<vmem>>, %arg9: memref<1x1x384xf32, #tpu.memory_space<vmem>>, %arg10: memref<1x128x128xbf16, #tpu.memory_space<vmem>>, %arg11: memref<1x1x128xf32, #tpu.memory_space<vmem>>, %arg12: memref<1x1x128xf32, #tpu.memory_space<vmem>>, %arg13: memref<1x1x128xf32, #tpu.memory_space<vmem>>, %arg14: memref<1x1x128xf32, #tpu.memory_space<vmem>>, %arg15: memref<1x128x512xbf16, #tpu.memory_space<vmem>>, %arg16: memref<1x1x512xf32, #tpu.memory_space<vmem>>, %arg17: memref<1x512x128xbf16, #tpu.memory_space<vmem>>, %arg18: memref<1x1x128xf32, #tpu.memory_space<vmem>>, %arg19: memref<1x1x128xf32, #tpu.memory_space<vmem>>, %arg20: memref<1x128xf32, #tpu.memory_space<vmem>>, %arg21: memref<1x128xf32, #tpu.memory_space<vmem>>, %arg22: memref<1x8x128xf32, #tpu.memory_space<vmem>>, %arg23: memref<8x128xf32, #tpu.memory_space<vmem>>) attributes {dimension_semantics = [#tpu.dimension_semantics<parallel>, #tpu.dimension_semantics<arbitrary>], iteration_bounds = array<i64: 2, 2>, scalar_prefetch = 0 : i64, scratch_operands = 1 : i64, tpu.core_type = #tpu.core_type<tc>, window_params = [{transform_indices = @transform_0, window_bounds = array<i64: 1, 8, 588>}, {pipeline_mode = #tpu.pipeline_mode<synchronous>, transform_indices = @transform_1, window_bounds = array<i64: 588, 128>}, {pipeline_mode = #tpu.pipeline_mode<synchronous>, transform_indices = @transform_2, window_bounds = array<i64: 1, 128>}, {pipeline_mode = #tpu.pipeline_mode<synchronous>, transform_indices = @transform_3, window_bounds = array<i64: 8, 128>}, {transform_indices = @transform_4, window_bounds = array<i64: 1, 1, 128>}, {transform_indices = @transform_5, window_bounds = array<i64: 1, 1, 128>}, {transform_indices = @transform_6, window_bounds = array<i64: 1, 128, 384>}, {transform_indices = @transform_7, window_bounds = array<i64: 1, 1, 384>}, {transform_indices = @transform_8, window_bounds = array<i64: 1, 128, 128>}, {transform_indices = @transform_9, window_bounds = array<i64: 1, 1, 128>}, {transform_indices = @transform_10, window_bounds = array<i64: 1, 1, 128>}, {transform_indices = @transform_11, window_bounds = array<i64: 1, 1, 128>}, {transform_indices = @transform_12, window_bounds = array<i64: 1, 1, 128>}, {transform_indices = @transform_13, window_bounds = array<i64: 1, 128, 512>}, {transform_indices = @transform_14, window_bounds = array<i64: 1, 1, 512>}, {transform_indices = @transform_15, window_bounds = array<i64: 1, 512, 128>}, {transform_indices = @transform_16, window_bounds = array<i64: 1, 1, 128>}, {transform_indices = @transform_17, window_bounds = array<i64: 1, 1, 128>}, {pipeline_mode = #tpu.pipeline_mode<synchronous>, transform_indices = @transform_18, window_bounds = array<i64: 1, 128>}, {pipeline_mode = #tpu.pipeline_mode<synchronous>, transform_indices = @transform_19, window_bounds = array<i64: 1, 128>}, {transform_indices = @transform_20, window_bounds = array<i64: 1, 8, 128>}]} {
    %c0_i32 = arith.constant 0 : i32
    %0 = arith.cmpi eq, %arg1, %c0_i32 : i32
    %1 = arith.extui %0 : i1 to i32
    %c0_i32_0 = arith.constant 0 : i32
    %2 = arith.cmpi ne, %1, %c0_i32_0 : i32
    scf.if %2 {
      %c0_76 = arith.constant 0 : index
      %c0_77 = arith.constant 0 : index
      %c0_78 = arith.constant 0 : index
      %171 = vector.load %arg2[%c0_76, %c0_77, %c0_78] : memref<1x8x588xf32, #tpu.memory_space<vmem>>, vector<1x8x588xf32>
      %172 = vector.shape_cast %171 : vector<1x8x588xf32> to vector<8x588xf32>
      %c0_79 = arith.constant 0 : index
      %c0_80 = arith.constant 0 : index
      %173 = vector.load %arg3[%c0_79, %c0_80] : memref<588x128xbf16, #tpu.memory_space<vmem>>, vector<588x128xbf16>
      %174 = arith.truncf %172 : vector<8x588xf32> to vector<8x588xbf16>
      %cst_81 = arith.constant dense<0.000000e+00> : vector<8x128xf32>
      %175 = tpu.matmul %174, %173, %cst_81 {dimension_numbers = #tpu.dot_dimension_numbers<[1], [0], [0], [1], [0, 0, 1, 1], [], []>} : vector<8x588xbf16>, vector<588x128xbf16>, vector<8x128xf32> -> vector<8x128xf32>
      %c0_82 = arith.constant 0 : index
      %c0_83 = arith.constant 0 : index
      %176 = vector.load %arg4[%c0_82, %c0_83] : memref<1x128xf32, #tpu.memory_space<vmem>>, vector<1x128xf32>
      %177 = vector.broadcast %176 : vector<1x128xf32> to vector<8x128xf32>
      %178 = arith.addf %175, %177 : vector<8x128xf32>
      %c0_84 = arith.constant 0 : index
      %c0_85 = arith.constant 0 : index
      %179 = vector.load %arg5[%c0_84, %c0_85] : memref<8x128xf32, #tpu.memory_space<vmem>>, vector<8x128xf32>
      %180 = arith.addf %178, %179 : vector<8x128xf32>
      %c0_86 = arith.constant 0 : index
      %c0_87 = arith.constant 0 : index
      %181 = vector.load %arg23[%c0_86, %c0_87] : memref<8x128xf32, #tpu.memory_space<vmem>>, vector<8x128xf32>
      tpu.vector_store %arg23[%c0_86, %c0_87], %180 {strides = array<i32>} : memref<8x128xf32, #tpu.memory_space<vmem>>, vector<8x128xf32>,
    } else {
    }
    %c0 = arith.constant 0 : index
    %c0_1 = arith.constant 0 : index
    %3 = vector.load %arg23[%c0, %c0_1] : memref<8x128xf32, #tpu.memory_space<vmem>>, vector<8x128xf32>
    %c0_2 = arith.constant 0 : index
    %c0_3 = arith.constant 0 : index
    %c0_4 = arith.constant 0 : index
    %4 = vector.load %arg6[%c0_2, %c0_3, %c0_4] : memref<1x1x128xf32, #tpu.memory_space<vmem>>, vector<1x1x128xf32>
    %5 = vector.shape_cast %4 : vector<1x1x128xf32> to vector<1x128xf32>
    %c0_5 = arith.constant 0 : index
    %c0_6 = arith.constant 0 : index
    %c0_7 = arith.constant 0 : index
    %6 = vector.load %arg7[%c0_5, %c0_6, %c0_7] : memref<1x1x128xf32, #tpu.memory_space<vmem>>, vector<1x1x128xf32>
    %7 = vector.shape_cast %6 : vector<1x1x128xf32> to vector<1x128xf32>
    %cst = arith.constant dense<0.000000e+00> : vector<8xf32>
    %8 = vector.multi_reduction <add>, %3, %cst [1] : vector<8x128xf32> to vector<8xf32>
    %9 = vector.shape_cast %8 : vector<8xf32> to vector<8x1xf32>
    %cst_8 = arith.constant 1.280000e+02 : f32
    %10 = vector.broadcast %cst_8 : f32 to vector<8x1xf32>
    %11 = arith.divf %9, %10 : vector<8x1xf32>
    %12 = vector.broadcast %11 : vector<8x1xf32> to vector<8x128xf32>
    %13 = arith.subf %3, %12 : vector<8x128xf32>
    %14 = arith.mulf %13, %13 : vector<8x128xf32>
    %cst_9 = arith.constant dense<0.000000e+00> : vector<8xf32>
    %15 = vector.multi_reduction <add>, %14, %cst_9 [1] : vector<8x128xf32> to vector<8xf32>
    %16 = vector.shape_cast %15 : vector<8xf32> to vector<8x1xf32>
    %cst_10 = arith.constant 1.280000e+02 : f32
    %17 = vector.broadcast %cst_10 : f32 to vector<8x1xf32>
    %18 = arith.divf %16, %17 : vector<8x1xf32>
    %19 = vector.broadcast %11 : vector<8x1xf32> to vector<8x128xf32>
    %20 = arith.subf %3, %19 : vector<8x128xf32>
    %cst_11 = arith.constant 9.99999997E-7 : f32
    %21 = vector.broadcast %cst_11 : f32 to vector<8x1xf32>
    %22 = arith.addf %18, %21 : vector<8x1xf32>
    %23 = math.rsqrt %22 : vector<8x1xf32>
    %24 = vector.broadcast %23 : vector<8x1xf32> to vector<8x128xf32>
    %25 = arith.mulf %20, %24 : vector<8x128xf32>
    %26 = vector.broadcast %5 : vector<1x128xf32> to vector<8x128xf32>
    %27 = arith.mulf %25, %26 : vector<8x128xf32>
    %28 = vector.broadcast %7 : vector<1x128xf32> to vector<8x128xf32>
    %29 = arith.addf %27, %28 : vector<8x128xf32>
    %c0_12 = arith.constant 0 : index
    %c0_13 = arith.constant 0 : index
    %c0_14 = arith.constant 0 : index
    %30 = vector.load %arg8[%c0_12, %c0_13, %c0_14] : memref<1x128x384xbf16, #tpu.memory_space<vmem>>, vector<1x128x384xbf16>
    %31 = vector.shape_cast %30 : vector<1x128x384xbf16> to vector<128x384xbf16>
    %32 = arith.truncf %29 : vector<8x128xf32> to vector<8x128xbf16>
    %cst_15 = arith.constant dense<0.000000e+00> : vector<8x384xf32>
    %33 = tpu.matmul %32, %31, %cst_15 {dimension_numbers = #tpu.dot_dimension_numbers<[1], [0], [0], [1], [0, 0, 1, 1], [], []>} : vector<8x128xbf16>, vector<128x384xbf16>, vector<8x384xf32> -> vector<8x384xf32>
    %c0_16 = arith.constant 0 : index
    %c0_17 = arith.constant 0 : index
    %c0_18 = arith.constant 0 : index
    %34 = vector.load %arg9[%c0_16, %c0_17, %c0_18] : memref<1x1x384xf32, #tpu.memory_space<vmem>>, vector<1x1x384xf32>
    %35 = vector.shape_cast %34 : vector<1x1x384xf32> to vector<1x384xf32>
    %36 = vector.broadcast %35 : vector<1x384xf32> to vector<8x384xf32>
    %37 = arith.addf %33, %36 : vector<8x384xf32>
    %c0_19 = arith.constant 0 : index
    %c0_20 = arith.constant 0 : index
    %c0_21 = arith.constant 0 : index
    %38 = vector.load %arg10[%c0_19, %c0_20, %c0_21] : memref<1x128x128xbf16, #tpu.memory_space<vmem>>, vector<1x128x128xbf16>
    %39 = vector.shape_cast %38 : vector<1x128x128xbf16> to vector<128x128xbf16>
    %40 = tpu.iota {dimensions = array<i32: 1>} : vector<1x8xi32>
    %c5_i32 = arith.constant 5 : i32
    %41 = vector.broadcast %c5_i32 : i32 to vector<1x8xi32>
    %42 = arith.cmpi slt, %40, %41 : vector<1x8xi32>
    %cst_22 = arith.constant 0.000000e+00 : f32
    %43 = vector.broadcast %cst_22 : f32 to vector<8x128xf32>
    %44 = vector.extract_strided_slice %37 {offsets = [0, 0], sizes = [8, 64], strides = [1, 1]} : vector<8x384xf32> to vector<8x64xf32>
    %45 = vector.extract_strided_slice %37 {offsets = [0, 128], sizes = [8, 64], strides = [1, 1]} : vector<8x384xf32> to vector<8x64xf32>
    %46 = vector.extract_strided_slice %37 {offsets = [0, 256], sizes = [8, 64], strides = [1, 1]} : vector<8x384xf32> to vector<8x64xf32>
    %47 = arith.truncf %44 : vector<8x64xf32> to vector<8x64xbf16>
    %48 = arith.truncf %45 : vector<8x64xf32> to vector<8x64xbf16>
    "tpu.trace_start"() <{level = 10 : i32, message = "qc,kc->qk"}> : () -> ()
    %cst_23 = arith.constant dense<0.000000e+00> : vector<8x8xf32>
    %49 = tpu.matmul %47, %48, %cst_23 {dimension_numbers = #tpu.dot_dimension_numbers<[1], [1], [0], [0], [0, 0, 1, 0], [], []>} : vector<8x64xbf16>, vector<8x64xbf16>, vector<8x8xf32> -> vector<8x8xf32>
    %cst_24 = arith.constant -1.000000e+30 : f32
    "tpu.trace_stop"() : () -> ()
    %50 = vector.shape_cast %42 : vector<1x8xi1> to vector<1x8xi1>
    %51 = vector.broadcast %50 : vector<1x8xi1> to vector<8x8xi1>
    %52 = vector.broadcast %cst_24 : f32 to vector<8x8xf32>
    %53 = arith.select %51, %49, %52 : vector<8x8xi1>, vector<8x8xf32>
    %cst_25 = arith.constant dense<0xFF800000> : vector<8xf32>
    %54 = vector.multi_reduction <maximumf>, %53, %cst_25 [1] : vector<8x8xf32> to vector<8xf32>
    %55 = vector.shape_cast %54 : vector<8xf32> to vector<8x1xf32>
    %56 = vector.broadcast %55 : vector<8x1xf32> to vector<8x8xf32>
    %57 = arith.subf %53, %56 : vector<8x8xf32>
    %58 = math.exp %57 : vector<8x8xf32>
    %cst_26 = arith.constant dense<0.000000e+00> : vector<8xf32>
    %59 = vector.multi_reduction <add>, %58, %cst_26 [1] : vector<8x8xf32> to vector<8xf32>
    %60 = vector.shape_cast %59 : vector<8xf32> to vector<8x1xf32>
    %61 = tpu.reciprocal %60 {approx = true} : vector<8x1xf32> -> vector<8x1xf32>
    %62 = vector.broadcast %61 : vector<8x1xf32> to vector<8x8xf32>
    %63 = arith.mulf %58, %62 : vector<8x8xf32>
    %64 = arith.truncf %63 : vector<8x8xf32> to vector<8x8xbf16>
    %65 = arith.truncf %46 : vector<8x64xf32> to vector<8x64xbf16>
    %cst_27 = arith.constant dense<0.000000e+00> : vector<8x64xf32>
    %66 = tpu.matmul %64, %65, %cst_27 {dimension_numbers = #tpu.dot_dimension_numbers<[1], [0], [0], [1], [0, 0, 1, 1], [], []>} : vector<8x8xbf16>, vector<8x64xbf16>, vector<8x64xf32> -> vector<8x64xf32>
    %67 = vector.extract_strided_slice %39 {offsets = [0, 0], sizes = [64, 128], strides = [1, 1]} : vector<128x128xbf16> to vector<64x128xbf16>
    %68 = arith.truncf %66 : vector<8x64xf32> to vector<8x64xbf16>
    %cst_28 = arith.constant dense<0.000000e+00> : vector<8x128xf32>
    %69 = tpu.matmul %68, %67, %cst_28 {dimension_numbers = #tpu.dot_dimension_numbers<[1], [0], [0], [1], [0, 0, 1, 1], [], []>} : vector<8x64xbf16>, vector<64x128xbf16>, vector<8x128xf32> -> vector<8x128xf32>
    %70 = arith.addf %43, %69 : vector<8x128xf32>
    %71 = vector.extract_strided_slice %37 {offsets = [0, 64], sizes = [8, 64], strides = [1, 1]} : vector<8x384xf32> to vector<8x64xf32>
    %72 = vector.extract_strided_slice %37 {offsets = [0, 192], sizes = [8, 64], strides = [1, 1]} : vector<8x384xf32> to vector<8x64xf32>
    %73 = vector.extract_strided_slice %37 {offsets = [0, 320], sizes = [8, 64], strides = [1, 1]} : vector<8x384xf32> to vector<8x64xf32>
    %74 = arith.truncf %71 : vector<8x64xf32> to vector<8x64xbf16>
    %75 = arith.truncf %72 : vector<8x64xf32> to vector<8x64xbf16>
    "tpu.trace_start"() <{level = 10 : i32, message = "qc,kc->qk"}> : () -> ()
    %cst_29 = arith.constant dense<0.000000e+00> : vector<8x8xf32>
    %76 = tpu.matmul %74, %75, %cst_29 {dimension_numbers = #tpu.dot_dimension_numbers<[1], [1], [0], [0], [0, 0, 1, 0], [], []>} : vector<8x64xbf16>, vector<8x64xbf16>, vector<8x8xf32> -> vector<8x8xf32>
    %cst_30 = arith.constant -1.000000e+30 : f32
    "tpu.trace_stop"() : () -> ()
    %77 = vector.shape_cast %42 : vector<1x8xi1> to vector<1x8xi1>
    %78 = vector.broadcast %77 : vector<1x8xi1> to vector<8x8xi1>
    %79 = vector.broadcast %cst_30 : f32 to vector<8x8xf32>
    %80 = arith.select %78, %76, %79 : vector<8x8xi1>, vector<8x8xf32>
    %cst_31 = arith.constant dense<0xFF800000> : vector<8xf32>
    %81 = vector.multi_reduction <maximumf>, %80, %cst_31 [1] : vector<8x8xf32> to vector<8xf32>
    %82 = vector.shape_cast %81 : vector<8xf32> to vector<8x1xf32>
    %83 = vector.broadcast %82 : vector<8x1xf32> to vector<8x8xf32>
    %84 = arith.subf %80, %83 : vector<8x8xf32>
    %85 = math.exp %84 : vector<8x8xf32>
    %cst_32 = arith.constant dense<0.000000e+00> : vector<8xf32>
    %86 = vector.multi_reduction <add>, %85, %cst_32 [1] : vector<8x8xf32> to vector<8xf32>
    %87 = vector.shape_cast %86 : vector<8xf32> to vector<8x1xf32>
    %88 = tpu.reciprocal %87 {approx = true} : vector<8x1xf32> -> vector<8x1xf32>
    %89 = vector.broadcast %88 : vector<8x1xf32> to vector<8x8xf32>
    %90 = arith.mulf %85, %89 : vector<8x8xf32>
    %91 = arith.truncf %90 : vector<8x8xf32> to vector<8x8xbf16>
    %92 = arith.truncf %73 : vector<8x64xf32> to vector<8x64xbf16>
    %cst_33 = arith.constant dense<0.000000e+00> : vector<8x64xf32>
    %93 = tpu.matmul %91, %92, %cst_33 {dimension_numbers = #tpu.dot_dimension_numbers<[1], [0], [0], [1], [0, 0, 1, 1], [], []>} : vector<8x8xbf16>, vector<8x64xbf16>, vector<8x64xf32> -> vector<8x64xf32>
    %94 = vector.extract_strided_slice %39 {offsets = [64, 0], sizes = [64, 128], strides = [1, 1]} : vector<128x128xbf16> to vector<64x128xbf16>
    %95 = arith.truncf %93 : vector<8x64xf32> to vector<8x64xbf16>
    %cst_34 = arith.constant dense<0.000000e+00> : vector<8x128xf32>
    %96 = tpu.matmul %95, %94, %cst_34 {dimension_numbers = #tpu.dot_dimension_numbers<[1], [0], [0], [1], [0, 0, 1, 1], [], []>} : vector<8x64xbf16>, vector<64x128xbf16>, vector<8x128xf32> -> vector<8x128xf32>
    %97 = arith.addf %70, %96 : vector<8x128xf32>
    %c0_35 = arith.constant 0 : index
    %c0_36 = arith.constant 0 : index
    %c0_37 = arith.constant 0 : index
    %98 = vector.load %arg11[%c0_35, %c0_36, %c0_37] : memref<1x1x128xf32, #tpu.memory_space<vmem>>, vector<1x1x128xf32>
    %99 = vector.shape_cast %98 : vector<1x1x128xf32> to vector<1x128xf32>
    %100 = vector.broadcast %99 : vector<1x128xf32> to vector<8x128xf32>
    %101 = arith.addf %97, %100 : vector<8x128xf32>
    %c0_38 = arith.constant 0 : index
    %c0_39 = arith.constant 0 : index
    %c0_40 = arith.constant 0 : index
    %102 = vector.load %arg12[%c0_38, %c0_39, %c0_40] : memref<1x1x128xf32, #tpu.memory_space<vmem>>, vector<1x1x128xf32>
    %103 = vector.shape_cast %102 : vector<1x1x128xf32> to vector<1x128xf32>
    %104 = vector.broadcast %103 : vector<1x128xf32> to vector<8x128xf32>
    %105 = arith.mulf %101, %104 : vector<8x128xf32>
    %106 = arith.addf %3, %105 : vector<8x128xf32>
    %c0_41 = arith.constant 0 : index
    %c0_42 = arith.constant 0 : index
    %c0_43 = arith.constant 0 : index
    %107 = vector.load %arg13[%c0_41, %c0_42, %c0_43] : memref<1x1x128xf32, #tpu.memory_space<vmem>>, vector<1x1x128xf32>
    %108 = vector.shape_cast %107 : vector<1x1x128xf32> to vector<1x128xf32>
    %c0_44 = arith.constant 0 : index
    %c0_45 = arith.constant 0 : index
    %c0_46 = arith.constant 0 : index
    %109 = vector.load %arg14[%c0_44, %c0_45, %c0_46] : memref<1x1x128xf32, #tpu.memory_space<vmem>>, vector<1x1x128xf32>
    %110 = vector.shape_cast %109 : vector<1x1x128xf32> to vector<1x128xf32>
    %cst_47 = arith.constant dense<0.000000e+00> : vector<8xf32>
    %111 = vector.multi_reduction <add>, %106, %cst_47 [1] : vector<8x128xf32> to vector<8xf32>
    %112 = vector.shape_cast %111 : vector<8xf32> to vector<8x1xf32>
    %cst_48 = arith.constant 1.280000e+02 : f32
    %113 = vector.broadcast %cst_48 : f32 to vector<8x1xf32>
    %114 = arith.divf %112, %113 : vector<8x1xf32>
    %115 = vector.broadcast %114 : vector<8x1xf32> to vector<8x128xf32>
    %116 = arith.subf %106, %115 : vector<8x128xf32>
    %117 = arith.mulf %116, %116 : vector<8x128xf32>
    %cst_49 = arith.constant dense<0.000000e+00> : vector<8xf32>
    %118 = vector.multi_reduction <add>, %117, %cst_49 [1] : vector<8x128xf32> to vector<8xf32>
    %119 = vector.shape_cast %118 : vector<8xf32> to vector<8x1xf32>
    %cst_50 = arith.constant 1.280000e+02 : f32
    %120 = vector.broadcast %cst_50 : f32 to vector<8x1xf32>
    %121 = arith.divf %119, %120 : vector<8x1xf32>
    %122 = vector.broadcast %114 : vector<8x1xf32> to vector<8x128xf32>
    %123 = arith.subf %106, %122 : vector<8x128xf32>
    %cst_51 = arith.constant 9.99999997E-7 : f32
    %124 = vector.broadcast %cst_51 : f32 to vector<8x1xf32>
    %125 = arith.addf %121, %124 : vector<8x1xf32>
    %126 = math.rsqrt %125 : vector<8x1xf32>
    %127 = vector.broadcast %126 : vector<8x1xf32> to vector<8x128xf32>
    %128 = arith.mulf %123, %127 : vector<8x128xf32>
    %129 = vector.broadcast %108 : vector<1x128xf32> to vector<8x128xf32>
    %130 = arith.mulf %128, %129 : vector<8x128xf32>
    %131 = vector.broadcast %110 : vector<1x128xf32> to vector<8x128xf32>
    %132 = arith.addf %130, %131 : vector<8x128xf32>
    %c0_52 = arith.constant 0 : index
    %c0_53 = arith.constant 0 : index
    %c0_54 = arith.constant 0 : index
    %133 = vector.load %arg15[%c0_52, %c0_53, %c0_54] : memref<1x128x512xbf16, #tpu.memory_space<vmem>>, vector<1x128x512xbf16>
    %134 = vector.shape_cast %133 : vector<1x128x512xbf16> to vector<128x512xbf16>
    %135 = arith.truncf %132 : vector<8x128xf32> to vector<8x128xbf16>
    %cst_55 = arith.constant dense<0.000000e+00> : vector<8x512xf32>
    %136 = tpu.matmul %135, %134, %cst_55 {dimension_numbers = #tpu.dot_dimension_numbers<[1], [0], [0], [1], [0, 0, 1, 1], [], []>} : vector<8x128xbf16>, vector<128x512xbf16>, vector<8x512xf32> -> vector<8x512xf32>
    %c0_56 = arith.constant 0 : index
    %c0_57 = arith.constant 0 : index
    %c0_58 = arith.constant 0 : index
    %137 = vector.load %arg16[%c0_56, %c0_57, %c0_58] : memref<1x1x512xf32, #tpu.memory_space<vmem>>, vector<1x1x512xf32>
    %138 = vector.shape_cast %137 : vector<1x1x512xf32> to vector<1x512xf32>
    %139 = vector.broadcast %138 : vector<1x512xf32> to vector<8x512xf32>
    %140 = arith.addf %136, %139 : vector<8x512xf32>
    %cst_59 = arith.constant 5.000000e-01 : f32
    %141 = vector.broadcast %cst_59 : f32 to vector<8x512xf32>
    %142 = arith.mulf %141, %140 : vector<8x512xf32>
    %cst_60 = arith.constant 4.471500e-02 : f32
    %143 = vector.broadcast %cst_60 : f32 to vector<8x512xf32>
    %144 = arith.mulf %143, %140 : vector<8x512xf32>
    %145 = arith.mulf %144, %140 : vector<8x512xf32>
    %146 = arith.mulf %145, %140 : vector<8x512xf32>
    %147 = arith.addf %140, %146 : vector<8x512xf32>
    %cst_61 = arith.constant 0.797884583 : f32
    %148 = vector.broadcast %cst_61 : f32 to vector<8x512xf32>
    %149 = arith.mulf %148, %147 : vector<8x512xf32>
    %150 = math.tanh %149 : vector<8x512xf32>
    %cst_62 = arith.constant 1.000000e+00 : f32
    %151 = vector.broadcast %cst_62 : f32 to vector<8x512xf32>
    %152 = arith.addf %151, %150 : vector<8x512xf32>
    %153 = arith.mulf %142, %152 : vector<8x512xf32>
    %c0_63 = arith.constant 0 : index
    %c0_64 = arith.constant 0 : index
    %c0_65 = arith.constant 0 : index
    %154 = vector.load %arg17[%c0_63, %c0_64, %c0_65] : memref<1x512x128xbf16, #tpu.memory_space<vmem>>, vector<1x512x128xbf16>
    %155 = vector.shape_cast %154 : vector<1x512x128xbf16> to vector<512x128xbf16>
    %156 = arith.truncf %153 : vector<8x512xf32> to vector<8x512xbf16>
    %cst_66 = arith.constant dense<0.000000e+00> : vector<8x128xf32>
    %157 = tpu.matmul %156, %155, %cst_66 {dimension_numbers = #tpu.dot_dimension_numbers<[1], [0], [0], [1], [0, 0, 1, 1], [], []>} : vector<8x512xbf16>, vector<512x128xbf16>, vector<8x128xf32> -> vector<8x128xf32>
    %c0_67 = arith.constant 0 : index
    %c0_68 = arith.constant 0 : index
    %c0_69 = arith.constant 0 : index
    %158 = vector.load %arg18[%c0_67, %c0_68, %c0_69] : memref<1x1x128xf32, #tpu.memory_space<vmem>>, vector<1x1x128xf32>
    %159 = vector.shape_cast %158 : vector<1x1x128xf32> to vector<1x128xf32>
    %160 = vector.broadcast %159 : vector<1x128xf32> to vector<8x128xf32>
    %161 = arith.addf %157, %160 : vector<8x128xf32>
    %c0_70 = arith.constant 0 : index
    %c0_71 = arith.constant 0 : index
    %c0_72 = arith.constant 0 : index
    %162 = vector.load %arg19[%c0_70, %c0_71, %c0_72] : memref<1x1x128xf32, #tpu.memory_space<vmem>>, vector<1x1x128xf32>
    %163 = vector.shape_cast %162 : vector<1x1x128xf32> to vector<1x128xf32>
    %164 = vector.broadcast %163 : vector<1x128xf32> to vector<8x128xf32>
    %165 = arith.mulf %161, %164 : vector<8x128xf32>
    %166 = arith.addf %106, %165 : vector<8x128xf32>
    %c0_73 = arith.constant 0 : index
    %c0_74 = arith.constant 0 : index
    %167 = vector.load %arg23[%c0_73, %c0_74] : memref<8x128xf32, #tpu.memory_space<vmem>>, vector<8x128xf32>
    tpu.vector_store %arg23[%c0_73, %c0_74], %166 {strides = array<i32>} : memref<8x128xf32, #tpu.memory_space<vmem>>, vector<8x128xf32>,
    %c1_i32 = arith.constant 1 : i32
    %168 = arith.cmpi eq, %arg1, %c1_i32 : i32
    %169 = arith.extui %168 : i1 to i32
    %c0_i32_75 = arith.constant 0 : i32
    %170 = arith.cmpi ne, %169, %c0_i32_75 : i32
    scf.if %170 {
      %c0_76 = arith.constant 0 : index
      %c0_77 = arith.constant 0 : index
      %171 = vector.load %arg20[%c0_76, %c0_77] : memref<1x128xf32, #tpu.memory_space<vmem>>, vector<1x128xf32>
      %c0_78 = arith.constant 0 : index
      %c0_79 = arith.constant 0 : index
      %172 = vector.load %arg21[%c0_78, %c0_79] : memref<1x128xf32, #tpu.memory_space<vmem>>, vector<1x128xf32>
      %cst_80 = arith.constant dense<0.000000e+00> : vector<8xf32>
      %173 = vector.multi_reduction <add>, %166, %cst_80 [1] : vector<8x128xf32> to vector<8xf32>
      %174 = vector.shape_cast %173 : vector<8xf32> to vector<8x1xf32>
      %cst_81 = arith.constant 1.280000e+02 : f32
      %175 = vector.broadcast %cst_81 : f32 to vector<8x1xf32>
      %176 = arith.divf %174, %175 : vector<8x1xf32>
      %177 = vector.broadcast %176 : vector<8x1xf32> to vector<8x128xf32>
      %178 = arith.subf %166, %177 : vector<8x128xf32>
      %179 = arith.mulf %178, %178 : vector<8x128xf32>
      %cst_82 = arith.constant dense<0.000000e+00> : vector<8xf32>
      %180 = vector.multi_reduction <add>, %179, %cst_82 [1] : vector<8x128xf32> to vector<8xf32>
      %181 = vector.shape_cast %180 : vector<8xf32> to vector<8x1xf32>
      %cst_83 = arith.constant 1.280000e+02 : f32
      %182 = vector.broadcast %cst_83 : f32 to vector<8x1xf32>
      %183 = arith.divf %181, %182 : vector<8x1xf32>
      %184 = vector.broadcast %176 : vector<8x1xf32> to vector<8x128xf32>
      %185 = arith.subf %166, %184 : vector<8x128xf32>
      %cst_84 = arith.constant 9.99999997E-7 : f32
      %186 = vector.broadcast %cst_84 : f32 to vector<8x1xf32>
      %187 = arith.addf %183, %186 : vector<8x1xf32>
      %188 = math.rsqrt %187 : vector<8x1xf32>
      %189 = vector.broadcast %188 : vector<8x1xf32> to vector<8x128xf32>
      %190 = arith.mulf %185, %189 : vector<8x128xf32>
      %191 = vector.broadcast %171 : vector<1x128xf32> to vector<8x128xf32>
      %192 = arith.mulf %190, %191 : vector<8x128xf32>
      %193 = vector.broadcast %172 : vector<1x128xf32> to vector<8x128xf32>
      %194 = arith.addf %192, %193 : vector<8x128xf32>
      %c0_85 = arith.constant 0 : index
      %c0_86 = arith.constant 0 : index
      %c0_87 = arith.constant 0 : index
      %195 = vector.load %arg22[%c0_85, %c0_86, %c0_87] : memref<1x8x128xf32, #tpu.memory_space<vmem>>, vector<1x8x128xf32>
      %196 = vector.shape_cast %195 : vector<1x8x128xf32> to vector<8x128xf32>
      %197 = vector.shape_cast %194 : vector<8x128xf32> to vector<1x8x128xf32>
      tpu.vector_store %arg22[%c0_85, %c0_86, %c0_87], %197 {strides = array<i32>} : memref<1x8x128xf32, #tpu.memory_space<vmem>>, vector<1x8x128xf32>,
    } else {
    }
    return
  }
  func.func @transform_0(%arg0: i32, %arg1: i32) -> (i32, i32, i32) {
    %c0_i32 = arith.constant 0 : i32
    %c0_i32_0 = arith.constant 0 : i32
    %c0_i32_1 = arith.constant 0 : i32
    return %arg0, %c0_i32, %c0_i32_0 : i32, i32, i32
  }
  func.func @transform_1(%arg0: i32, %arg1: i32) -> (i32, i32) {
    %c0_i32 = arith.constant 0 : i32
    %c0_i32_0 = arith.constant 0 : i32
    %c0_i32_1 = arith.constant 0 : i32
    return %c0_i32, %c0_i32_0 : i32, i32
  }
  func.func @transform_2(%arg0: i32, %arg1: i32) -> (i32, i32) {
    %c0_i32 = arith.constant 0 : i32
    %c0_i32_0 = arith.constant 0 : i32
    %c0_i32_1 = arith.constant 0 : i32
    return %c0_i32, %c0_i32_0 : i32, i32
  }
  func.func @transform_3(%arg0: i32, %arg1: i32) -> (i32, i32) {
    %c0_i32 = arith.constant 0 : i32
    %c0_i32_0 = arith.constant 0 : i32
    %c0_i32_1 = arith.constant 0 : i32
    return %c0_i32, %c0_i32_0 : i32, i32
  }
  func.func @transform_4(%arg0: i32, %arg1: i32) -> (i32, i32, i32) {
    %c0_i32 = arith.constant 0 : i32
    %c0_i32_0 = arith.constant 0 : i32
    %c0_i32_1 = arith.constant 0 : i32
    return %arg1, %c0_i32, %c0_i32_0 : i32, i32, i32
  }
  func.func @transform_5(%arg0: i32, %arg1: i32) -> (i32, i32, i32) {
    %c0_i32 = arith.constant 0 : i32
    %c0_i32_0 = arith.constant 0 : i32
    %c0_i32_1 = arith.constant 0 : i32
    return %arg1, %c0_i32, %c0_i32_0 : i32, i32, i32
  }
  func.func @transform_6(%arg0: i32, %arg1: i32) -> (i32, i32, i32) {
    %c0_i32 = arith.constant 0 : i32
    %c0_i32_0 = arith.constant 0 : i32
    %c0_i32_1 = arith.constant 0 : i32
    return %arg1, %c0_i32, %c0_i32_0 : i32, i32, i32
  }
  func.func @transform_7(%arg0: i32, %arg1: i32) -> (i32, i32, i32) {
    %c0_i32 = arith.constant 0 : i32
    %c0_i32_0 = arith.constant 0 : i32
    %c0_i32_1 = arith.constant 0 : i32
    return %arg1, %c0_i32, %c0_i32_0 : i32, i32, i32
  }
  func.func @transform_8(%arg0: i32, %arg1: i32) -> (i32, i32, i32) {
    %c0_i32 = arith.constant 0 : i32
    %c0_i32_0 = arith.constant 0 : i32
    %c0_i32_1 = arith.constant 0 : i32
    return %arg1, %c0_i32, %c0_i32_0 : i32, i32, i32
  }
  func.func @transform_9(%arg0: i32, %arg1: i32) -> (i32, i32, i32) {
    %c0_i32 = arith.constant 0 : i32
    %c0_i32_0 = arith.constant 0 : i32
    %c0_i32_1 = arith.constant 0 : i32
    return %arg1, %c0_i32, %c0_i32_0 : i32, i32, i32
  }
  func.func @transform_10(%arg0: i32, %arg1: i32) -> (i32, i32, i32) {
    %c0_i32 = arith.constant 0 : i32
    %c0_i32_0 = arith.constant 0 : i32
    %c0_i32_1 = arith.constant 0 : i32
    return %arg1, %c0_i32, %c0_i32_0 : i32, i32, i32
  }
  func.func @transform_11(%arg0: i32, %arg1: i32) -> (i32, i32, i32) {
    %c0_i32 = arith.constant 0 : i32
    %c0_i32_0 = arith.constant 0 : i32
    %c0_i32_1 = arith.constant 0 : i32
    return %arg1, %c0_i32, %c0_i32_0 : i32, i32, i32
  }
  func.func @transform_12(%arg0: i32, %arg1: i32) -> (i32, i32, i32) {
    %c0_i32 = arith.constant 0 : i32
    %c0_i32_0 = arith.constant 0 : i32
    %c0_i32_1 = arith.constant 0 : i32
    return %arg1, %c0_i32, %c0_i32_0 : i32, i32, i32
  }
  func.func @transform_13(%arg0: i32, %arg1: i32) -> (i32, i32, i32) {
    %c0_i32 = arith.constant 0 : i32
    %c0_i32_0 = arith.constant 0 : i32
    %c0_i32_1 = arith.constant 0 : i32
    return %arg1, %c0_i32, %c0_i32_0 : i32, i32, i32
  }
  func.func @transform_14(%arg0: i32, %arg1: i32) -> (i32, i32, i32) {
    %c0_i32 = arith.constant 0 : i32
    %c0_i32_0 = arith.constant 0 : i32
    %c0_i32_1 = arith.constant 0 : i32
    return %arg1, %c0_i32, %c0_i32_0 : i32, i32, i32
  }
  func.func @transform_15(%arg0: i32, %arg1: i32) -> (i32, i32, i32) {
    %c0_i32 = arith.constant 0 : i32
    %c0_i32_0 = arith.constant 0 : i32
    %c0_i32_1 = arith.constant 0 : i32
    return %arg1, %c0_i32, %c0_i32_0 : i32, i32, i32
  }
  func.func @transform_16(%arg0: i32, %arg1: i32) -> (i32, i32, i32) {
    %c0_i32 = arith.constant 0 : i32
    %c0_i32_0 = arith.constant 0 : i32
    %c0_i32_1 = arith.constant 0 : i32
    return %arg1, %c0_i32, %c0_i32_0 : i32, i32, i32
  }
  func.func @transform_17(%arg0: i32, %arg1: i32) -> (i32, i32, i32) {
    %c0_i32 = arith.constant 0 : i32
    %c0_i32_0 = arith.constant 0 : i32
    %c0_i32_1 = arith.constant 0 : i32
    return %arg1, %c0_i32, %c0_i32_0 : i32, i32, i32
  }
  func.func @transform_18(%arg0: i32, %arg1: i32) -> (i32, i32) {
    %c0_i32 = arith.constant 0 : i32
    %c0_i32_0 = arith.constant 0 : i32
    %c0_i32_1 = arith.constant 0 : i32
    return %c0_i32, %c0_i32_0 : i32, i32
  }
  func.func @transform_19(%arg0: i32, %arg1: i32) -> (i32, i32) {
    %c0_i32 = arith.constant 0 : i32
    %c0_i32_0 = arith.constant 0 : i32
    %c0_i32_1 = arith.constant 0 : i32
    return %c0_i32, %c0_i32_0 : i32, i32
  }
  func.func @transform_20(%arg0: i32, %arg1: i32) -> (i32, i32, i32) {
    %c0_i32 = arith.constant 0 : i32
    %c0_i32_0 = arith.constant 0 : i32
    %c0_i32_1 = arith.constant 0 : i32
    return %arg0, %c0_i32, %c0_i32_0 : i32, i32, i32
  }
}

</mosaic_0001>

<llo_original>
// kernel: dino_v2_encoder.2
$region0: #{dino_v2_encoder.2}
  #allocation0 [shape = 'u32[]', space=smem, size = 0x4, offset = 0x4, fixed_abs, tag = 'smem constant byte address 0x4 - core index']
  #allocation1 [shape = 'u32[144,128]{1,0:T(1,128)}', space=vmem, size = 0x12000, scoped, tag = 'internal scratch']
  %s0 = inlined_call_operand.vmem [shape: f32[32,30], index: 0, kind: input, shape index: {}]
  %s1 = inlined_call_operand.vmem [shape: f32[30,32], index: 1, kind: input, shape index: {}]
  %s2 = inlined_call_operand.vmem [shape: f32[6,30,30], index: 2, kind: input, shape index: {}]
  %s3 = inlined_call_operand.vmem [shape: f32[6,32,32], index: 3, kind: output, shape index: {}]
  %s4 = sld [smem:[#allocation0]]
  $region45: #{dino_v2_encoder.2} parent=0
    _
  %s6 = ssub.s32 1, %s4
  %s7 = scalar_select 0, %s6, %s4
  loop: start=0, step=1, limit=8
  $region2: #{dino_v2_encoder.2} parent=0 // loop_pre_header
    _
  $region3: #{dino_v2_encoder.2} parent=0 // loop_header
    %s9 = sphi 0, %s13
    %p10 = scmp.ge.s32.totalorder %s9, 8
    %s17 = sphi 0, %s17
    %s19 = sphi 0, %s17
    %s20 = sphi 0, %s19
    %s34 = sphi 0, %s20
    %s38 = sphi 0, %s38
    %s40 = sphi 0, %s38
    %s41 = sphi 0, %s40
    %s55 = sphi 0, %s41
    %s61 = sphi 0, %s63
    %s64 = sphi 0, %s61
    %s65 = sphi 0, %s64
    %s81 = sphi 0, %s65
    %s87 = sphi 0, %s89
    %s90 = sphi 0, %s87
    %s91 = sphi 0, %s90
    %s107 = sphi 0, %s91
  $region4: #{dino_v2_encoder.2} parent=0 // loop_header_branch
    %12 = sbr.rel (%p10) target = $region8
  $region5: #{dino_v2_encoder.2} parent=0 // loop_body
    %s14 = ssub.s32 %s9, 1
    %s15 = ssub.s32 %s9, 2
    %s16 = sadd.s32 %s9, 1
    %s18 = sadd.s32 %s17, 1
    %p21 = scmp.eq.s32.totalorder %s9, 5
    %p22 = scmp.ne.s32.totalorder %s17, %s19
    %p23 = scmp.eq.s32.totalorder %s9, 0
    %p24 = por %p22, %p23
    %p25 = scmp.ne.s32.totalorder %s17, %s19
    %p26 = scmp.eq.s32.totalorder %s14, 5
    %p27 = por %p25, %p26
    %p28 = scmp.ne.s32.totalorder %s19, %s20
    %p29 = scmp.eq.s32.totalorder %s14, 0
    %p30 = por %p28, %p29
    %p31 = scmp.ne.s32.totalorder %s19, %s20
    %p32 = scmp.eq.s32.totalorder %s15, 5
    %p33 = por %p31, %p32
    %p35 = scmp.ne.s32.totalorder %s20, %s34
    %p36 = scmp.eq.s32.totalorder %s15, 0
    %p37 = por %p35, %p36
    %s39 = sadd.s32 %s38, 1
    %p42 = scmp.eq.s32.totalorder %s9, 5
    %p43 = scmp.ne.s32.totalorder %s38, %s40
    %p44 = scmp.eq.s32.totalorder %s9, 0
    %p45 = por %p43, %p44
    %p46 = scmp.ne.s32.totalorder %s38, %s40
    %p47 = scmp.eq.s32.totalorder %s14, 5
    %p48 = por %p46, %p47
    %p49 = scmp.ne.s32.totalorder %s40, %s41
    %p50 = scmp.eq.s32.totalorder %s14, 0
    %p51 = por %p49, %p50
    %p52 = scmp.ne.s32.totalorder %s40, %s41
    %p53 = scmp.eq.s32.totalorder %s15, 5
    %p54 = por %p52, %p53
    %p56 = scmp.ne.s32.totalorder %s41, %s55
    %p57 = scmp.eq.s32.totalorder %s15, 0
    %p58 = por %p56, %p57
    %s59 = ssub.s32 %s9, %s16
    %p60 = scmp.eq.s32.totalorder %s59, 0
    %s62 = sadd.s32 %s61, 1
    %s63 = scalar_select %p60, %s61, %s62
    %p66 = pneg %p60
    %p67 = scmp.eq.s32.totalorder %s9, 5
    %p68 = por %p66, %p67
    %p69 = scmp.ne.s32.totalorder %s61, %s64
    %p70 = scmp.eq.s32.totalorder %s9, 0
    %p71 = por %p69, %p70
    %p72 = scmp.ne.s32.totalorder %s61, %s64
    %p73 = scmp.eq.s32.totalorder %s14, 5
    %p74 = por %p72, %p73
    %p75 = scmp.ne.s32.totalorder %s64, %s65
    %p76 = scmp.eq.s32.totalorder %s14, 0
    %p77 = por %p75, %p76
    %p78 = scmp.ne.s32.totalorder %s64, %s65
    %p79 = scmp.eq.s32.totalorder %s15, 5
    %p80 = por %p78, %p79
    %p82 = scmp.ne.s32.totalorder %s65, %s81
    %p83 = scmp.eq.s32.totalorder %s15, 0
    %p84 = por %p82, %p83
    %s85 = ssub.s32 %s9, %s16
    %p86 = scmp.eq.s32.totalorder %s85, 0
    %s88 = sadd.s32 %s87, 1
    %s89 = scalar_select %p86, %s87, %s88
    %p92 = pneg %p86
    %p93 = scmp.eq.s32.totalorder %s9, 5
    %p94 = por %p92, %p93
    %p95 = scmp.ne.s32.totalorder %s87, %s90
    %p96 = scmp.eq.s32.totalorder %s9, 0
    %p97 = por %p95, %p96
    %p98 = scmp.ne.s32.totalorder %s87, %s90
    %p99 = scmp.eq.s32.totalorder %s14, 5
    %p100 = por %p98, %p99
    %p101 = scmp.ne.s32.totalorder %s90, %s91
    %p102 = scmp.eq.s32.totalorder %s14, 0
    %p103 = por %p101, %p102
    %p104 = scmp.ne.s32.totalorder %s90, %s91
    %p105 = scmp.eq.s32.totalorder %s15, 5
    %p106 = por %p104, %p105
    %p108 = scmp.ne.s32.totalorder %s91, %s107
    %p109 = scmp.eq.s32.totalorder %s15, 0
    %p110 = por %p108, %p109
    %p111 = scmp.le.s32.totalorder 1, %s9
    %p112 = scmp.lt.s32.totalorder %s9, 7
    %p113 = pnand %p111, %p112
    %p114 = pneg %p113
    // Predicated region
    $region9: #{dino_v2_encoder.2} parent=5 // pred_check
      _
    $region10: #{dino_v2_encoder.2} parent=5 // pred_check_branch
      %116 = sbr.rel (%p113) target = $region12
    $region11: #{dino_v2_encoder.2} parent=5 // pred_region
      %s117 = ssub.s32 %s9, 1
      // Predicated region
      $region13: #{dino_v2_encoder.2} parent=11 // pred_check
        %p118 = pneg %p30
      $region14: #{dino_v2_encoder.2} parent=11 // pred_check_branch
        %120 = sbr.rel (%p118) target = $region16
      $region15: #{dino_v2_encoder.2} parent=11 // pred_region
        _
      $region16: #{dino_v2_encoder.2} parent=11 // pred_fallthru
        _
      // Predicated region
      $region17: #{dino_v2_encoder.2} parent=11 // pred_check
        %p121 = pneg %p51
      $region18: #{dino_v2_encoder.2} parent=11 // pred_check_branch
        %123 = sbr.rel (%p121) target = $region20
      $region19: #{dino_v2_encoder.2} parent=11 // pred_region
        _
      $region20: #{dino_v2_encoder.2} parent=11 // pred_fallthru
        _
    $region12: #{dino_v2_encoder.2} parent=5 // pred_fallthru
      _
    %p124 = scmp.lt.s32.totalorder %s9, 6
    // Predicated region
    $region21: #{dino_v2_encoder.2} parent=5 // pred_check
      %p125 = pneg %p124
    $region22: #{dino_v2_encoder.2} parent=5 // pred_check_branch
      %127 = sbr.rel (%p125) target = $region24
    $region23: #{dino_v2_encoder.2} parent=5 // pred_region
      // Predicated region
      $region25: #{dino_v2_encoder.2} parent=23 // pred_check
        %p128 = pneg %p71
      $region26: #{dino_v2_encoder.2} parent=23 // pred_check_branch
        %130 = sbr.rel (%p128) target = $region28
      $region27: #{dino_v2_encoder.2} parent=23 // pred_region
        %p131 = scmp.lt.s32.totalorder %s9, 5
        %s132 = scalar_select %p131, %s9, 5
        %s133 = smul.addr %s132, 4
        %s134 = smul.addr %s133, 8
        %s135 = scalar_lea.vmem %s2, %s134
      $region28: #{dino_v2_encoder.2} parent=23 // pred_fallthru
        _
    $region24: #{dino_v2_encoder.2} parent=5 // pred_fallthru
      _
    %p136 = scmp.le.s32.totalorder 1, %s9
    %p137 = scmp.lt.s32.totalorder %s9, 7
    %p138 = pnand %p136, %p137
    %p139 = pneg %p138
    // Predicated region
    $region29: #{dino_v2_encoder.2} parent=5 // pred_check
      _
    $region30: #{dino_v2_encoder.2} parent=5 // pred_check_branch
      %141 = sbr.rel (%p138) target = $region32
    $region31: #{dino_v2_encoder.2} parent=5 // pred_region
      %s142 = ssub.s32 %s9, 1
      %p143 = pneg %p30
      %p144 = pneg %p27
      %p145 = pneg %p51
      %p146 = pneg %p48
      %p147 = scmp.lt.s32.totalorder %s14, 5
      %s148 = scalar_select %p147, %s14, 5
      %s149 = smul.addr %s148, 4
      %s150 = smul.addr %s149, 8
      %s151 = scalar_lea.vmem %s2, %s150
      %p152 = pneg %p77
      %p153 = pneg %p74
      %p154 = pneg %p103
      %p155 = pneg %p100
      %p156 = scmp.lt.s32.totalorder %s14, 5
      %s157 = scalar_select %p156, %s14, 5
      %s158 = smul.addr %s157, 4
      %s159 = smul.addr %s158, 8
      %s160 = scalar_lea.vmem %s3, %s159
      %p161 = scmp.lt.s32.totalorder %s14, 5
      %s162 = scalar_select %p161, %s14, 5
      %s163 = smul.addr %s162, 4
      %s164 = smul.addr %s163, 8
      %s165 = scalar_lea.vmem %s2, %s164
      %p166 = scmp.lt.s32.totalorder %s14, 5
      %s167 = scalar_select %p166, %s14, 5
      %s168 = smul.addr %s167, 4
      %s169 = smul.addr %s168, 8
      %s170 = scalar_lea.vmem %s3, %s169
      %v171 = vld [vmem:[%s165] sm:$0xff]
      %v172 = vld [vmem:[%s165 + $0x8] sm:$0xff]
      %v173 = vld [vmem:[%s165 + $0x10] sm:$0xff]
      %v174 = vld [vmem:[%s165 + $0x18] sm:$0x3f]
      %v175 = vld [vmem:[%s0] sm:$0xff]
      %v176 = vld [vmem:[%s0 + $0x8] sm:$0xff]
      %v177 = vld [vmem:[%s0 + $0x10] sm:$0xff]
      %v178 = vld [vmem:[%s0 + $0x18] sm:$0xff]
      %vm179 = vcmask 244736
      %v181 = vsel %vm179, %v175, 0
      %v184 = vsel %vm179, %v176, 0
      %v187 = vsel %vm179, %v177, 0
      %v190 = vsel %vm179, %v178, 0
      %vm192 = vcmask 1045504
      %v194 = vsel %vm192, %v174, 0
      %196 = vmatprep.subr.mxu0 0.0
      %197 = vmatpush1.msra.mxu0 0.0
      %198 = vmatprep.subr.mxu0 0.0
      %199 = vmatpush1.msra.mxu0 0.0
      %200 = vmatprep.subr.mxu0 0.0
      %201 = vmatpush1.msra.mxu0 0.0
      %202 = vmatprep.subr.mxu0 0.0
      %203 = vmatpush1.msra.mxu0 0.0
      %204 = vmatprep.subr.mxu0 0.0
      %205 = vmatpush1.msra.mxu0 0.0
      %206 = vmatprep.subr.mxu0 0.0
      %207 = vmatpush1.msra.mxu0 0.0
      %208 = vmatprep.subr.mxu0 0.0
      %209 = vmatpush1.msra.mxu0 0.0
      %210 = vmatprep.subr.mxu0 0.0
      %211 = vmatpush1.msra.mxu0 0.0
      %212 = vmatprep.subr.mxu0 0.0
      %213 = vmatpush1.msra.mxu0 0.0
      %214 = vmatprep.subr.mxu0 0.0
      %215 = vmatpush1.msra.mxu0 0.0
      %216 = vmatprep.subr.mxu0 0.0
      %217 = vmatpush1.msra.mxu0 0.0
      %218 = vmatprep.subr.mxu0 0.0
      %219 = vmatpush1.msra.mxu0 0.0
      %220 = vmatprep.subr.mxu0 0.0
      %221 = vmatpush1.msra.mxu0 %v194
      %222 = vmatprep.subr.mxu0 0.0
      %223 = vmatpush1.msra.mxu0 %v173
      %224 = vmatprep.subr.mxu0 0.0
      %225 = vmatpush1.msra.mxu0 %v172
      %226 = vmatprep.subr.mxu0 0.0
      %227 = vmatpush1.msra.mxu0 %v171
      %228 = vmatprep.subr.mxu0 0.0
      %229 = vmatpush2.msra.mxu0 0.0
      %230 = vmatprep.subr.mxu0 0.0
      %231 = vmatpush2.msra.mxu0 0.0
      %232 = vmatprep.subr.mxu0 0.0
      %233 = vmatpush2.msra.mxu0 0.0
      %234 = vmatprep.subr.mxu0 0.0
      %235 = vmatpush2.msra.mxu0 0.0
      %236 = vmatprep.subr.mxu0 0.0
      %237 = vmatpush2.msra.mxu0 0.0
      %238 = vmatprep.subr.mxu0 0.0
      %239 = vmatpush2.msra.mxu0 0.0
      %240 = vmatprep.subr.mxu0 0.0
      %241 = vmatpush2.msra.mxu0 0.0
      %242 = vmatprep.subr.mxu0 0.0
      %243 = vmatpush2.msra.mxu0 0.0
      %244 = vmatprep.subr.mxu0 0.0
      %245 = vmatpush2.msra.mxu0 0.0
      %246 = vmatprep.subr.mxu0 0.0
      %247 = vmatpush2.msra.mxu0 0.0
      %248 = vmatprep.subr.mxu0 0.0
      %249 = vmatpush2.msra.mxu0 0.0
      %250 = vmatprep.subr.mxu0 0.0
      %251 = vmatpush2.msra.mxu0 0.0
      %252 = vmatprep.subr.mxu0 0.0
      %253 = vmatpush2.msra.mxu0 0.0
      %254 = vmatprep.subr.mxu0 0.0
      %255 = vmatpush2.msra.mxu0 0.0
      %256 = vmatprep.subr.mxu0 0.0
      %257 = vmatpush2.msra.mxu0 0.0
      %258 = vmatprep.subr.mxu0 0.0
      %259 = vmatpush2.msra.mxu0 0.0
      %260 = vmatprep.mubr.f32.mxu0 0.0
      %261 = vmatmul.mubr.f32.gmra.mxu0 %v181
      %v262 = vpop.f32.mrf.mxu0
      %v263 = vadd.f32 0.0, %v262
      %v264 = vpop.f32.mrf.mxu0
      %265 = vmatprep.mubr.f32.mxu0 0.0
      %266 = vmatmul.mubr.f32.gmra.mxu0 %v184
      %v267 = vpop.f32.mrf.mxu0
      %v268 = vadd.f32 0.0, %v267
      %v269 = vpop.f32.mrf.mxu0
      %270 = vmatprep.mubr.f32.mxu0 0.0
      %271 = vmatmul.mubr.f32.gmra.mxu0 %v187
      %v272 = vpop.f32.mrf.mxu0
      %v273 = vadd.f32 0.0, %v272
      %v274 = vpop.f32.mrf.mxu0
      %275 = vmatprep.mubr.f32.mxu0 0.0
      %276 = vmatmul.mubr.f32.gmra.mxu0 %v190
      %v277 = vpop.f32.mrf.mxu0
      %v278 = vadd.f32 0.0, %v277
      %v279 = vpop.f32.mrf.mxu0
      %280 = vdwg.mxu0
      %v281 = vld [vmem:[%s1] sm:$0xff]
      %v282 = vld [vmem:[%s1 + $0x8] sm:$0xff]
      %v283 = vld [vmem:[%s1 + $0x10] sm:$0xff]
      %v284 = vld [vmem:[%s1 + $0x18] sm:$0x3f]
      %v286 = vsel %vm179, %v263, 0
      %v289 = vsel %vm179, %v268, 0
      %v292 = vsel %vm179, %v273, 0
      %v295 = vsel %vm179, %v278, 0
      %v298 = vsel %vm192, %v284, 0
      %300 = vmatprep.subr.mxu0 0.0
      %301 = vmatpush1.msra.mxu0 0.0
      %302 = vmatprep.subr.mxu0 0.0
      %303 = vmatpush1.msra.mxu0 0.0
      %304 = vmatprep.subr.mxu0 0.0
      %305 = vmatpush1.msra.mxu0 0.0
      %306 = vmatprep.subr.mxu0 0.0
      %307 = vmatpush1.msra.mxu0 0.0
      %308 = vmatprep.subr.mxu0 0.0
      %309 = vmatpush1.msra.mxu0 0.0
      %310 = vmatprep.subr.mxu0 0.0
      %311 = vmatpush1.msra.mxu0 0.0
      %312 = vmatprep.subr.mxu0 0.0
      %313 = vmatpush1.msra.mxu0 0.0
      %314 = vmatprep.subr.mxu0 0.0
      %315 = vmatpush1.msra.mxu0 0.0
      %316 = vmatprep.subr.mxu0 0.0
      %317 = vmatpush1.msra.mxu0 0.0
      %318 = vmatprep.subr.mxu0 0.0
      %319 = vmatpush1.msra.mxu0 0.0
      %320 = vmatprep.subr.mxu0 0.0
      %321 = vmatpush1.msra.mxu0 0.0
      %322 = vmatprep.subr.mxu0 0.0
      %323 = vmatpush1.msra.mxu0 0.0
      %324 = vmatprep.subr.mxu0 0.0
      %325 = vmatpush1.msra.mxu0 %v298
      %326 = vmatprep.subr.mxu0 0.0
      %327 = vmatpush1.msra.mxu0 %v283
      %328 = vmatprep.subr.mxu0 0.0
      %329 = vmatpush1.msra.mxu0 %v282
      %330 = vmatprep.subr.mxu0 0.0
      %331 = vmatpush1.msra.mxu0 %v281
      %332 = vmatprep.subr.mxu0 0.0
      %333 = vmatpush2.msra.mxu0 0.0
      %334 = vmatprep.subr.mxu0 0.0
      %335 = vmatpush2.msra.mxu0 0.0
      %336 = vmatprep.subr.mxu0 0.0
      %337 = vmatpush2.msra.mxu0 0.0
      %338 = vmatprep.subr.mxu0 0.0
      %339 = vmatpush2.msra.mxu0 0.0
      %340 = vmatprep.subr.mxu0 0.0
      %341 = vmatpush2.msra.mxu0 0.0
      %342 = vmatprep.subr.mxu0 0.0
      %343 = vmatpush2.msra.mxu0 0.0
      %344 = vmatprep.subr.mxu0 0.0
      %345 = vmatpush2.msra.mxu0 0.0
      %346 = vmatprep.subr.mxu0 0.0
      %347 = vmatpush2.msra.mxu0 0.0
      %348 = vmatprep.subr.mxu0 0.0
      %349 = vmatpush2.msra.mxu0 0.0
      %350 = vmatprep.subr.mxu0 0.0
      %351 = vmatpush2.msra.mxu0 0.0
      %352 = vmatprep.subr.mxu0 0.0
      %353 = vmatpush2.msra.mxu0 0.0
      %354 = vmatprep.subr.mxu0 0.0
      %355 = vmatpush2.msra.mxu0 0.0
      %356 = vmatprep.subr.mxu0 0.0
      %357 = vmatpush2.msra.mxu0 0.0
      %358 = vmatprep.subr.mxu0 0.0
      %359 = vmatpush2.msra.mxu0 0.0
      %360 = vmatprep.subr.mxu0 0.0
      %361 = vmatpush2.msra.mxu0 0.0
      %362 = vmatprep.subr.mxu0 0.0
      %363 = vmatpush2.msra.mxu0 0.0
      %364 = vmatprep.mubr.f32.mxu0 0.0
      %365 = vmatmul.mubr.f32.gmra.mxu0 %v286
      %v366 = vpop.f32.mrf.mxu0
      %v367 = vadd.f32 0.0, %v366
      %v368 = vpop.f32.mrf.mxu0
      %369 = vmatprep.mubr.f32.mxu0 0.0
      %370 = vmatmul.mubr.f32.gmra.mxu0 %v289
      %v371 = vpop.f32.mrf.mxu0
      %v372 = vadd.f32 0.0, %v371
      %v373 = vpop.f32.mrf.mxu0
      %374 = vmatprep.mubr.f32.mxu0 0.0
      %375 = vmatmul.mubr.f32.gmra.mxu0 %v292
      %v376 = vpop.f32.mrf.mxu0
      %v377 = vadd.f32 0.0, %v376
      %v378 = vpop.f32.mrf.mxu0
      %379 = vmatprep.mubr.f32.mxu0 0.0
      %380 = vmatmul.mubr.f32.gmra.mxu0 %v295
      %v381 = vpop.f32.mrf.mxu0
      %v382 = vadd.f32 0.0, %v381
      %v383 = vpop.f32.mrf.mxu0
      %384 = vdwg.mxu0
      %vm385 = vcmask 261120
      %386 = vst.msk [vmem:[%s170] sm:$0xff] %vm385, %v367
      %387 = vst.msk [vmem:[%s170 + $0x8] sm:$0xff] %vm385, %v372
      %388 = vst.msk [vmem:[%s170 + $0x10] sm:$0xff] %vm385, %v377
      %389 = vst.msk [vmem:[%s170 + $0x18] sm:$0xff] %vm385, %v382
      %p390 = scmp.lt.s32.totalorder %s14, 5
      %s391 = scalar_select %p390, %s14, 5
      %s392 = smul.addr %s391, 4
      %s393 = smul.addr %s392, 8
      %s394 = scalar_lea.vmem %s3, %s393
      // Predicated region
      $region33: #{dino_v2_encoder.2} parent=31 // pred_check
        %p395 = pneg %p100
      $region34: #{dino_v2_encoder.2} parent=31 // pred_check_branch
        %397 = sbr.rel (%p395) target = $region36
      $region35: #{dino_v2_encoder.2} parent=31 // pred_region
        _
      $region36: #{dino_v2_encoder.2} parent=31 // pred_fallthru
        _
    $region32: #{dino_v2_encoder.2} parent=5 // pred_fallthru
      _
    %p398 = scmp.le.s32.totalorder 2, %s9
    // Predicated region
    $region37: #{dino_v2_encoder.2} parent=5 // pred_check
      %p399 = pneg %p398
    $region38: #{dino_v2_encoder.2} parent=5 // pred_check_branch
      %401 = sbr.rel (%p399) target = $region40
    $region39: #{dino_v2_encoder.2} parent=5 // pred_region
      %s402 = ssub.s32 %s9, 2
      // Predicated region
      $region41: #{dino_v2_encoder.2} parent=39 // pred_check
        %p403 = pneg %p106
      $region42: #{dino_v2_encoder.2} parent=39 // pred_check_branch
        %405 = sbr.rel (%p403) target = $region44
      $region43: #{dino_v2_encoder.2} parent=39 // pred_region
        %p406 = scmp.lt.s32.totalorder %s15, 5
        %s407 = scalar_select %p406, %s15, 5
        %s408 = smul.addr %s407, 4
        %s409 = smul.addr %s408, 8
        %s410 = scalar_lea.vmem %s3, %s409
      $region44: #{dino_v2_encoder.2} parent=39 // pred_fallthru
        _
    $region40: #{dino_v2_encoder.2} parent=5 // pred_fallthru
      _
  $region6: #{dino_v2_encoder.2} parent=0 // loop_footer
    %s13 = sadd.s32 1, %s9
  $region7: #{dino_v2_encoder.2} parent=0 // loop_footer_branch
    %8 = sbr.rel target = $region3
  $region8: #{dino_v2_encoder.2} parent=0 // loop_exit
    _

// kernel: dino_v2_encoder.3
$region0: #{dino_v2_encoder.3}
  #allocation0 [shape = 'u32[]', space=smem, size = 0x4, offset = 0x4, fixed_abs, tag = 'smem constant byte address 0x4 - core index']
  #allocation1 [shape = 'u32[144,128]{1,0:T(1,128)}', space=vmem, size = 0x12000, scoped, tag = 'internal scratch']
  #allocation2 [shape = 'f32[8,128]{1,0:T(8,128)}', space=vmem, size = 0x1000, scoped, tag = 'scratch operand']
  %s0 = inlined_call_operand.vmem [shape: f32[2,8,588], index: 0, kind: input, shape index: {}]
  %s1 = inlined_call_operand.vmem [shape: bf16[588,128], index: 1, kind: input, shape index: {}]
  %s2 = inlined_call_operand.vmem [shape: f32[1,128], index: 2, kind: input, shape index: {}]
  %s3 = inlined_call_operand.vmem [shape: f32[8,128], index: 3, kind: input, shape index: {}]
  %s4 = inlined_call_operand.vmem [shape: f32[2,1,128], index: 4, kind: input, shape index: {}]
  %s5 = inlined_call_operand.vmem [shape: f32[2,1,128], index: 5, kind: input, shape index: {}]
  %s6 = inlined_call_operand.vmem [shape: bf16[2,128,384], index: 6, kind: input, shape index: {}]
  %s7 = inlined_call_operand.vmem [shape: f32[2,1,384], index: 7, kind: input, shape index: {}]
  %s8 = inlined_call_operand.vmem [shape: bf16[2,128,128], index: 8, kind: input, shape index: {}]
  %s9 = inlined_call_operand.vmem [shape: f32[2,1,128], index: 9, kind: input, shape index: {}]
  %s10 = inlined_call_operand.vmem [shape: f32[2,1,128], index: 10, kind: input, shape index: {}]
  %s11 = inlined_call_operand.vmem [shape: f32[2,1,128], index: 11, kind: input, shape index: {}]
  %s12 = inlined_call_operand.vmem [shape: f32[2,1,128], index: 12, kind: input, shape index: {}]
  %s13 = inlined_call_operand.vmem [shape: bf16[2,128,512], index: 13, kind: input, shape index: {}]
  %s14 = inlined_call_operand.vmem [shape: f32[2,1,512], index: 14, kind: input, shape index: {}]
  %s15 = inlined_call_operand.vmem [shape: bf16[2,512,128], index: 15, kind: input, shape index: {}]
  %s16 = inlined_call_operand.vmem [shape: f32[2,1,128], index: 16, kind: input, shape index: {}]
  %s17 = inlined_call_operand.vmem [shape: f32[2,1,128], index: 17, kind: input, shape index: {}]
  %s18 = inlined_call_operand.vmem [shape: f32[1,128], index: 18, kind: input, shape index: {}]
  %s19 = inlined_call_operand.vmem [shape: f32[1,128], index: 19, kind: input, shape index: {}]
  %s20 = inlined_call_operand.vmem [shape: f32[2,8,128], index: 20, kind: output, shape index: {}]
  %s21 = sld [smem:[#allocation0]]
  $region121: #{dino_v2_encoder.3} parent=0
    _
  %s23 = ssub.s32 1, %s21
  %s24 = scalar_select 0, %s23, %s21
  loop: start=0, step=1, limit=6
  $region2: #{dino_v2_encoder.3} parent=0 // loop_pre_header
    _
  $region3: #{dino_v2_encoder.3} parent=0 // loop_header
    %s26 = sphi 0, %s30
    %p27 = scmp.ge.s32.totalorder %s26, 6
    %s33 = sphi 0, %s45
    %s34 = sphi 0, %s41
    %s35 = sphi 0, %s33
    %s36 = sphi 0, %s34
    %s37 = sphi 0, %s35
    %s38 = sphi 0, %s36
    %s48 = sphi 0, %s50
    %s51 = sphi 0, %s48
    %s52 = sphi 0, %s51
    %s68 = sphi 0, %s52
    %s72 = sphi 0, %s72
    %s74 = sphi 0, %s72
    %s75 = sphi 0, %s74
    %s89 = sphi 0, %s75
    %s93 = sphi 0, %s93
    %s95 = sphi 0, %s93
    %s96 = sphi 0, %s95
    %s110 = sphi 0, %s96
    %s114 = sphi 0, %s114
    %s116 = sphi 0, %s114
    %s117 = sphi 0, %s116
    %s131 = sphi 0, %s117
    %s137 = sphi 0, %s139
    %s140 = sphi 0, %s137
    %s141 = sphi 0, %s140
    %s157 = sphi 0, %s141
    %s163 = sphi 0, %s165
    %s166 = sphi 0, %s163
    %s167 = sphi 0, %s166
    %s183 = sphi 0, %s167
    %s189 = sphi 0, %s191
    %s192 = sphi 0, %s189
    %s193 = sphi 0, %s192
    %s209 = sphi 0, %s193
    %s215 = sphi 0, %s217
    %s218 = sphi 0, %s215
    %s219 = sphi 0, %s218
    %s235 = sphi 0, %s219
    %s241 = sphi 0, %s243
    %s244 = sphi 0, %s241
    %s245 = sphi 0, %s244
    %s261 = sphi 0, %s245
    %s267 = sphi 0, %s269
    %s270 = sphi 0, %s267
    %s271 = sphi 0, %s270
    %s287 = sphi 0, %s271
    %s293 = sphi 0, %s295
    %s296 = sphi 0, %s293
    %s297 = sphi 0, %s296
    %s313 = sphi 0, %s297
    %s319 = sphi 0, %s321
    %s322 = sphi 0, %s319
    %s323 = sphi 0, %s322
    %s339 = sphi 0, %s323
    %s345 = sphi 0, %s347
    %s348 = sphi 0, %s345
    %s349 = sphi 0, %s348
    %s365 = sphi 0, %s349
    %s371 = sphi 0, %s373
    %s374 = sphi 0, %s371
    %s375 = sphi 0, %s374
    %s391 = sphi 0, %s375
    %s397 = sphi 0, %s399
    %s400 = sphi 0, %s397
    %s401 = sphi 0, %s400
    %s417 = sphi 0, %s401
    %s423 = sphi 0, %s425
    %s426 = sphi 0, %s423
    %s427 = sphi 0, %s426
    %s443 = sphi 0, %s427
    %s449 = sphi 0, %s451
    %s452 = sphi 0, %s449
    %s453 = sphi 0, %s452
    %s469 = sphi 0, %s453
    %s475 = sphi 0, %s477
    %s478 = sphi 0, %s475
    %s479 = sphi 0, %s478
    %s495 = sphi 0, %s479
    %s499 = sphi 0, %s499
    %s501 = sphi 0, %s499
    %s502 = sphi 0, %s501
    %s516 = sphi 0, %s502
    %s520 = sphi 0, %s520
    %s522 = sphi 0, %s520
    %s523 = sphi 0, %s522
    %s537 = sphi 0, %s523
    %s543 = sphi 0, %s545
    %s546 = sphi 0, %s543
    %s547 = sphi 0, %s546
    %s563 = sphi 0, %s547
  $region4: #{dino_v2_encoder.3} parent=0 // loop_header_branch
    %29 = sbr.rel (%p27) target = $region8
  $region5: #{dino_v2_encoder.3} parent=0 // loop_body
    %s31 = ssub.s32 %s26, 1
    %s32 = ssub.s32 %s26, 2
    %s39 = sadd.s32 1, %s34
    %p40 = scmp.ge.s32.totalorder %s39, 2
    %s41 = scalar_select %p40, 0, %s39
    %s42 = sadd.s32 1, %s33
    %s43 = scalar_select %p40, %s42, %s33
    %p44 = scmp.ge.s32.totalorder %s43, 2
    %s45 = scalar_select %p44, 0, %s43
    %s46 = ssub.s32 %s33, %s45
    %p47 = scmp.eq.s32.totalorder %s46, 0
    %s49 = sadd.s32 %s48, 1
    %s50 = scalar_select %p47, %s48, %s49
    %p53 = pneg %p47
    %p54 = scmp.eq.s32.totalorder %s26, 3
    %p55 = por %p53, %p54
    %p56 = scmp.ne.s32.totalorder %s48, %s51
    %p57 = scmp.eq.s32.totalorder %s26, 0
    %p58 = por %p56, %p57
    %p59 = scmp.ne.s32.totalorder %s48, %s51
    %p60 = scmp.eq.s32.totalorder %s31, 3
    %p61 = por %p59, %p60
    %p62 = scmp.ne.s32.totalorder %s51, %s52
    %p63 = scmp.eq.s32.totalorder %s31, 0
    %p64 = por %p62, %p63
    %p65 = scmp.ne.s32.totalorder %s51, %s52
    %p66 = scmp.eq.s32.totalorder %s32, 3
    %p67 = por %p65, %p66
    %p69 = scmp.ne.s32.totalorder %s52, %s68
    %p70 = scmp.eq.s32.totalorder %s32, 0
    %p71 = por %p69, %p70
    %s73 = sadd.s32 %s72, 1
    %p76 = scmp.eq.s32.totalorder %s26, 3
    %p77 = scmp.ne.s32.totalorder %s72, %s74
    %p78 = scmp.eq.s32.totalorder %s26, 0
    %p79 = por %p77, %p78
    %p80 = scmp.ne.s32.totalorder %s72, %s74
    %p81 = scmp.eq.s32.totalorder %s31, 3
    %p82 = por %p80, %p81
    %p83 = scmp.ne.s32.totalorder %s74, %s75
    %p84 = scmp.eq.s32.totalorder %s31, 0
    %p85 = por %p83, %p84
    %p86 = scmp.ne.s32.totalorder %s74, %s75
    %p87 = scmp.eq.s32.totalorder %s32, 3
    %p88 = por %p86, %p87
    %p90 = scmp.ne.s32.totalorder %s75, %s89
    %p91 = scmp.eq.s32.totalorder %s32, 0
    %p92 = por %p90, %p91
    %s94 = sadd.s32 %s93, 1
    %p97 = scmp.eq.s32.totalorder %s26, 3
    %p98 = scmp.ne.s32.totalorder %s93, %s95
    %p99 = scmp.eq.s32.totalorder %s26, 0
    %p100 = por %p98, %p99
    %p101 = scmp.ne.s32.totalorder %s93, %s95
    %p102 = scmp.eq.s32.totalorder %s31, 3
    %p103 = por %p101, %p102
    %p104 = scmp.ne.s32.totalorder %s95, %s96
    %p105 = scmp.eq.s32.totalorder %s31, 0
    %p106 = por %p104, %p105
    %p107 = scmp.ne.s32.totalorder %s95, %s96
    %p108 = scmp.eq.s32.totalorder %s32, 3
    %p109 = por %p107, %p108
    %p111 = scmp.ne.s32.totalorder %s96, %s110
    %p112 = scmp.eq.s32.totalorder %s32, 0
    %p113 = por %p111, %p112
    %s115 = sadd.s32 %s114, 1
    %p118 = scmp.eq.s32.totalorder %s26, 3
    %p119 = scmp.ne.s32.totalorder %s114, %s116
    %p120 = scmp.eq.s32.totalorder %s26, 0
    %p121 = por %p119, %p120
    %p122 = scmp.ne.s32.totalorder %s114, %s116
    %p123 = scmp.eq.s32.totalorder %s31, 3
    %p124 = por %p122, %p123
    %p125 = scmp.ne.s32.totalorder %s116, %s117
    %p126 = scmp.eq.s32.totalorder %s31, 0
    %p127 = por %p125, %p126
    %p128 = scmp.ne.s32.totalorder %s116, %s117
    %p129 = scmp.eq.s32.totalorder %s32, 3
    %p130 = por %p128, %p129
    %p132 = scmp.ne.s32.totalorder %s117, %s131
    %p133 = scmp.eq.s32.totalorder %s32, 0
    %p134 = por %p132, %p133
    %s135 = ssub.s32 %s34, %s41
    %p136 = scmp.eq.s32.totalorder %s135, 0
    %s138 = sadd.s32 %s137, 1
    %s139 = scalar_select %p136, %s137, %s138
    %p142 = pneg %p136
    %p143 = scmp.eq.s32.totalorder %s26, 3
    %p144 = por %p142, %p143
    %p145 = scmp.ne.s32.totalorder %s137, %s140
    %p146 = scmp.eq.s32.totalorder %s26, 0
    %p147 = por %p145, %p146
    %p148 = scmp.ne.s32.totalorder %s137, %s140
    %p149 = scmp.eq.s32.totalorder %s31, 3
    %p150 = por %p148, %p149
    %p151 = scmp.ne.s32.totalorder %s140, %s141
    %p152 = scmp.eq.s32.totalorder %s31, 0
    %p153 = por %p151, %p152
    %p154 = scmp.ne.s32.totalorder %s140, %s141
    %p155 = scmp.eq.s32.totalorder %s32, 3
    %p156 = por %p154, %p155
    %p158 = scmp.ne.s32.totalorder %s141, %s157
    %p159 = scmp.eq.s32.totalorder %s32, 0
    %p160 = por %p158, %p159
    %s161 = ssub.s32 %s34, %s41
    %p162 = scmp.eq.s32.totalorder %s161, 0
    %s164 = sadd.s32 %s163, 1
    %s165 = scalar_select %p162, %s163, %s164
    %p168 = pneg %p162
    %p169 = scmp.eq.s32.totalorder %s26, 3
    %p170 = por %p168, %p169
    %p171 = scmp.ne.s32.totalorder %s163, %s166
    %p172 = scmp.eq.s32.totalorder %s26, 0
    %p173 = por %p171, %p172
    %p174 = scmp.ne.s32.totalorder %s163, %s166
    %p175 = scmp.eq.s32.totalorder %s31, 3
    %p176 = por %p174, %p175
    %p177 = scmp.ne.s32.totalorder %s166, %s167
    %p178 = scmp.eq.s32.totalorder %s31, 0
    %p179 = por %p177, %p178
    %p180 = scmp.ne.s32.totalorder %s166, %s167
    %p181 = scmp.eq.s32.totalorder %s32, 3
    %p182 = por %p180, %p181
    %p184 = scmp.ne.s32.totalorder %s167, %s183
    %p185 = scmp.eq.s32.totalorder %s32, 0
    %p186 = por %p184, %p185
    %s187 = ssub.s32 %s34, %s41
    %p188 = scmp.eq.s32.totalorder %s187, 0
    %s190 = sadd.s32 %s189, 1
    %s191 = scalar_select %p188, %s189, %s190
    %p194 = pneg %p188
    %p195 = scmp.eq.s32.totalorder %s26, 3
    %p196 = por %p194, %p195
    %p197 = scmp.ne.s32.totalorder %s189, %s192
    %p198 = scmp.eq.s32.totalorder %s26, 0
    %p199 = por %p197, %p198
    %p200 = scmp.ne.s32.totalorder %s189, %s192
    %p201 = scmp.eq.s32.totalorder %s31, 3
    %p202 = por %p200, %p201
    %p203 = scmp.ne.s32.totalorder %s192, %s193
    %p204 = scmp.eq.s32.totalorder %s31, 0
    %p205 = por %p203, %p204
    %p206 = scmp.ne.s32.totalorder %s192, %s193
    %p207 = scmp.eq.s32.totalorder %s32, 3
    %p208 = por %p206, %p207
    %p210 = scmp.ne.s32.totalorder %s193, %s209
    %p211 = scmp.eq.s32.totalorder %s32, 0
    %p212 = por %p210, %p211
    %s213 = ssub.s32 %s34, %s41
    %p214 = scmp.eq.s32.totalorder %s213, 0
    %s216 = sadd.s32 %s215, 1
    %s217 = scalar_select %p214, %s215, %s216
    %p220 = pneg %p214
    %p221 = scmp.eq.s32.totalorder %s26, 3
    %p222 = por %p220, %p221
    %p223 = scmp.ne.s32.totalorder %s215, %s218
    %p224 = scmp.eq.s32.totalorder %s26, 0
    %p225 = por %p223, %p224
    %p226 = scmp.ne.s32.totalorder %s215, %s218
    %p227 = scmp.eq.s32.totalorder %s31, 3
    %p228 = por %p226, %p227
    %p229 = scmp.ne.s32.totalorder %s218, %s219
    %p230 = scmp.eq.s32.totalorder %s31, 0
    %p231 = por %p229, %p230
    %p232 = scmp.ne.s32.totalorder %s218, %s219
    %p233 = scmp.eq.s32.totalorder %s32, 3
    %p234 = por %p232, %p233
    %p236 = scmp.ne.s32.totalorder %s219, %s235
    %p237 = scmp.eq.s32.totalorder %s32, 0
    %p238 = por %p236, %p237
    %s239 = ssub.s32 %s34, %s41
    %p240 = scmp.eq.s32.totalorder %s239, 0
    %s242 = sadd.s32 %s241, 1
    %s243 = scalar_select %p240, %s241, %s242
    %p246 = pneg %p240
    %p247 = scmp.eq.s32.totalorder %s26, 3
    %p248 = por %p246, %p247
    %p249 = scmp.ne.s32.totalorder %s241, %s244
    %p250 = scmp.eq.s32.totalorder %s26, 0
    %p251 = por %p249, %p250
    %p252 = scmp.ne.s32.totalorder %s241, %s244
    %p253 = scmp.eq.s32.totalorder %s31, 3
    %p254 = por %p252, %p253
    %p255 = scmp.ne.s32.totalorder %s244, %s245
    %p256 = scmp.eq.s32.totalorder %s31, 0
    %p257 = por %p255, %p256
    %p258 = scmp.ne.s32.totalorder %s244, %s245
    %p259 = scmp.eq.s32.totalorder %s32, 3
    %p260 = por %p258, %p259
    %p262 = scmp.ne.s32.totalorder %s245, %s261
    %p263 = scmp.eq.s32.totalorder %s32, 0
    %p264 = por %p262, %p263
    %s265 = ssub.s32 %s34, %s41
    %p266 = scmp.eq.s32.totalorder %s265, 0
    %s268 = sadd.s32 %s267, 1
    %s269 = scalar_select %p266, %s267, %s268
    %p272 = pneg %p266
    %p273 = scmp.eq.s32.totalorder %s26, 3
    %p274 = por %p272, %p273
    %p275 = scmp.ne.s32.totalorder %s267, %s270
    %p276 = scmp.eq.s32.totalorder %s26, 0
    %p277 = por %p275, %p276
    %p278 = scmp.ne.s32.totalorder %s267, %s270
    %p279 = scmp.eq.s32.totalorder %s31, 3
    %p280 = por %p278, %p279
    %p281 = scmp.ne.s32.totalorder %s270, %s271
    %p282 = scmp.eq.s32.totalorder %s31, 0
    %p283 = por %p281, %p282
    %p284 = scmp.ne.s32.totalorder %s270, %s271
    %p285 = scmp.eq.s32.totalorder %s32, 3
    %p286 = por %p284, %p285
    %p288 = scmp.ne.s32.totalorder %s271, %s287
    %p289 = scmp.eq.s32.totalorder %s32, 0
    %p290 = por %p288, %p289
    %s291 = ssub.s32 %s34, %s41
    %p292 = scmp.eq.s32.totalorder %s291, 0
    %s294 = sadd.s32 %s293, 1
    %s295 = scalar_select %p292, %s293, %s294
    %p298 = pneg %p292
    %p299 = scmp.eq.s32.totalorder %s26, 3
    %p300 = por %p298, %p299
    %p301 = scmp.ne.s32.totalorder %s293, %s296
    %p302 = scmp.eq.s32.totalorder %s26, 0
    %p303 = por %p301, %p302
    %p304 = scmp.ne.s32.totalorder %s293, %s296
    %p305 = scmp.eq.s32.totalorder %s31, 3
    %p306 = por %p304, %p305
    %p307 = scmp.ne.s32.totalorder %s296, %s297
    %p308 = scmp.eq.s32.totalorder %s31, 0
    %p309 = por %p307, %p308
    %p310 = scmp.ne.s32.totalorder %s296, %s297
    %p311 = scmp.eq.s32.totalorder %s32, 3
    %p312 = por %p310, %p311
    %p314 = scmp.ne.s32.totalorder %s297, %s313
    %p315 = scmp.eq.s32.totalorder %s32, 0
    %p316 = por %p314, %p315
    %s317 = ssub.s32 %s34, %s41
    %p318 = scmp.eq.s32.totalorder %s317, 0
    %s320 = sadd.s32 %s319, 1
    %s321 = scalar_select %p318, %s319, %s320
    %p324 = pneg %p318
    %p325 = scmp.eq.s32.totalorder %s26, 3
    %p326 = por %p324, %p325
    %p327 = scmp.ne.s32.totalorder %s319, %s322
    %p328 = scmp.eq.s32.totalorder %s26, 0
    %p329 = por %p327, %p328
    %p330 = scmp.ne.s32.totalorder %s319, %s322
    %p331 = scmp.eq.s32.totalorder %s31, 3
    %p332 = por %p330, %p331
    %p333 = scmp.ne.s32.totalorder %s322, %s323
    %p334 = scmp.eq.s32.totalorder %s31, 0
    %p335 = por %p333, %p334
    %p336 = scmp.ne.s32.totalorder %s322, %s323
    %p337 = scmp.eq.s32.totalorder %s32, 3
    %p338 = por %p336, %p337
    %p340 = scmp.ne.s32.totalorder %s323, %s339
    %p341 = scmp.eq.s32.totalorder %s32, 0
    %p342 = por %p340, %p341
    %s343 = ssub.s32 %s34, %s41
    %p344 = scmp.eq.s32.totalorder %s343, 0
    %s346 = sadd.s32 %s345, 1
    %s347 = scalar_select %p344, %s345, %s346
    %p350 = pneg %p344
    %p351 = scmp.eq.s32.totalorder %s26, 3
    %p352 = por %p350, %p351
    %p353 = scmp.ne.s32.totalorder %s345, %s348
    %p354 = scmp.eq.s32.totalorder %s26, 0
    %p355 = por %p353, %p354
    %p356 = scmp.ne.s32.totalorder %s345, %s348
    %p357 = scmp.eq.s32.totalorder %s31, 3
    %p358 = por %p356, %p357
    %p359 = scmp.ne.s32.totalorder %s348, %s349
    %p360 = scmp.eq.s32.totalorder %s31, 0
    %p361 = por %p359, %p360
    %p362 = scmp.ne.s32.totalorder %s348, %s349
    %p363 = scmp.eq.s32.totalorder %s32, 3
    %p364 = por %p362, %p363
    %p366 = scmp.ne.s32.totalorder %s349, %s365
    %p367 = scmp.eq.s32.totalorder %s32, 0
    %p368 = por %p366, %p367
    %s369 = ssub.s32 %s34, %s41
    %p370 = scmp.eq.s32.totalorder %s369, 0
    %s372 = sadd.s32 %s371, 1
    %s373 = scalar_select %p370, %s371, %s372
    %p376 = pneg %p370
    %p377 = scmp.eq.s32.totalorder %s26, 3
    %p378 = por %p376, %p377
    %p379 = scmp.ne.s32.totalorder %s371, %s374
    %p380 = scmp.eq.s32.totalorder %s26, 0
    %p381 = por %p379, %p380
    %p382 = scmp.ne.s32.totalorder %s371, %s374
    %p383 = scmp.eq.s32.totalorder %s31, 3
    %p384 = por %p382, %p383
    %p385 = scmp.ne.s32.totalorder %s374, %s375
    %p386 = scmp.eq.s32.totalorder %s31, 0
    %p387 = por %p385, %p386
    %p388 = scmp.ne.s32.totalorder %s374, %s375
    %p389 = scmp.eq.s32.totalorder %s32, 3
    %p390 = por %p388, %p389
    %p392 = scmp.ne.s32.totalorder %s375, %s391
    %p393 = scmp.eq.s32.totalorder %s32, 0
    %p394 = por %p392, %p393
    %s395 = ssub.s32 %s34, %s41
    %p396 = scmp.eq.s32.totalorder %s395, 0
    %s398 = sadd.s32 %s397, 1
    %s399 = scalar_select %p396, %s397, %s398
    %p402 = pneg %p396
    %p403 = scmp.eq.s32.totalorder %s26, 3
    %p404 = por %p402, %p403
    %p405 = scmp.ne.s32.totalorder %s397, %s400
    %p406 = scmp.eq.s32.totalorder %s26, 0
    %p407 = por %p405, %p406
    %p408 = scmp.ne.s32.totalorder %s397, %s400
    %p409 = scmp.eq.s32.totalorder %s31, 3
    %p410 = por %p408, %p409
    %p411 = scmp.ne.s32.totalorder %s400, %s401
    %p412 = scmp.eq.s32.totalorder %s31, 0
    %p413 = por %p411, %p412
    %p414 = scmp.ne.s32.totalorder %s400, %s401
    %p415 = scmp.eq.s32.totalorder %s32, 3
    %p416 = por %p414, %p415
    %p418 = scmp.ne.s32.totalorder %s401, %s417
    %p419 = scmp.eq.s32.totalorder %s32, 0
    %p420 = por %p418, %p419
    %s421 = ssub.s32 %s34, %s41
    %p422 = scmp.eq.s32.totalorder %s421, 0
    %s424 = sadd.s32 %s423, 1
    %s425 = scalar_select %p422, %s423, %s424
    %p428 = pneg %p422
    %p429 = scmp.eq.s32.totalorder %s26, 3
    %p430 = por %p428, %p429
    %p431 = scmp.ne.s32.totalorder %s423, %s426
    %p432 = scmp.eq.s32.totalorder %s26, 0
    %p433 = por %p431, %p432
    %p434 = scmp.ne.s32.totalorder %s423, %s426
    %p435 = scmp.eq.s32.totalorder %s31, 3
    %p436 = por %p434, %p435
    %p437 = scmp.ne.s32.totalorder %s426, %s427
    %p438 = scmp.eq.s32.totalorder %s31, 0
    %p439 = por %p437, %p438
    %p440 = scmp.ne.s32.totalorder %s426, %s427
    %p441 = scmp.eq.s32.totalorder %s32, 3
    %p442 = por %p440, %p441
    %p444 = scmp.ne.s32.totalorder %s427, %s443
    %p445 = scmp.eq.s32.totalorder %s32, 0
    %p446 = por %p444, %p445
    %s447 = ssub.s32 %s34, %s41
    %p448 = scmp.eq.s32.totalorder %s447, 0
    %s450 = sadd.s32 %s449, 1
    %s451 = scalar_select %p448, %s449, %s450
    %p454 = pneg %p448
    %p455 = scmp.eq.s32.totalorder %s26, 3
    %p456 = por %p454, %p455
    %p457 = scmp.ne.s32.totalorder %s449, %s452
    %p458 = scmp.eq.s32.totalorder %s26, 0
    %p459 = por %p457, %p458
    %p460 = scmp.ne.s32.totalorder %s449, %s452
    %p461 = scmp.eq.s32.totalorder %s31, 3
    %p462 = por %p460, %p461
    %p463 = scmp.ne.s32.totalorder %s452, %s453
    %p464 = scmp.eq.s32.totalorder %s31, 0
    %p465 = por %p463, %p464
    %p466 = scmp.ne.s32.totalorder %s452, %s453
    %p467 = scmp.eq.s32.totalorder %s32, 3
    %p468 = por %p466, %p467
    %p470 = scmp.ne.s32.totalorder %s453, %s469
    %p471 = scmp.eq.s32.totalorder %s32, 0
    %p472 = por %p470, %p471
    %s473 = ssub.s32 %s34, %s41
    %p474 = scmp.eq.s32.totalorder %s473, 0
    %s476 = sadd.s32 %s475, 1
    %s477 = scalar_select %p474, %s475, %s476
    %p480 = pneg %p474
    %p481 = scmp.eq.s32.totalorder %s26, 3
    %p482 = por %p480, %p481
    %p483 = scmp.ne.s32.totalorder %s475, %s478
    %p484 = scmp.eq.s32.totalorder %s26, 0
    %p485 = por %p483, %p484
    %p486 = scmp.ne.s32.totalorder %s475, %s478
    %p487 = scmp.eq.s32.totalorder %s31, 3
    %p488 = por %p486, %p487
    %p489 = scmp.ne.s32.totalorder %s478, %s479
    %p490 = scmp.eq.s32.totalorder %s31, 0
    %p491 = por %p489, %p490
    %p492 = scmp.ne.s32.totalorder %s478, %s479
    %p493 = scmp.eq.s32.totalorder %s32, 3
    %p494 = por %p492, %p493
    %p496 = scmp.ne.s32.totalorder %s479, %s495
    %p497 = scmp.eq.s32.totalorder %s32, 0
    %p498 = por %p496, %p497
    %s500 = sadd.s32 %s499, 1
    %p503 = scmp.eq.s32.totalorder %s26, 3
    %p504 = scmp.ne.s32.totalorder %s499, %s501
    %p505 = scmp.eq.s32.totalorder %s26, 0
    %p506 = por %p504, %p505
    %p507 = scmp.ne.s32.totalorder %s499, %s501
    %p508 = scmp.eq.s32.totalorder %s31, 3
    %p509 = por %p507, %p508
    %p510 = scmp.ne.s32.totalorder %s501, %s502
    %p511 = scmp.eq.s32.totalorder %s31, 0
    %p512 = por %p510, %p511
    %p513 = scmp.ne.s32.totalorder %s501, %s502
    %p514 = scmp.eq.s32.totalorder %s32, 3
    %p515 = por %p513, %p514
    %p517 = scmp.ne.s32.totalorder %s502, %s516
    %p518 = scmp.eq.s32.totalorder %s32, 0
    %p519 = por %p517, %p518
    %s521 = sadd.s32 %s520, 1
    %p524 = scmp.eq.s32.totalorder %s26, 3
    %p525 = scmp.ne.s32.totalorder %s520, %s522
    %p526 = scmp.eq.s32.totalorder %s26, 0
    %p527 = por %p525, %p526
    %p528 = scmp.ne.s32.totalorder %s520, %s522
    %p529 = scmp.eq.s32.totalorder %s31, 3
    %p530 = por %p528, %p529
    %p531 = scmp.ne.s32.totalorder %s522, %s523
    %p532 = scmp.eq.s32.totalorder %s31, 0
    %p533 = por %p531, %p532
    %p534 = scmp.ne.s32.totalorder %s522, %s523
    %p535 = scmp.eq.s32.totalorder %s32, 3
    %p536 = por %p534, %p535
    %p538 = scmp.ne.s32.totalorder %s523, %s537
    %p539 = scmp.eq.s32.totalorder %s32, 0
    %p540 = por %p538, %p539
    %s541 = ssub.s32 %s33, %s45
    %p542 = scmp.eq.s32.totalorder %s541, 0
    %s544 = sadd.s32 %s543, 1
    %s545 = scalar_select %p542, %s543, %s544
    %p548 = pneg %p542
    %p549 = scmp.eq.s32.totalorder %s26, 3
    %p550 = por %p548, %p549
    %p551 = scmp.ne.s32.totalorder %s543, %s546
    %p552 = scmp.eq.s32.totalorder %s26, 0
    %p553 = por %p551, %p552
    %p554 = scmp.ne.s32.totalorder %s543, %s546
    %p555 = scmp.eq.s32.totalorder %s31, 3
    %p556 = por %p554, %p555
    %p557 = scmp.ne.s32.totalorder %s546, %s547
    %p558 = scmp.eq.s32.totalorder %s31, 0
    %p559 = por %p557, %p558
    %p560 = scmp.ne.s32.totalorder %s546, %s547
    %p561 = scmp.eq.s32.totalorder %s32, 3
    %p562 = por %p560, %p561
    %p564 = scmp.ne.s32.totalorder %s547, %s563
    %p565 = scmp.eq.s32.totalorder %s32, 0
    %p566 = por %p564, %p565
    %p567 = scmp.le.s32.totalorder 1, %s26
    %p568 = scmp.lt.s32.totalorder %s26, 5
    %p569 = pnand %p567, %p568
    %p570 = pneg %p569
    // Predicated region
    $region9: #{dino_v2_encoder.3} parent=5 // pred_check
      _
    $region10: #{dino_v2_encoder.3} parent=5 // pred_check_branch
      %572 = sbr.rel (%p569) target = $region12
    $region11: #{dino_v2_encoder.3} parent=5 // pred_region
      %s573 = ssub.s32 %s26, 1
      // Predicated region
      $region13: #{dino_v2_encoder.3} parent=11 // pred_check
        %p574 = pneg %p85
      $region14: #{dino_v2_encoder.3} parent=11 // pred_check_branch
        %576 = sbr.rel (%p574) target = $region16
      $region15: #{dino_v2_encoder.3} parent=11 // pred_region
        _
      $region16: #{dino_v2_encoder.3} parent=11 // pred_fallthru
        _
      // Predicated region
      $region17: #{dino_v2_encoder.3} parent=11 // pred_check
        %p577 = pneg %p106
      $region18: #{dino_v2_encoder.3} parent=11 // pred_check_branch
        %579 = sbr.rel (%p577) target = $region20
      $region19: #{dino_v2_encoder.3} parent=11 // pred_region
        _
      $region20: #{dino_v2_encoder.3} parent=11 // pred_fallthru
        _
      // Predicated region
      $region21: #{dino_v2_encoder.3} parent=11 // pred_check
        %p580 = pneg %p127
      $region22: #{dino_v2_encoder.3} parent=11 // pred_check_branch
        %582 = sbr.rel (%p580) target = $region24
      $region23: #{dino_v2_encoder.3} parent=11 // pred_region
        _
      $region24: #{dino_v2_encoder.3} parent=11 // pred_fallthru
        _
      // Predicated region
      $region25: #{dino_v2_encoder.3} parent=11 // pred_check
        %p583 = pneg %p512
      $region26: #{dino_v2_encoder.3} parent=11 // pred_check_branch
        %585 = sbr.rel (%p583) target = $region28
      $region27: #{dino_v2_encoder.3} parent=11 // pred_region
        _
      $region28: #{dino_v2_encoder.3} parent=11 // pred_fallthru
        _
      // Predicated region
      $region29: #{dino_v2_encoder.3} parent=11 // pred_check
        %p586 = pneg %p533
      $region30: #{dino_v2_encoder.3} parent=11 // pred_check_branch
        %588 = sbr.rel (%p586) target = $region32
      $region31: #{dino_v2_encoder.3} parent=11 // pred_region
        _
      $region32: #{dino_v2_encoder.3} parent=11 // pred_fallthru
        _
    $region12: #{dino_v2_encoder.3} parent=5 // pred_fallthru
      _
    %p589 = scmp.lt.s32.totalorder %s26, 4
    // Predicated region
    $region33: #{dino_v2_encoder.3} parent=5 // pred_check
      %p590 = pneg %p589
    $region34: #{dino_v2_encoder.3} parent=5 // pred_check_branch
      %592 = sbr.rel (%p590) target = $region36
    $region35: #{dino_v2_encoder.3} parent=5 // pred_region
      // Predicated region
      $region37: #{dino_v2_encoder.3} parent=35 // pred_check
        %p593 = pneg %p58
      $region38: #{dino_v2_encoder.3} parent=35 // pred_check_branch
        %595 = sbr.rel (%p593) target = $region40
      $region39: #{dino_v2_encoder.3} parent=35 // pred_region
        %p596 = scmp.lt.s32.totalorder %s33, 1
        %s597 = scalar_select %p596, %s33, 1
        %s598 = smul.addr %s597, 5
        %s599 = smul.addr %s598, 8
        %s600 = scalar_lea.vmem %s0, %s599
      $region40: #{dino_v2_encoder.3} parent=35 // pred_fallthru
        _
      // Predicated region
      $region41: #{dino_v2_encoder.3} parent=35 // pred_check
        %p601 = pneg %p147
      $region42: #{dino_v2_encoder.3} parent=35 // pred_check_branch
        %603 = sbr.rel (%p601) target = $region44
      $region43: #{dino_v2_encoder.3} parent=35 // pred_region
        %p604 = scmp.lt.s32.totalorder %s34, 1
        %s605 = scalar_select %p604, %s34, 1
        %s606 = scalar_lea.vmem %s4, %s605
      $region44: #{dino_v2_encoder.3} parent=35 // pred_fallthru
        _
      // Predicated region
      $region45: #{dino_v2_encoder.3} parent=35 // pred_check
        %p607 = pneg %p173
      $region46: #{dino_v2_encoder.3} parent=35 // pred_check_branch
        %609 = sbr.rel (%p607) target = $region48
      $region47: #{dino_v2_encoder.3} parent=35 // pred_region
        %p610 = scmp.lt.s32.totalorder %s34, 1
        %s611 = scalar_select %p610, %s34, 1
        %s612 = scalar_lea.vmem %s5, %s611
      $region48: #{dino_v2_encoder.3} parent=35 // pred_fallthru
        _
      // Predicated region
      $region49: #{dino_v2_encoder.3} parent=35 // pred_check
        %p613 = pneg %p199
      $region50: #{dino_v2_encoder.3} parent=35 // pred_check_branch
        %615 = sbr.rel (%p613) target = $region52
      $region51: #{dino_v2_encoder.3} parent=35 // pred_region
        %p616 = scmp.lt.s32.totalorder %s34, 1
        %s617 = scalar_select %p616, %s34, 1
        %s618 = smul.addr %s617, 48
        %s619 = smul.addr %s618, 4
        %s620 = scalar_lea.vmem %s6, %s619
      $region52: #{dino_v2_encoder.3} parent=35 // pred_fallthru
        _
      // Predicated region
      $region53: #{dino_v2_encoder.3} parent=35 // pred_check
        %p621 = pneg %p225
      $region54: #{dino_v2_encoder.3} parent=35 // pred_check_branch
        %623 = sbr.rel (%p621) target = $region56
      $region55: #{dino_v2_encoder.3} parent=35 // pred_region
        %p624 = scmp.lt.s32.totalorder %s34, 1
        %s625 = scalar_select %p624, %s34, 1
        %s626 = smul.addr %s625, 3
        %s627 = scalar_lea.vmem %s7, %s626
      $region56: #{dino_v2_encoder.3} parent=35 // pred_fallthru
        _
      // Predicated region
      $region57: #{dino_v2_encoder.3} parent=35 // pred_check
        %p628 = pneg %p251
      $region58: #{dino_v2_encoder.3} parent=35 // pred_check_branch
        %630 = sbr.rel (%p628) target = $region60
      $region59: #{dino_v2_encoder.3} parent=35 // pred_region
        %p631 = scmp.lt.s32.totalorder %s34, 1
        %s632 = scalar_select %p631, %s34, 1
        %s633 = smul.addr %s632, 16
        %s634 = smul.addr %s633, 4
        %s635 = scalar_lea.vmem %s8, %s634
      $region60: #{dino_v2_encoder.3} parent=35 // pred_fallthru
        _
      // Predicated region
      $region61: #{dino_v2_encoder.3} parent=35 // pred_check
        %p636 = pneg %p277
      $region62: #{dino_v2_encoder.3} parent=35 // pred_check_branch
        %638 = sbr.rel (%p636) target = $region64
      $region63: #{dino_v2_encoder.3} parent=35 // pred_region
        %p639 = scmp.lt.s32.totalorder %s34, 1
        %s640 = scalar_select %p639, %s34, 1
        %s641 = scalar_lea.vmem %s9, %s640
      $region64: #{dino_v2_encoder.3} parent=35 // pred_fallthru
        _
      // Predicated region
      $region65: #{dino_v2_encoder.3} parent=35 // pred_check
        %p642 = pneg %p303
      $region66: #{dino_v2_encoder.3} parent=35 // pred_check_branch
        %644 = sbr.rel (%p642) target = $region68
      $region67: #{dino_v2_encoder.3} parent=35 // pred_region
        %p645 = scmp.lt.s32.totalorder %s34, 1
        %s646 = scalar_select %p645, %s34, 1
        %s647 = scalar_lea.vmem %s10, %s646
      $region68: #{dino_v2_encoder.3} parent=35 // pred_fallthru
        _
      // Predicated region
      $region69: #{dino_v2_encoder.3} parent=35 // pred_check
        %p648 = pneg %p329
      $region70: #{dino_v2_encoder.3} parent=35 // pred_check_branch
        %650 = sbr.rel (%p648) target = $region72
      $region71: #{dino_v2_encoder.3} parent=35 // pred_region
        %p651 = scmp.lt.s32.totalorder %s34, 1
        %s652 = scalar_select %p651, %s34, 1
        %s653 = scalar_lea.vmem %s11, %s652
      $region72: #{dino_v2_encoder.3} parent=35 // pred_fallthru
        _
      // Predicated region
      $region73: #{dino_v2_encoder.3} parent=35 // pred_check
        %p654 = pneg %p355
      $region74: #{dino_v2_encoder.3} parent=35 // pred_check_branch
        %656 = sbr.rel (%p654) target = $region76
      $region75: #{dino_v2_encoder.3} parent=35 // pred_region
        %p657 = scmp.lt.s32.totalorder %s34, 1
        %s658 = scalar_select %p657, %s34, 1
        %s659 = scalar_lea.vmem %s12, %s658
      $region76: #{dino_v2_encoder.3} parent=35 // pred_fallthru
        _
      // Predicated region
      $region77: #{dino_v2_encoder.3} parent=35 // pred_check
        %p660 = pneg %p381
      $region78: #{dino_v2_encoder.3} parent=35 // pred_check_branch
        %662 = sbr.rel (%p660) target = $region80
      $region79: #{dino_v2_encoder.3} parent=35 // pred_region
        %p663 = scmp.lt.s32.totalorder %s34, 1
        %s664 = scalar_select %p663, %s34, 1
        %s665 = smul.addr %s664, 64
        %s666 = smul.addr %s665, 4
        %s667 = scalar_lea.vmem %s13, %s666
      $region80: #{dino_v2_encoder.3} parent=35 // pred_fallthru
        _
      // Predicated region
      $region81: #{dino_v2_encoder.3} parent=35 // pred_check
        %p668 = pneg %p407
      $region82: #{dino_v2_encoder.3} parent=35 // pred_check_branch
        %670 = sbr.rel (%p668) target = $region84
      $region83: #{dino_v2_encoder.3} parent=35 // pred_region
        %p671 = scmp.lt.s32.totalorder %s34, 1
        %s672 = scalar_select %p671, %s34, 1
        %s673 = smul.addr %s672, 4
        %s674 = scalar_lea.vmem %s14, %s673
      $region84: #{dino_v2_encoder.3} parent=35 // pred_fallthru
        _
      // Predicated region
      $region85: #{dino_v2_encoder.3} parent=35 // pred_check
        %p675 = pneg %p433
      $region86: #{dino_v2_encoder.3} parent=35 // pred_check_branch
        %677 = sbr.rel (%p675) target = $region88
      $region87: #{dino_v2_encoder.3} parent=35 // pred_region
        %p678 = scmp.lt.s32.totalorder %s34, 1
        %s679 = scalar_select %p678, %s34, 1
        %s680 = smul.addr %s679, 64
        %s681 = smul.addr %s680, 4
        %s682 = scalar_lea.vmem %s15, %s681
      $region88: #{dino_v2_encoder.3} parent=35 // pred_fallthru
        _
      // Predicated region
      $region89: #{dino_v2_encoder.3} parent=35 // pred_check
        %p683 = pneg %p459
      $region90: #{dino_v2_encoder.3} parent=35 // pred_check_branch
        %685 = sbr.rel (%p683) target = $region92
      $region91: #{dino_v2_encoder.3} parent=35 // pred_region
        %p686 = scmp.lt.s32.totalorder %s34, 1
        %s687 = scalar_select %p686, %s34, 1
        %s688 = scalar_lea.vmem %s16, %s687
      $region92: #{dino_v2_encoder.3} parent=35 // pred_fallthru
        _
      // Predicated region
      $region93: #{dino_v2_encoder.3} parent=35 // pred_check
        %p689 = pneg %p485
      $region94: #{dino_v2_encoder.3} parent=35 // pred_check_branch
        %691 = sbr.rel (%p689) target = $region96
      $region95: #{dino_v2_encoder.3} parent=35 // pred_region
        %p692 = scmp.lt.s32.totalorder %s34, 1
        %s693 = scalar_select %p692, %s34, 1
        %s694 = scalar_lea.vmem %s17, %s693
      $region96: #{dino_v2_encoder.3} parent=35 // pred_fallthru
        _
    $region36: #{dino_v2_encoder.3} parent=5 // pred_fallthru
      _
    %p695 = scmp.le.s32.totalorder 1, %s26
    %p696 = scmp.lt.s32.totalorder %s26, 5
    %p697 = pnand %p695, %p696
    %p698 = pneg %p697
    // Predicated region
    $region97: #{dino_v2_encoder.3} parent=5 // pred_check
      _
    $region98: #{dino_v2_encoder.3} parent=5 // pred_check_branch
      %700 = sbr.rel (%p697) target = $region100
    $region99: #{dino_v2_encoder.3} parent=5 // pred_region
      %s701 = ssub.s32 %s26, 1
      %p702 = scmp.lt.s32.totalorder %s35, 1
      %s703 = scalar_select %p702, %s35, 1
      %s704 = smul.addr %s703, 5
      %s705 = smul.addr %s704, 8
      %s706 = scalar_lea.vmem %s0, %s705
      %p707 = pneg %p64
      %p708 = pneg %p61
      %p709 = pneg %p85
      %p710 = pneg %p82
      %p711 = pneg %p106
      %p712 = pneg %p103
      %p713 = pneg %p127
      %p714 = pneg %p124
      %p715 = scmp.lt.s32.totalorder %s36, 1
      %s716 = scalar_select %p715, %s36, 1
      %s717 = scalar_lea.vmem %s4, %s716
      %p718 = pneg %p153
      %p719 = pneg %p150
      %p720 = scmp.lt.s32.totalorder %s36, 1
      %s721 = scalar_select %p720, %s36, 1
      %s722 = scalar_lea.vmem %s5, %s721
      %p723 = pneg %p179
      %p724 = pneg %p176
      %p725 = scmp.lt.s32.totalorder %s36, 1
      %s726 = scalar_select %p725, %s36, 1
      %s727 = smul.addr %s726, 48
      %s728 = smul.addr %s727, 4
      %s729 = scalar_lea.vmem %s6, %s728
      %p730 = pneg %p205
      %p731 = pneg %p202
      %p732 = scmp.lt.s32.totalorder %s36, 1
      %s733 = scalar_select %p732, %s36, 1
      %s734 = smul.addr %s733, 3
      %s735 = scalar_lea.vmem %s7, %s734
      %p736 = pneg %p231
      %p737 = pneg %p228
      %p738 = scmp.lt.s32.totalorder %s36, 1
      %s739 = scalar_select %p738, %s36, 1
      %s740 = smul.addr %s739, 16
      %s741 = smul.addr %s740, 4
      %s742 = scalar_lea.vmem %s8, %s741
      %p743 = pneg %p257
      %p744 = pneg %p254
      %p745 = scmp.lt.s32.totalorder %s36, 1
      %s746 = scalar_select %p745, %s36, 1
      %s747 = scalar_lea.vmem %s9, %s746
      %p748 = pneg %p283
      %p749 = pneg %p280
      %p750 = scmp.lt.s32.totalorder %s36, 1
      %s751 = scalar_select %p750, %s36, 1
      %s752 = scalar_lea.vmem %s10, %s751
      %p753 = pneg %p309
      %p754 = pneg %p306
      %p755 = scmp.lt.s32.totalorder %s36, 1
      %s756 = scalar_select %p755, %s36, 1
      %s757 = scalar_lea.vmem %s11, %s756
      %p758 = pneg %p335
      %p759 = pneg %p332
      %p760 = scmp.lt.s32.totalorder %s36, 1
      %s761 = scalar_select %p760, %s36, 1
      %s762 = scalar_lea.vmem %s12, %s761
      %p763 = pneg %p361
      %p764 = pneg %p358
      %p765 = scmp.lt.s32.totalorder %s36, 1
      %s766 = scalar_select %p765, %s36, 1
      %s767 = smul.addr %s766, 64
      %s768 = smul.addr %s767, 4
      %s769 = scalar_lea.vmem %s13, %s768
      %p770 = pneg %p387
      %p771 = pneg %p384
      %p772 = scmp.lt.s32.totalorder %s36, 1
      %s773 = scalar_select %p772, %s36, 1
      %s774 = smul.addr %s773, 4
      %s775 = scalar_lea.vmem %s14, %s774
      %p776 = pneg %p413
      %p777 = pneg %p410
      %p778 = scmp.lt.s32.totalorder %s36, 1
      %s779 = scalar_select %p778, %s36, 1
      %s780 = smul.addr %s779, 64
      %s781 = smul.addr %s780, 4
      %s782 = scalar_lea.vmem %s15, %s781
      %p783 = pneg %p439
      %p784 = pneg %p436
      %p785 = scmp.lt.s32.totalorder %s36, 1
      %s786 = scalar_select %p785, %s36, 1
      %s787 = scalar_lea.vmem %s16, %s786
      %p788 = pneg %p465
      %p789 = pneg %p462
      %p790 = scmp.lt.s32.totalorder %s36, 1
      %s791 = scalar_select %p790, %s36, 1
      %s792 = scalar_lea.vmem %s17, %s791
      %p793 = pneg %p491
      %p794 = pneg %p488
      %p795 = pneg %p512
      %p796 = pneg %p509
      %p797 = pneg %p533
      %p798 = pneg %p530
      %p799 = pneg %p559
      %p800 = pneg %p556
      %p801 = scmp.lt.s32.totalorder %s35, 1
      %s802 = scalar_select %p801, %s35, 1
      %s803 = smul.addr %s802, 8
      %s804 = scalar_lea.vmem %s20, %s803
      %p805 = scmp.lt.s32.totalorder %s35, 1
      %s806 = scalar_select %p805, %s35, 1
      %s807 = smul.addr %s806, 5
      %s808 = smul.addr %s807, 8
      %s809 = scalar_lea.vmem %s0, %s808
      %p810 = scmp.lt.s32.totalorder %s36, 1
      %s811 = scalar_select %p810, %s36, 1
      %s812 = scalar_lea.vmem %s4, %s811
      %p813 = scmp.lt.s32.totalorder %s36, 1
      %s814 = scalar_select %p813, %s36, 1
      %s815 = scalar_lea.vmem %s5, %s814
      %p816 = scmp.lt.s32.totalorder %s36, 1
      %s817 = scalar_select %p816, %s36, 1
      %s818 = smul.addr %s817, 48
      %s819 = smul.addr %s818, 4
      %s820 = scalar_lea.vmem %s6, %s819
      %p821 = scmp.lt.s32.totalorder %s36, 1
      %s822 = scalar_select %p821, %s36, 1
      %s823 = smul.addr %s822, 3
      %s824 = scalar_lea.vmem %s7, %s823
      %p825 = scmp.lt.s32.totalorder %s36, 1
      %s826 = scalar_select %p825, %s36, 1
      %s827 = smul.addr %s826, 16
      %s828 = smul.addr %s827, 4
      %s829 = scalar_lea.vmem %s8, %s828
      %p830 = scmp.lt.s32.totalorder %s36, 1
      %s831 = scalar_select %p830, %s36, 1
      %s832 = scalar_lea.vmem %s9, %s831
      %p833 = scmp.lt.s32.totalorder %s36, 1
      %s834 = scalar_select %p833, %s36, 1
      %s835 = scalar_lea.vmem %s10, %s834
      %p836 = scmp.lt.s32.totalorder %s36, 1
      %s837 = scalar_select %p836, %s36, 1
      %s838 = scalar_lea.vmem %s11, %s837
      %p839 = scmp.lt.s32.totalorder %s36, 1
      %s840 = scalar_select %p839, %s36, 1
      %s841 = scalar_lea.vmem %s12, %s840
      %p842 = scmp.lt.s32.totalorder %s36, 1
      %s843 = scalar_select %p842, %s36, 1
      %s844 = smul.addr %s843, 64
      %s845 = smul.addr %s844, 4
      %s846 = scalar_lea.vmem %s13, %s845
      %p847 = scmp.lt.s32.totalorder %s36, 1
      %s848 = scalar_select %p847, %s36, 1
      %s849 = smul.addr %s848, 4
      %s850 = scalar_lea.vmem %s14, %s849
      %p851 = scmp.lt.s32.totalorder %s36, 1
      %s852 = scalar_select %p851, %s36, 1
      %s853 = smul.addr %s852, 64
      %s854 = smul.addr %s853, 4
      %s855 = scalar_lea.vmem %s15, %s854
      %p856 = scmp.lt.s32.totalorder %s36, 1
      %s857 = scalar_select %p856, %s36, 1
      %s858 = scalar_lea.vmem %s16, %s857
      %p859 = scmp.lt.s32.totalorder %s36, 1
      %s860 = scalar_select %p859, %s36, 1
      %s861 = scalar_lea.vmem %s17, %s860
      %p862 = scmp.lt.s32.totalorder %s35, 1
      %s863 = scalar_select %p862, %s35, 1
      %s864 = smul.addr %s863, 8
      %s865 = scalar_lea.vmem %s20, %s864
      %p867 = scmp.eq.s32.totalorder %s36, 0
      // Predicated region
      $region101: #{dino_v2_encoder.3} parent=99 // pred_check
        %p868 = pneg %p867
      $region102: #{dino_v2_encoder.3} parent=99 // pred_check_branch
        %870 = sbr.rel (%p868) target = $region104
      $region103: #{dino_v2_encoder.3} parent=99 // pred_region
        %v871 = vld [vmem:[%s809] sm:$0xff]
        %v872 = vld [vmem:[%s809 + $0x8] sm:$0xff]
        %v873 = vld [vmem:[%s809 + $0x10] sm:$0xff]
        %v874 = vld [vmem:[%s809 + $0x18] sm:$0xff]
        %v875 = vld [vmem:[%s809 + $0x20] sm:$0xff]
        %v876 = vld [vmem:[%s1] sm:$0xf]
        %v877 = vld [vmem:[%s1 + $0x4] sm:$0xf]
        %v878 = vld [vmem:[%s1 + $0x8] sm:$0xf]
        %v879 = vld [vmem:[%s1 + $0xc] sm:$0xf]
        %v880 = vld [vmem:[%s1 + $0x10] sm:$0xf]
        %v881 = vld [vmem:[%s1 + $0x14] sm:$0xf]
        %v882 = vld [vmem:[%s1 + $0x18] sm:$0xf]
        %v883 = vld [vmem:[%s1 + $0x1c] sm:$0xf]
        %v884 = vld [vmem:[%s1 + $0x20] sm:$0xf]
        %v885 = vld [vmem:[%s1 + $0x24] sm:$0xf]
        %v886 = vld [vmem:[%s1 + $0x28] sm:$0xf]
        %v887 = vld [vmem:[%s1 + $0x2c] sm:$0xf]
        %v888 = vld [vmem:[%s1 + $0x30] sm:$0xf]
        %v889 = vld [vmem:[%s1 + $0x34] sm:$0xf]
        %v890 = vld [vmem:[%s1 + $0x38] sm:$0xf]
        %v891 = vld [vmem:[%s1 + $0x3c] sm:$0xf]
        %v892 = vld [vmem:[%s1 + $0x40] sm:$0xf]
        %v893 = vld [vmem:[%s1 + $0x44] sm:$0xf]
        %v894 = vld [vmem:[%s1 + $0x48] sm:$0xf]
        %v895 = vld [vmem:[%s1 + $0x4c] sm:$0xf]
        %v896 = vld [vmem:[%s1 + $0x50] sm:$0xf]
        %v897 = vld [vmem:[%s1 + $0x54] sm:$0xf]
        %v898 = vld [vmem:[%s1 + $0x58] sm:$0xf]
        %v899 = vld [vmem:[%s1 + $0x5c] sm:$0xf]
        %v900 = vld [vmem:[%s1 + $0x60] sm:$0xf]
        %v901 = vld [vmem:[%s1 + $0x64] sm:$0xf]
        %v902 = vld [vmem:[%s1 + $0x68] sm:$0xf]
        %v903 = vld [vmem:[%s1 + $0x6c] sm:$0xf]
        %v904 = vld [vmem:[%s1 + $0x70] sm:$0xf]
        %v905 = vld [vmem:[%s1 + $0x74] sm:$0xf]
        %v906 = vld [vmem:[%s1 + $0x78] sm:$0xf]
        %v907 = vld [vmem:[%s1 + $0x7c] sm:$0xf]
        %v908 = vld [vmem:[%s1 + $0x80] sm:$0xf]
        %v909 = vld [vmem:[%s1 + $0x84] sm:$0xf]
        %v910 = vld [vmem:[%s1 + $0x88] sm:$0xf]
        %v911 = vld [vmem:[%s1 + $0x8c] sm:$0xf]
        %v912 = vld [vmem:[%s1 + $0x90] sm:$0xf]
        %v913 = vld [vmem:[%s1 + $0x94] sm:$0xf]
        %v914 = vld [vmem:[%s1 + $0x98] sm:$0xf]
        %v915 = vld [vmem:[%s1 + $0x9c] sm:$0xf]
        %v916 = vld [vmem:[%s1 + $0xa0] sm:$0xf]
        %v917 = vld [vmem:[%s1 + $0xa4] sm:$0xf]
        %v918 = vld [vmem:[%s1 + $0xa8] sm:$0xf]
        %v919 = vld [vmem:[%s1 + $0xac] sm:$0xf]
        %v920 = vld [vmem:[%s1 + $0xb0] sm:$0xf]
        %v921 = vld [vmem:[%s1 + $0xb4] sm:$0xf]
        %v922 = vld [vmem:[%s1 + $0xb8] sm:$0xf]
        %v923 = vld [vmem:[%s1 + $0xbc] sm:$0xf]
        %v924 = vld [vmem:[%s1 + $0xc0] sm:$0xf]
        %v925 = vld [vmem:[%s1 + $0xc4] sm:$0xf]
        %v926 = vld [vmem:[%s1 + $0xc8] sm:$0xf]
        %v927 = vld [vmem:[%s1 + $0xcc] sm:$0xf]
        %v928 = vld [vmem:[%s1 + $0xd0] sm:$0xf]
        %v929 = vld [vmem:[%s1 + $0xd4] sm:$0xf]
        %v930 = vld [vmem:[%s1 + $0xd8] sm:$0xf]
        %v931 = vld [vmem:[%s1 + $0xdc] sm:$0xf]
        %v932 = vld [vmem:[%s1 + $0xe0] sm:$0xf]
        %v933 = vld [vmem:[%s1 + $0xe4] sm:$0xf]
        %v934 = vld [vmem:[%s1 + $0xe8] sm:$0xf]
        %v935 = vld [vmem:[%s1 + $0xec] sm:$0xf]
        %v936 = vld [vmem:[%s1 + $0xf0] sm:$0xf]
        %v937 = vld [vmem:[%s1 + $0xf4] sm:$0xf]
        %v938 = vld [vmem:[%s1 + $0xf8] sm:$0xf]
        %v939 = vld [vmem:[%s1 + $0xfc] sm:$0xf]
        %v940 = vld [vmem:[%s1 + $0x100] sm:$0xf]
        %v941 = vld [vmem:[%s1 + $0x104] sm:$0xf]
        %v942 = vld [vmem:[%s1 + $0x108] sm:$0xf]
        %v943 = vld [vmem:[%s1 + $0x10c] sm:$0xf]
        %v944 = vld [vmem:[%s1 + $0x110] sm:$0xf]
        %v945 = vld [vmem:[%s1 + $0x114] sm:$0xf]
        %v946 = vld [vmem:[%s1 + $0x118] sm:$0xf]
        %v947 = vld [vmem:[%s1 + $0x11c] sm:$0xf]
        %v948 = vld [vmem:[%s1 + $0x120] sm:$0xf]
        %v949 = vld [vmem:[%s1 + $0x124] sm:$0x3]
        %v950 = vpack.c.bf16 %v871, %v871
        %v951 = vpack.c.bf16 %v872, %v872
        %v952 = vpack.c.bf16 %v873, %v873
        %v953 = vpack.c.bf16 %v874, %v874
        %v954 = vpack.c.bf16 %v875, %v875
        %v955 = vld [vmem:[%s2] sm:$0x1]
        %v957 = vlaneseq
        %v958 = vshrl.u32 %v957, 7
        %v959 = vsub.s32 0, %v958
        %v960 = vrot.slane %v955, %v959
        %v1036 = vunpack.c.l.b16 %v876
        %v1037 = vunpack.c.l.b16 %v877
        %v1038 = vunpack.c.l.b16 %v878
        %v1039 = vunpack.c.l.b16 %v879
        %v1040 = vunpack.c.l.b16 %v880
        %v1041 = vunpack.c.l.b16 %v881
        %v1042 = vunpack.c.l.b16 %v882
        %v1043 = vunpack.c.l.b16 %v883
        %v1044 = vunpack.c.l.b16 %v884
        %v1045 = vunpack.c.l.b16 %v885
        %v1046 = vunpack.c.l.b16 %v886
        %v1047 = vunpack.c.l.b16 %v887
        %v1048 = vunpack.c.l.b16 %v888
        %v1049 = vunpack.c.l.b16 %v889
        %v1050 = vunpack.c.l.b16 %v890
        %v1051 = vunpack.c.l.b16 %v891
        %v1052 = vunpack.c.l.b16 %v892
        %v1053 = vunpack.c.l.b16 %v893
        %v1054 = vunpack.c.l.b16 %v894
        %v1055 = vunpack.c.l.b16 %v895
        %v1056 = vunpack.c.l.b16 %v896
        %v1057 = vunpack.c.l.b16 %v897
        %v1058 = vunpack.c.l.b16 %v898
        %v1059 = vunpack.c.l.b16 %v899
        %v1060 = vunpack.c.l.b16 %v900
        %v1061 = vunpack.c.l.b16 %v901
        %v1062 = vunpack.c.l.b16 %v902
        %v1063 = vunpack.c.l.b16 %v903
        %v1064 = vunpack.c.l.b16 %v904
        %v1065 = vunpack.c.l.b16 %v905
        %v1066 = vunpack.c.l.b16 %v906
        %v1067 = vunpack.c.l.b16 %v907
        %v1068 = vunpack.c.l.b16 %v908
        %v1069 = vunpack.c.l.b16 %v909
        %v1070 = vunpack.c.l.b16 %v910
        %v1071 = vunpack.c.l.b16 %v911
        %v1072 = vunpack.c.l.b16 %v912
        %v1073 = vunpack.c.l.b16 %v913
        %v1074 = vunpack.c.l.b16 %v914
        %v1075 = vunpack.c.l.b16 %v915
        %v1076 = vunpack.c.l.b16 %v916
        %v1077 = vunpack.c.l.b16 %v917
        %v1078 = vunpack.c.l.b16 %v918
        %v1079 = vunpack.c.l.b16 %v919
        %v1080 = vunpack.c.l.b16 %v920
        %v1081 = vunpack.c.l.b16 %v921
        %v1082 = vunpack.c.l.b16 %v922
        %v1083 = vunpack.c.l.b16 %v923
        %v1084 = vunpack.c.l.b16 %v924
        %v1085 = vunpack.c.l.b16 %v925
        %v1086 = vunpack.c.l.b16 %v926
        %v1087 = vunpack.c.l.b16 %v927
        %v1088 = vunpack.c.l.b16 %v928
        %v1089 = vunpack.c.l.b16 %v929
        %v1090 = vunpack.c.l.b16 %v930
        %v1091 = vunpack.c.l.b16 %v931
        %v1092 = vunpack.c.l.b16 %v932
        %v1093 = vunpack.c.l.b16 %v933
        %v1094 = vunpack.c.l.b16 %v934
        %v1095 = vunpack.c.l.b16 %v935
        %v1096 = vunpack.c.l.b16 %v936
        %v1097 = vunpack.c.l.b16 %v937
        %v1098 = vunpack.c.l.b16 %v938
        %v1099 = vunpack.c.l.b16 %v939
        %v1100 = vunpack.c.l.b16 %v940
        %v1101 = vunpack.c.l.b16 %v941
        %v1102 = vunpack.c.l.b16 %v942
        %v1103 = vunpack.c.l.b16 %v943
        %v1104 = vunpack.c.l.b16 %v944
        %v1105 = vunpack.c.l.b16 %v945
        %v1106 = vunpack.c.l.b16 %v946
        %v1107 = vunpack.c.l.b16 %v947
        %v1108 = vunpack.c.l.b16 %v948
        %v1109 = vunpack.c.l.b16 %v949
        %v1110 = vpack.c.b16 %v1037, %v1036
        %v1111 = vpack.c.b16 %v1039, %v1038
        %v1112 = vpack.c.b16 %v1041, %v1040
        %v1113 = vpack.c.b16 %v1043, %v1042
        %v1114 = vpack.c.b16 %v1045, %v1044
        %v1115 = vpack.c.b16 %v1047, %v1046
        %v1116 = vpack.c.b16 %v1049, %v1048
        %v1117 = vpack.c.b16 %v1051, %v1050
        %v1118 = vpack.c.b16 %v1053, %v1052
        %v1119 = vpack.c.b16 %v1055, %v1054
        %v1120 = vpack.c.b16 %v1057, %v1056
        %v1121 = vpack.c.b16 %v1059, %v1058
        %v1122 = vpack.c.b16 %v1061, %v1060
        %v1123 = vpack.c.b16 %v1063, %v1062
        %v1124 = vpack.c.b16 %v1065, %v1064
        %v1125 = vpack.c.b16 %v1067, %v1066
        %v1126 = vpack.c.b16 %v1069, %v1068
        %v1127 = vpack.c.b16 %v1071, %v1070
        %v1128 = vpack.c.b16 %v1073, %v1072
        %v1129 = vpack.c.b16 %v1075, %v1074
        %v1130 = vpack.c.b16 %v1077, %v1076
        %v1131 = vpack.c.b16 %v1079, %v1078
        %v1132 = vpack.c.b16 %v1081, %v1080
        %v1133 = vpack.c.b16 %v1083, %v1082
        %v1134 = vpack.c.b16 %v1085, %v1084
        %v1135 = vpack.c.b16 %v1087, %v1086
        %v1136 = vpack.c.b16 %v1089, %v1088
        %v1137 = vpack.c.b16 %v1091, %v1090
        %v1138 = vpack.c.b16 %v1093, %v1092
        %v1139 = vpack.c.b16 %v1095, %v1094
        %v1140 = vpack.c.b16 %v1097, %v1096
        %v1141 = vpack.c.b16 %v1099, %v1098
        %v1142 = vpack.c.b16 %v1101, %v1100
        %v1143 = vpack.c.b16 %v1103, %v1102
        %v1144 = vpack.c.b16 %v1105, %v1104
        %v1145 = vpack.c.b16 %v1107, %v1106
        %v1146 = vpack.c.b16 %v1109, %v1108
        %vm1183 = vcmask 621568
        %v1185 = vsel %vm1183, %v954, 0
        %vm1187 = vcmask 1045504
        %v1189 = vsel %vm1187, %v1146, 0
        %1191 = vmatprep.subr.bf16.mxu0 0
        %1192 = vmatpush1.bf16.msra.mxu0 %v1117
        %1193 = vmatprep.subr.bf16.mxu0 0
        %1194 = vmatpush1.bf16.msra.mxu0 %v1116
        %1195 = vmatprep.subr.bf16.mxu0 0
        %1196 = vmatpush1.bf16.msra.mxu0 %v1115
        %1197 = vmatprep.subr.bf16.mxu0 0
        %1198 = vmatpush1.bf16.msra.mxu0 %v1114
        %1199 = vmatprep.subr.bf16.mxu0 0
        %1200 = vmatpush1.bf16.msra.mxu0 %v1113
        %1201 = vmatprep.subr.bf16.mxu0 0
        %1202 = vmatpush1.bf16.msra.mxu0 %v1112
        %1203 = vmatprep.subr.bf16.mxu0 0
        %1204 = vmatpush1.bf16.msra.mxu0 %v1111
        %1205 = vmatprep.subr.bf16.mxu0 0
        %1206 = vmatpush1.bf16.msra.mxu0 %v1110
        %1207 = vmatprep.subr.bf16.mxu0 0
        %1208 = vmatpush2.bf16.msra.mxu0 %v1125
        %1209 = vmatprep.subr.bf16.mxu0 0
        %1210 = vmatpush2.bf16.msra.mxu0 %v1124
        %1211 = vmatprep.subr.bf16.mxu0 0
        %1212 = vmatpush2.bf16.msra.mxu0 %v1123
        %1213 = vmatprep.subr.bf16.mxu0 0
        %1214 = vmatpush2.bf16.msra.mxu0 %v1122
        %1215 = vmatprep.subr.bf16.mxu0 0
        %1216 = vmatpush2.bf16.msra.mxu0 %v1121
        %1217 = vmatprep.subr.bf16.mxu0 0
        %1218 = vmatpush2.bf16.msra.mxu0 %v1120
        %1219 = vmatprep.subr.bf16.mxu0 0
        %1220 = vmatpush2.bf16.msra.mxu0 %v1119
        %1221 = vmatprep.subr.bf16.mxu0 0
        %1222 = vmatpush2.bf16.msra.mxu0 %v1118
        %1223 = vmatprep.mubr.bf16.mxu0 %v951
        %1224 = vmatmul.mubr.bf16.gmra.mxu0 %v950
        %v1225 = vpop.f32.mrf.mxu0
        %v1226 = vadd.f32 %v960, %v1225
        %v1227 = vpop.f32.mrf.mxu0
        %v1228 = vpop.f32.mrf.mxu0
        %v1229 = vpop.f32.mrf.mxu0
        %1230 = vdwg.mxu0
        %1231 = vmatprep.subr.bf16.mxu0 0
        %1232 = vmatpush1.bf16.msra.mxu0 %v1133
        %1233 = vmatprep.subr.bf16.mxu0 0
        %1234 = vmatpush1.bf16.msra.mxu0 %v1132
        %1235 = vmatprep.subr.bf16.mxu0 0
        %1236 = vmatpush1.bf16.msra.mxu0 %v1131
        %1237 = vmatprep.subr.bf16.mxu0 0
        %1238 = vmatpush1.bf16.msra.mxu0 %v1130
        %1239 = vmatprep.subr.bf16.mxu0 0
        %1240 = vmatpush1.bf16.msra.mxu0 %v1129
        %1241 = vmatprep.subr.bf16.mxu0 0
        %1242 = vmatpush1.bf16.msra.mxu0 %v1128
        %1243 = vmatprep.subr.bf16.mxu0 0
        %1244 = vmatpush1.bf16.msra.mxu0 %v1127
        %1245 = vmatprep.subr.bf16.mxu0 0
        %1246 = vmatpush1.bf16.msra.mxu0 %v1126
        %1247 = vmatprep.subr.bf16.mxu0 0
        %1248 = vmatpush2.bf16.msra.mxu0 %v1141
        %1249 = vmatprep.subr.bf16.mxu0 0
        %1250 = vmatpush2.bf16.msra.mxu0 %v1140
        %1251 = vmatprep.subr.bf16.mxu0 0
        %1252 = vmatpush2.bf16.msra.mxu0 %v1139
        %1253 = vmatprep.subr.bf16.mxu0 0
        %1254 = vmatpush2.bf16.msra.mxu0 %v1138
        %1255 = vmatprep.subr.bf16.mxu0 0
        %1256 = vmatpush2.bf16.msra.mxu0 %v1137
        %1257 = vmatprep.subr.bf16.mxu0 0
        %1258 = vmatpush2.bf16.msra.mxu0 %v1136
        %1259 = vmatprep.subr.bf16.mxu0 0
        %1260 = vmatpush2.bf16.msra.mxu0 %v1135
        %1261 = vmatprep.subr.bf16.mxu0 0
        %1262 = vmatpush2.bf16.msra.mxu0 %v1134
        %1263 = vmatprep.mubr.bf16.mxu0 %v953
        %1264 = vmatmul.mubr.bf16.gmra.mxu0 %v952
        %v1265 = vpop.f32.mrf.mxu0
        %v1266 = vadd.f32 %v1226, %v1265
        %v1267 = vpop.f32.mrf.mxu0
        %v1268 = vpop.f32.mrf.mxu0
        %v1269 = vpop.f32.mrf.mxu0
        %1270 = vdwg.mxu0
        %1271 = vmatprep.subr.bf16.mxu0 0
        %1272 = vmatpush1.bf16.msra.mxu0 0
        %1273 = vmatprep.subr.bf16.mxu0 0
        %1274 = vmatpush1.bf16.msra.mxu0 0
        %1275 = vmatprep.subr.bf16.mxu0 0
        %1276 = vmatpush1.bf16.msra.mxu0 0
        %1277 = vmatprep.subr.bf16.mxu0 0
        %1278 = vmatpush1.bf16.msra.mxu0 %v1189
        %1279 = vmatprep.subr.bf16.mxu0 0
        %1280 = vmatpush1.bf16.msra.mxu0 %v1145
        %1281 = vmatprep.subr.bf16.mxu0 0
        %1282 = vmatpush1.bf16.msra.mxu0 %v1144
        %1283 = vmatprep.subr.bf16.mxu0 0
        %1284 = vmatpush1.bf16.msra.mxu0 %v1143
        %1285 = vmatprep.subr.bf16.mxu0 0
        %1286 = vmatpush1.bf16.msra.mxu0 %v1142
        %1287 = vmatprep.subr.bf16.mxu0 0
        %1288 = vmatpush2.bf16.msra.mxu0 0
        %1289 = vmatprep.subr.bf16.mxu0 0
        %1290 = vmatpush2.bf16.msra.mxu0 0
        %1291 = vmatprep.subr.bf16.mxu0 0
        %1292 = vmatpush2.bf16.msra.mxu0 0
        %1293 = vmatprep.subr.bf16.mxu0 0
        %1294 = vmatpush2.bf16.msra.mxu0 0
        %1295 = vmatprep.subr.bf16.mxu0 0
        %1296 = vmatpush2.bf16.msra.mxu0 0
        %1297 = vmatprep.subr.bf16.mxu0 0
        %1298 = vmatpush2.bf16.msra.mxu0 0
        %1299 = vmatprep.subr.bf16.mxu0 0
        %1300 = vmatpush2.bf16.msra.mxu0 0
        %1301 = vmatprep.subr.bf16.mxu0 0
        %1302 = vmatpush2.bf16.msra.mxu0 0
        %1303 = vmatprep.mubr.bf16.mxu0 0
        %1304 = vmatmul.mubr.bf16.gmra.mxu0 %v1185
        %v1305 = vpop.f32.mrf.mxu0
        %v1306 = vadd.f32 %v1266, %v1305
        %v1307 = vpop.f32.mrf.mxu0
        %v1308 = vpop.f32.mrf.mxu0
        %v1309 = vpop.f32.mrf.mxu0
        %1310 = vdwg.mxu0
        %v1311 = vld [vmem:[%s3] sm:$0xff]
        %v1312 = vadd.f32 %v1306, %v1311
        %1313 = vst [vmem:[#allocation2] sm:$0xff] %v1312
      $region104: #{dino_v2_encoder.3} parent=99 // pred_fallthru
        _
      %v1314 = vld [vmem:[#allocation2] sm:$0xff]
      %v1315 = vld [vmem:[%s812] sm:$0x1]
      %v1316 = vld [vmem:[%s815] sm:$0x1]
      %1317 = vadd.xlane.f32.xlu0 %v1314
      %v1318 = vpop.xlane.xlu0 %1317
      %v1319 = vrcp.pop 128.0
      %v1320 = vmul.f32 %v1318, %v1319
      %v1321 = vsub.f32 %v1314, %v1320
      %v1322 = vmul.f32 %v1321, %v1321
      %1323 = vadd.xlane.f32.xlu0 %v1322
      %v1324 = vpop.xlane.xlu0 %1323
      %v1325 = vmul.f32 %v1324, %v1319
      %v1326 = vadd.f32 %v1325, 1e-06
      %v1327 = vrsqrt.pop %v1326
      %v1328 = vmul.f32 %v1321, %v1327
      %v1330 = vlaneseq
      %v1331 = vshrl.u32 %v1330, 7
      %v1332 = vsub.s32 0, %v1331
      %v1333 = vrot.slane %v1315, %v1332
      %v1335 = vmul.f32 %v1328, %v1333
      %v1337 = vlaneseq
      %v1338 = vshrl.u32 %v1337, 7
      %v1339 = vsub.s32 0, %v1338
      %v1340 = vrot.slane %v1316, %v1339
      %v1342 = vadd.f32 %v1335, %v1340
      %v1343 = vld [vmem:[%s820] sm:$0xff]
      %v1344 = vld [vmem:[%s820 + $0x8] sm:$0xf]
      %v1345 = vld [vmem:[%s820 + $0xc] sm:$0xff]
      %v1346 = vld [vmem:[%s820 + $0x14] sm:$0xf]
      %v1347 = vld [vmem:[%s820 + $0x18] sm:$0xff]
      %v1348 = vld [vmem:[%s820 + $0x20] sm:$0xf]
      %v1349 = vld [vmem:[%s820 + $0x24] sm:$0xff]
      %v1350 = vld [vmem:[%s820 + $0x2c] sm:$0xf]
      %v1351 = vld [vmem:[%s820 + $0x30] sm:$0xff]
      %v1352 = vld [vmem:[%s820 + $0x38] sm:$0xf]
      %v1353 = vld [vmem:[%s820 + $0x3c] sm:$0xff]
      %v1354 = vld [vmem:[%s820 + $0x44] sm:$0xf]
      %v1355 = vld [vmem:[%s820 + $0x48] sm:$0xff]
      %v1356 = vld [vmem:[%s820 + $0x50] sm:$0xf]
      %v1357 = vld [vmem:[%s820 + $0x54] sm:$0xff]
      %v1358 = vld [vmem:[%s820 + $0x5c] sm:$0xf]
      %v1359 = vld [vmem:[%s820 + $0x60] sm:$0xff]
      %v1360 = vld [vmem:[%s820 + $0x68] sm:$0xf]
      %v1361 = vld [vmem:[%s820 + $0x6c] sm:$0xff]
      %v1362 = vld [vmem:[%s820 + $0x74] sm:$0xf]
      %v1363 = vld [vmem:[%s820 + $0x78] sm:$0xff]
      %v1364 = vld [vmem:[%s820 + $0x80] sm:$0xf]
      %v1365 = vld [vmem:[%s820 + $0x84] sm:$0xff]
      %v1366 = vld [vmem:[%s820 + $0x8c] sm:$0xf]
      %v1367 = vld [vmem:[%s820 + $0x90] sm:$0xff]
      %v1368 = vld [vmem:[%s820 + $0x98] sm:$0xf]
      %v1369 = vld [vmem:[%s820 + $0x9c] sm:$0xff]
      %v1370 = vld [vmem:[%s820 + $0xa4] sm:$0xf]
      %v1371 = vld [vmem:[%s820 + $0xa8] sm:$0xff]
      %v1372 = vld [vmem:[%s820 + $0xb0] sm:$0xf]
      %v1373 = vld [vmem:[%s820 + $0xb4] sm:$0xff]
      %v1374 = vld [vmem:[%s820 + $0xbc] sm:$0xf]
      %v1375 = vpack.c.bf16 %v1342, %v1342
      %v1376 = vld [vmem:[%s824] sm:$0x7]
      %v1378 = vlaneseq
      %v1379 = vshrl.u32 %v1378, 7
      %v1380 = vsub.s32 0, %v1379
      %v1381 = vrot.slane %v1376, %v1380
      %v1382 = vlaneseq
      %v1383 = vshrl.u32 %v1382, 7
      %v1384 = vsub.s32 1, %v1383
      %v1385 = vrot.slane %v1376, %v1384
      %v1386 = vlaneseq
      %v1387 = vshrl.u32 %v1386, 7
      %v1388 = vsub.s32 2, %v1387
      %v1389 = vrot.slane %v1376, %v1388
      %v1425 = vunpack.c.l.b16 %v1343
      %v1426 = vunpack.c.h.b16 %v1343
      %v1427 = vunpack.c.l.b16 %v1344
      %v1428 = vunpack.c.l.b16 %v1345
      %v1429 = vunpack.c.h.b16 %v1345
      %v1430 = vunpack.c.l.b16 %v1346
      %v1431 = vunpack.c.l.b16 %v1347
      %v1432 = vunpack.c.h.b16 %v1347
      %v1433 = vunpack.c.l.b16 %v1348
      %v1434 = vunpack.c.l.b16 %v1349
      %v1435 = vunpack.c.h.b16 %v1349
      %v1436 = vunpack.c.l.b16 %v1350
      %v1437 = vunpack.c.l.b16 %v1351
      %v1438 = vunpack.c.h.b16 %v1351
      %v1439 = vunpack.c.l.b16 %v1352
      %v1440 = vunpack.c.l.b16 %v1353
      %v1441 = vunpack.c.h.b16 %v1353
      %v1442 = vunpack.c.l.b16 %v1354
      %v1443 = vunpack.c.l.b16 %v1355
      %v1444 = vunpack.c.h.b16 %v1355
      %v1445 = vunpack.c.l.b16 %v1356
      %v1446 = vunpack.c.l.b16 %v1357
      %v1447 = vunpack.c.h.b16 %v1357
      %v1448 = vunpack.c.l.b16 %v1358
      %v1449 = vunpack.c.l.b16 %v1359
      %v1450 = vunpack.c.h.b16 %v1359
      %v1451 = vunpack.c.l.b16 %v1360
      %v1452 = vunpack.c.l.b16 %v1361
      %v1453 = vunpack.c.h.b16 %v1361
      %v1454 = vunpack.c.l.b16 %v1362
      %v1455 = vunpack.c.l.b16 %v1363
      %v1456 = vunpack.c.h.b16 %v1363
      %v1457 = vunpack.c.l.b16 %v1364
      %v1458 = vunpack.c.l.b16 %v1365
      %v1459 = vunpack.c.h.b16 %v1365
      %v1460 = vunpack.c.l.b16 %v1366
      %v1461 = vunpack.c.l.b16 %v1367
      %v1462 = vunpack.c.h.b16 %v1367
      %v1463 = vunpack.c.l.b16 %v1368
      %v1464 = vunpack.c.l.b16 %v1369
      %v1465 = vunpack.c.h.b16 %v1369
      %v1466 = vunpack.c.l.b16 %v1370
      %v1467 = vunpack.c.l.b16 %v1371
      %v1468 = vunpack.c.h.b16 %v1371
      %v1469 = vunpack.c.l.b16 %v1372
      %v1470 = vunpack.c.l.b16 %v1373
      %v1471 = vunpack.c.h.b16 %v1373
      %v1472 = vunpack.c.l.b16 %v1374
      %v1473 = vpack.c.b16 %v1428, %v1425
      %v1474 = vpack.c.b16 %v1429, %v1426
      %v1475 = vpack.c.b16 %v1430, %v1427
      %v1476 = vpack.c.b16 %v1434, %v1431
      %v1477 = vpack.c.b16 %v1435, %v1432
      %v1478 = vpack.c.b16 %v1436, %v1433
      %v1479 = vpack.c.b16 %v1440, %v1437
      %v1480 = vpack.c.b16 %v1441, %v1438
      %v1481 = vpack.c.b16 %v1442, %v1439
      %v1482 = vpack.c.b16 %v1446, %v1443
      %v1483 = vpack.c.b16 %v1447, %v1444
      %v1484 = vpack.c.b16 %v1448, %v1445
      %v1485 = vpack.c.b16 %v1452, %v1449
      %v1486 = vpack.c.b16 %v1453, %v1450
      %v1487 = vpack.c.b16 %v1454, %v1451
      %v1488 = vpack.c.b16 %v1458, %v1455
      %v1489 = vpack.c.b16 %v1459, %v1456
      %v1490 = vpack.c.b16 %v1460, %v1457
      %v1491 = vpack.c.b16 %v1464, %v1461
      %v1492 = vpack.c.b16 %v1465, %v1462
      %v1493 = vpack.c.b16 %v1466, %v1463
      %v1494 = vpack.c.b16 %v1470, %v1467
      %v1495 = vpack.c.b16 %v1471, %v1468
      %v1496 = vpack.c.b16 %v1472, %v1469
      %1521 = vmatprep.subr.bf16.mxu0 %v1495
      %1522 = vmatpush1.bf16.msra.mxu0 %v1494
      %1523 = vmatprep.subr.bf16.mxu0 %v1492
      %1524 = vmatpush1.bf16.msra.mxu0 %v1491
      %1525 = vmatprep.subr.bf16.mxu0 %v1489
      %1526 = vmatpush1.bf16.msra.mxu0 %v1488
      %1527 = vmatprep.subr.bf16.mxu0 %v1486
      %1528 = vmatpush1.bf16.msra.mxu0 %v1485
      %1529 = vmatprep.subr.bf16.mxu0 %v1483
      %1530 = vmatpush1.bf16.msra.mxu0 %v1482
      %1531 = vmatprep.subr.bf16.mxu0 %v1480
      %1532 = vmatpush1.bf16.msra.mxu0 %v1479
      %1533 = vmatprep.subr.bf16.mxu0 %v1477
      %1534 = vmatpush1.bf16.msra.mxu0 %v1476
      %1535 = vmatprep.subr.bf16.mxu0 %v1474
      %1536 = vmatpush1.bf16.msra.mxu0 %v1473
      %1537 = vmatprep.subr.bf16.mxu0 0
      %1538 = vmatpush2.bf16.msra.mxu0 0
      %1539 = vmatprep.subr.bf16.mxu0 0
      %1540 = vmatpush2.bf16.msra.mxu0 0
      %1541 = vmatprep.subr.bf16.mxu0 0
      %1542 = vmatpush2.bf16.msra.mxu0 0
      %1543 = vmatprep.subr.bf16.mxu0 0
      %1544 = vmatpush2.bf16.msra.mxu0 0
      %1545 = vmatprep.subr.bf16.mxu0 0
      %1546 = vmatpush2.bf16.msra.mxu0 0
      %1547 = vmatprep.subr.bf16.mxu0 0
      %1548 = vmatpush2.bf16.msra.mxu0 0
      %1549 = vmatprep.subr.bf16.mxu0 0
      %1550 = vmatpush2.bf16.msra.mxu0 0
      %1551 = vmatprep.subr.bf16.mxu0 0
      %1552 = vmatpush2.bf16.msra.mxu0 0
      %1553 = vmatprep.mubr.bf16.mxu0 0
      %1554 = vmatmul.mubr.bf16.gmra.mxu0 %v1375
      %v1555 = vpop.f32.mrf.mxu0
      %v1556 = vadd.f32 %v1381, %v1555
      %v1557 = vpop.f32.mrf.mxu0
      %v1558 = vadd.f32 %v1385, %v1557
      %v1559 = vpop.f32.mrf.mxu0
      %v1560 = vpop.f32.mrf.mxu0
      %1561 = vdwg.mxu0
      %1562 = vmatprep.subr.bf16.mxu0 0
      %1563 = vmatpush1.bf16.msra.mxu0 %v1496
      %1564 = vmatprep.subr.bf16.mxu0 0
      %1565 = vmatpush1.bf16.msra.mxu0 %v1493
      %1566 = vmatprep.subr.bf16.mxu0 0
      %1567 = vmatpush1.bf16.msra.mxu0 %v1490
      %1568 = vmatprep.subr.bf16.mxu0 0
      %1569 = vmatpush1.bf16.msra.mxu0 %v1487
      %1570 = vmatprep.subr.bf16.mxu0 0
      %1571 = vmatpush1.bf16.msra.mxu0 %v1484
      %1572 = vmatprep.subr.bf16.mxu0 0
      %1573 = vmatpush1.bf16.msra.mxu0 %v1481
      %1574 = vmatprep.subr.bf16.mxu0 0
      %1575 = vmatpush1.bf16.msra.mxu0 %v1478
      %1576 = vmatprep.subr.bf16.mxu0 0
      %1577 = vmatpush1.bf16.msra.mxu0 %v1475
      %1578 = vmatprep.subr.bf16.mxu0 0
      %1579 = vmatpush2.bf16.msra.mxu0 0
      %1580 = vmatprep.subr.bf16.mxu0 0
      %1581 = vmatpush2.bf16.msra.mxu0 0
      %1582 = vmatprep.subr.bf16.mxu0 0
      %1583 = vmatpush2.bf16.msra.mxu0 0
      %1584 = vmatprep.subr.bf16.mxu0 0
      %1585 = vmatpush2.bf16.msra.mxu0 0
      %1586 = vmatprep.subr.bf16.mxu0 0
      %1587 = vmatpush2.bf16.msra.mxu0 0
      %1588 = vmatprep.subr.bf16.mxu0 0
      %1589 = vmatpush2.bf16.msra.mxu0 0
      %1590 = vmatprep.subr.bf16.mxu0 0
      %1591 = vmatpush2.bf16.msra.mxu0 0
      %1592 = vmatprep.subr.bf16.mxu0 0
      %1593 = vmatpush2.bf16.msra.mxu0 0
      %1594 = vmatprep.mubr.bf16.mxu0 0
      %1595 = vmatmul.mubr.bf16.gmra.mxu0 %v1375
      %v1596 = vpop.f32.mrf.mxu0
      %v1597 = vadd.f32 %v1389, %v1596
      %v1598 = vpop.f32.mrf.mxu0
      %v1599 = vpop.f32.mrf.mxu0
      %v1600 = vpop.f32.mrf.mxu0
      %1601 = vdwg.mxu0
      %v1602 = vld [vmem:[%s829] sm:$0xf]
      %v1603 = vld [vmem:[%s829 + $0x4] sm:$0xf]
      %v1604 = vld [vmem:[%s829 + $0x8] sm:$0xf]
      %v1605 = vld [vmem:[%s829 + $0xc] sm:$0xf]
      %v1606 = vld [vmem:[%s829 + $0x10] sm:$0xf]
      %v1607 = vld [vmem:[%s829 + $0x14] sm:$0xf]
      %v1608 = vld [vmem:[%s829 + $0x18] sm:$0xf]
      %v1609 = vld [vmem:[%s829 + $0x1c] sm:$0xf]
      %v1610 = vld [vmem:[%s829 + $0x20] sm:$0xf]
      %v1611 = vld [vmem:[%s829 + $0x24] sm:$0xf]
      %v1612 = vld [vmem:[%s829 + $0x28] sm:$0xf]
      %v1613 = vld [vmem:[%s829 + $0x2c] sm:$0xf]
      %v1614 = vld [vmem:[%s829 + $0x30] sm:$0xf]
      %v1615 = vld [vmem:[%s829 + $0x34] sm:$0xf]
      %v1616 = vld [vmem:[%s829 + $0x38] sm:$0xf]
      %v1617 = vld [vmem:[%s829 + $0x3c] sm:$0xf]
      %v1618 = vlaneseq
      %v1619 = vand.u32 %v1618, 127
      %vm1620 = vcmp.lt.s32.totalorder %v1619, 5
      %v1621 = vpack.c.bf16 %v1556, %v1556
      %v1622 = vpack.c.bf16 %v1558, %v1558
      %vm1623 = vcmask 523264
      %v1625 = vsel %vm1623, %v1621, 0
      %v1628 = vsel %vm1623, %v1622, 0
      %1630 = vmatprep.subr.bf16.mxu0 0
      %1631 = vmatpush1.bf16.xpose.msra.mxu0 0
      %1632 = vmatprep.subr.bf16.mxu0 0
      %1633 = vmatpush1.bf16.xpose.msra.mxu0 0
      %1634 = vmatprep.subr.bf16.mxu0 0
      %1635 = vmatpush1.bf16.xpose.msra.mxu0 0
      %1636 = vmatprep.subr.bf16.mxu0 0
      %1637 = vmatpush1.bf16.xpose.msra.mxu0 0
      %1638 = vmatprep.subr.bf16.mxu0 0
      %1639 = vmatpush1.bf16.xpose.msra.mxu0 0
      %1640 = vmatprep.subr.bf16.mxu0 0
      %1641 = vmatpush1.bf16.xpose.msra.mxu0 0
      %1642 = vmatprep.subr.bf16.mxu0 0
      %1643 = vmatpush1.bf16.xpose.msra.mxu0 0
      %1644 = vmatprep.subr.bf16.mxu0 0
      %1645 = vmatpush1.bf16.xpose.msra.mxu0 %v1628
      %1646 = vmatprep.subr.bf16.mxu0 0
      %1647 = vmatpush2.bf16.xpose.msra.mxu0 0
      %1648 = vmatprep.subr.bf16.mxu0 0
      %1649 = vmatpush2.bf16.xpose.msra.mxu0 0
      %1650 = vmatprep.subr.bf16.mxu0 0
      %1651 = vmatpush2.bf16.xpose.msra.mxu0 0
      %1652 = vmatprep.subr.bf16.mxu0 0
      %1653 = vmatpush2.bf16.xpose.msra.mxu0 0
      %1654 = vmatprep.subr.bf16.mxu0 0
      %1655 = vmatpush2.bf16.xpose.msra.mxu0 0
      %1656 = vmatprep.subr.bf16.mxu0 0
      %1657 = vmatpush2.bf16.xpose.msra.mxu0 0
      %1658 = vmatprep.subr.bf16.mxu0 0
      %1659 = vmatpush2.bf16.xpose.msra.mxu0 0
      %1660 = vmatprep.subr.bf16.mxu0 0
      %1661 = vmatpush2.bf16.xpose.msra.mxu0 0
      %1662 = vmatprep.mubr.bf16.mxu0 0
      %1663 = vmatmul.mubr.bf16.gmra.mxu0 %v1625
      %v1664 = vpop.f32.mrf.mxu0
      %v1665 = vadd.f32 0.0, %v1664
      %v1666 = vpop.f32.mrf.mxu0
      %v1667 = vpop.f32.mrf.mxu0
      %v1668 = vpop.f32.mrf.mxu0
      %1669 = vdwg.mxu0
      %v1670 = vsel %vm1620, 1, 0
      %vm1671 = vcmp.eq.s32.totalorder %v1670, 1
      %v1672 = vsel %vm1671, %v1665, -1e+30
      %vm1673 = vcmask 64512
      %v1674 = vsel %vm1673, %v1672, -inf
      %1675 = vmax.xlane.f32.xlu0 %v1674
      %v1676 = vpop.xlane.xlu0 %1675
      %v1677 = vsub.f32 %v1672, %v1676
      %v1678 = vmul.f32 %v1677, 1.442695
      %v1679 = vpow.pop %v1678
      %v1680 = vsel %vm1673, %v1679, 0.0
      %1681 = vadd.xlane.f32.xlu0 %v1680
      %v1682 = vpop.xlane.xlu0 %1681
      %v1683 = vrcp.pop %v1682
      %v1684 = vmul.f32 %v1679, %v1683
      %v1685 = vpack.c.bf16 %v1684, %v1684
      %v1686 = vpack.c.bf16 %v1597, %v1597
      %v1688 = vsel %vm1673, %v1685, 0
      %vm1690 = vcmask 1043456
      %v1692 = vsel %vm1690, %v1686, 0
      %1694 = vmatprep.subr.bf16.mxu0 0
      %1695 = vmatpush1.bf16.msra.mxu0 0
      %1696 = vmatprep.subr.bf16.mxu0 0
      %1697 = vmatpush1.bf16.msra.mxu0 0
      %1698 = vmatprep.subr.bf16.mxu0 0
      %1699 = vmatpush1.bf16.msra.mxu0 0
      %1700 = vmatprep.subr.bf16.mxu0 0
      %1701 = vmatpush1.bf16.msra.mxu0 0
      %1702 = vmatprep.subr.bf16.mxu0 0
      %1703 = vmatpush1.bf16.msra.mxu0 0
      %1704 = vmatprep.subr.bf16.mxu0 0
      %1705 = vmatpush1.bf16.msra.mxu0 0
      %1706 = vmatprep.subr.bf16.mxu0 0
      %1707 = vmatpush1.bf16.msra.mxu0 0
      %1708 = vmatprep.subr.bf16.mxu0 0
      %1709 = vmatpush1.bf16.msra.mxu0 %v1692
      %1710 = vmatprep.subr.bf16.mxu0 0
      %1711 = vmatpush2.bf16.msra.mxu0 0
      %1712 = vmatprep.subr.bf16.mxu0 0
      %1713 = vmatpush2.bf16.msra.mxu0 0
      %1714 = vmatprep.subr.bf16.mxu0 0
      %1715 = vmatpush2.bf16.msra.mxu0 0
      %1716 = vmatprep.subr.bf16.mxu0 0
      %1717 = vmatpush2.bf16.msra.mxu0 0
      %1718 = vmatprep.subr.bf16.mxu0 0
      %1719 = vmatpush2.bf16.msra.mxu0 0
      %1720 = vmatprep.subr.bf16.mxu0 0
      %1721 = vmatpush2.bf16.msra.mxu0 0
      %1722 = vmatprep.subr.bf16.mxu0 0
      %1723 = vmatpush2.bf16.msra.mxu0 0
      %1724 = vmatprep.subr.bf16.mxu0 0
      %1725 = vmatpush2.bf16.msra.mxu0 0
      %1726 = vmatprep.mubr.bf16.mxu0 0
      %1727 = vmatmul.mubr.bf16.gmra.mxu0 %v1688
      %v1728 = vpop.f32.mrf.mxu0
      %v1729 = vadd.f32 0.0, %v1728
      %v1730 = vpop.f32.mrf.mxu0
      %v1731 = vpop.f32.mrf.mxu0
      %v1732 = vpop.f32.mrf.mxu0
      %1733 = vdwg.mxu0
      %v1734 = vpack.c.bf16 %v1729, %v1729
      %1736 = vrot.lane.b32.xlu0 %v1621, 64
      %v1737 = vpop.permute.xlu0 %1736
      %1739 = vrot.lane.b32.xlu0 %v1622, 64
      %v1740 = vpop.permute.xlu0 %1739
      %v1742 = vsel %vm1623, %v1737, 0
      %v1745 = vsel %vm1623, %v1740, 0
      %1747 = vmatprep.subr.bf16.mxu0 0
      %1748 = vmatpush1.bf16.xpose.msra.mxu0 0
      %1749 = vmatprep.subr.bf16.mxu0 0
      %1750 = vmatpush1.bf16.xpose.msra.mxu0 0
      %1751 = vmatprep.subr.bf16.mxu0 0
      %1752 = vmatpush1.bf16.xpose.msra.mxu0 0
      %1753 = vmatprep.subr.bf16.mxu0 0
      %1754 = vmatpush1.bf16.xpose.msra.mxu0 0
      %1755 = vmatprep.subr.bf16.mxu0 0
      %1756 = vmatpush1.bf16.xpose.msra.mxu0 0
      %1757 = vmatprep.subr.bf16.mxu0 0
      %1758 = vmatpush1.bf16.xpose.msra.mxu0 0
      %1759 = vmatprep.subr.bf16.mxu0 0
      %1760 = vmatpush1.bf16.xpose.msra.mxu0 0
      %1761 = vmatprep.subr.bf16.mxu0 0
      %1762 = vmatpush1.bf16.xpose.msra.mxu0 %v1745
      %1763 = vmatprep.subr.bf16.mxu0 0
      %1764 = vmatpush2.bf16.xpose.msra.mxu0 0
      %1765 = vmatprep.subr.bf16.mxu0 0
      %1766 = vmatpush2.bf16.xpose.msra.mxu0 0
      %1767 = vmatprep.subr.bf16.mxu0 0
      %1768 = vmatpush2.bf16.xpose.msra.mxu0 0
      %1769 = vmatprep.subr.bf16.mxu0 0
      %1770 = vmatpush2.bf16.xpose.msra.mxu0 0
      %1771 = vmatprep.subr.bf16.mxu0 0
      %1772 = vmatpush2.bf16.xpose.msra.mxu0 0
      %1773 = vmatprep.subr.bf16.mxu0 0
      %1774 = vmatpush2.bf16.xpose.msra.mxu0 0
      %1775 = vmatprep.subr.bf16.mxu0 0
      %1776 = vmatpush2.bf16.xpose.msra.mxu0 0
      %1777 = vmatprep.subr.bf16.mxu0 0
      %1778 = vmatpush2.bf16.xpose.msra.mxu0 0
      %1779 = vmatprep.mubr.bf16.mxu0 0
      %1780 = vmatmul.mubr.bf16.gmra.mxu0 %v1742
      %v1781 = vpop.f32.mrf.mxu0
      %v1782 = vadd.f32 0.0, %v1781
      %v1783 = vpop.f32.mrf.mxu0
      %v1784 = vpop.f32.mrf.mxu0
      %v1785 = vpop.f32.mrf.mxu0
      %1786 = vdwg.mxu0
      %v1787 = vsel %vm1671, %v1782, -1e+30
      %v1788 = vsel %vm1673, %v1787, -inf
      %1789 = vmax.xlane.f32.xlu0 %v1788
      %v1790 = vpop.xlane.xlu0 %1789
      %v1791 = vsub.f32 %v1787, %v1790
      %v1792 = vmul.f32 %v1791, 1.442695
      %v1793 = vpow.pop %v1792
      %v1794 = vsel %vm1673, %v1793, 0.0
      %1795 = vadd.xlane.f32.xlu0 %v1794
      %v1796 = vpop.xlane.xlu0 %1795
      %v1797 = vrcp.pop %v1796
      %v1798 = vmul.f32 %v1793, %v1797
      %v1799 = vpack.c.bf16 %v1798, %v1798
      %1801 = vrot.lane.b32.xlu0 %v1686, 64
      %v1802 = vpop.permute.xlu0 %1801
      %v1804 = vsel %vm1673, %v1799, 0
      %v1807 = vsel %vm1690, %v1802, 0
      %1809 = vmatprep.subr.bf16.mxu0 0
      %1810 = vmatpush1.bf16.msra.mxu0 0
      %1811 = vmatprep.subr.bf16.mxu0 0
      %1812 = vmatpush1.bf16.msra.mxu0 0
      %1813 = vmatprep.subr.bf16.mxu0 0
      %1814 = vmatpush1.bf16.msra.mxu0 0
      %1815 = vmatprep.subr.bf16.mxu0 0
      %1816 = vmatpush1.bf16.msra.mxu0 0
      %1817 = vmatprep.subr.bf16.mxu0 0
      %1818 = vmatpush1.bf16.msra.mxu0 0
      %1819 = vmatprep.subr.bf16.mxu0 0
      %1820 = vmatpush1.bf16.msra.mxu0 0
      %1821 = vmatprep.subr.bf16.mxu0 0
      %1822 = vmatpush1.bf16.msra.mxu0 0
      %1823 = vmatprep.subr.bf16.mxu0 0
      %1824 = vmatpush1.bf16.msra.mxu0 %v1807
      %1825 = vmatprep.subr.bf16.mxu0 0
      %1826 = vmatpush2.bf16.msra.mxu0 0
      %1827 = vmatprep.subr.bf16.mxu0 0
      %1828 = vmatpush2.bf16.msra.mxu0 0
      %1829 = vmatprep.subr.bf16.mxu0 0
      %1830 = vmatpush2.bf16.msra.mxu0 0
      %1831 = vmatprep.subr.bf16.mxu0 0
      %1832 = vmatpush2.bf16.msra.mxu0 0
      %1833 = vmatprep.subr.bf16.mxu0 0
      %1834 = vmatpush2.bf16.msra.mxu0 0
      %1835 = vmatprep.subr.bf16.mxu0 0
      %1836 = vmatpush2.bf16.msra.mxu0 0
      %1837 = vmatprep.subr.bf16.mxu0 0
      %1838 = vmatpush2.bf16.msra.mxu0 0
      %1839 = vmatprep.subr.bf16.mxu0 0
      %1840 = vmatpush2.bf16.msra.mxu0 0
      %1841 = vmatprep.mubr.bf16.mxu0 0
      %1842 = vmatmul.mubr.bf16.gmra.mxu0 %v1804
      %v1843 = vpop.f32.mrf.mxu0
      %v1844 = vadd.f32 0.0, %v1843
      %v1845 = vpop.f32.mrf.mxu0
      %v1846 = vpop.f32.mrf.mxu0
      %v1847 = vpop.f32.mrf.mxu0
      %1848 = vdwg.mxu0
      %v1849 = vpack.c.bf16 %v1844, %v1844
      %v1858 = vunpack.c.l.b16 %v1610
      %v1859 = vunpack.c.l.b16 %v1611
      %v1860 = vunpack.c.l.b16 %v1612
      %v1861 = vunpack.c.l.b16 %v1613
      %v1862 = vunpack.c.l.b16 %v1614
      %v1863 = vunpack.c.l.b16 %v1615
      %v1864 = vunpack.c.l.b16 %v1616
      %v1865 = vunpack.c.l.b16 %v1617
      %v1866 = vpack.c.b16 %v1859, %v1858
      %v1867 = vpack.c.b16 %v1861, %v1860
      %v1868 = vpack.c.b16 %v1863, %v1862
      %v1869 = vpack.c.b16 %v1865, %v1864
      %v1875 = vsel %vm1623, %v1849, 0
      %1877 = vmatprep.subr.bf16.mxu0 0
      %1878 = vmatpush1.bf16.msra.mxu0 0
      %1879 = vmatprep.subr.bf16.mxu0 0
      %1880 = vmatpush1.bf16.msra.mxu0 0
      %1881 = vmatprep.subr.bf16.mxu0 0
      %1882 = vmatpush1.bf16.msra.mxu0 0
      %1883 = vmatprep.subr.bf16.mxu0 0
      %1884 = vmatpush1.bf16.msra.mxu0 0
      %1885 = vmatprep.subr.bf16.mxu0 0
      %1886 = vmatpush1.bf16.msra.mxu0 %v1869
      %1887 = vmatprep.subr.bf16.mxu0 0
      %1888 = vmatpush1.bf16.msra.mxu0 %v1868
      %1889 = vmatprep.subr.bf16.mxu0 0
      %1890 = vmatpush1.bf16.msra.mxu0 %v1867
      %1891 = vmatprep.subr.bf16.mxu0 0
      %1892 = vmatpush1.bf16.msra.mxu0 %v1866
      %1893 = vmatprep.subr.bf16.mxu0 0
      %1894 = vmatpush2.bf16.msra.mxu0 0
      %1895 = vmatprep.subr.bf16.mxu0 0
      %1896 = vmatpush2.bf16.msra.mxu0 0
      %1897 = vmatprep.subr.bf16.mxu0 0
      %1898 = vmatpush2.bf16.msra.mxu0 0
      %1899 = vmatprep.subr.bf16.mxu0 0
      %1900 = vmatpush2.bf16.msra.mxu0 0
      %1901 = vmatprep.subr.bf16.mxu0 0
      %1902 = vmatpush2.bf16.msra.mxu0 0
      %1903 = vmatprep.subr.bf16.mxu0 0
      %1904 = vmatpush2.bf16.msra.mxu0 0
      %1905 = vmatprep.subr.bf16.mxu0 0
      %1906 = vmatpush2.bf16.msra.mxu0 0
      %1907 = vmatprep.subr.bf16.mxu0 0
      %1908 = vmatpush2.bf16.msra.mxu0 0
      %1909 = vmatprep.mubr.bf16.mxu0 0
      %1910 = vmatmul.mubr.bf16.gmra.mxu0 %v1875
      %v1911 = vpop.f32.mrf.mxu0
      %v1912 = vadd.f32 0.0, %v1911
      %v1913 = vpop.f32.mrf.mxu0
      %v1914 = vpop.f32.mrf.mxu0
      %v1915 = vpop.f32.mrf.mxu0
      %1916 = vdwg.mxu0
      %v1925 = vunpack.c.l.b16 %v1602
      %v1926 = vunpack.c.l.b16 %v1603
      %v1927 = vunpack.c.l.b16 %v1604
      %v1928 = vunpack.c.l.b16 %v1605
      %v1929 = vunpack.c.l.b16 %v1606
      %v1930 = vunpack.c.l.b16 %v1607
      %v1931 = vunpack.c.l.b16 %v1608
      %v1932 = vunpack.c.l.b16 %v1609
      %v1933 = vpack.c.b16 %v1926, %v1925
      %v1934 = vpack.c.b16 %v1928, %v1927
      %v1935 = vpack.c.b16 %v1930, %v1929
      %v1936 = vpack.c.b16 %v1932, %v1931
      %v1942 = vsel %vm1623, %v1734, 0
      %1944 = vmatprep.subr.bf16.mxu0 0
      %1945 = vmatpush1.bf16.msra.mxu0 0
      %1946 = vmatprep.subr.bf16.mxu0 0
      %1947 = vmatpush1.bf16.msra.mxu0 0
      %1948 = vmatprep.subr.bf16.mxu0 0
      %1949 = vmatpush1.bf16.msra.mxu0 0
      %1950 = vmatprep.subr.bf16.mxu0 0
      %1951 = vmatpush1.bf16.msra.mxu0 0
      %1952 = vmatprep.subr.bf16.mxu0 0
      %1953 = vmatpush1.bf16.msra.mxu0 %v1936
      %1954 = vmatprep.subr.bf16.mxu0 0
      %1955 = vmatpush1.bf16.msra.mxu0 %v1935
      %1956 = vmatprep.subr.bf16.mxu0 0
      %1957 = vmatpush1.bf16.msra.mxu0 %v1934
      %1958 = vmatprep.subr.bf16.mxu0 0
      %1959 = vmatpush1.bf16.msra.mxu0 %v1933
      %1960 = vmatprep.subr.bf16.mxu0 0
      %1961 = vmatpush2.bf16.msra.mxu0 0
      %1962 = vmatprep.subr.bf16.mxu0 0
      %1963 = vmatpush2.bf16.msra.mxu0 0
      %1964 = vmatprep.subr.bf16.mxu0 0
      %1965 = vmatpush2.bf16.msra.mxu0 0
      %1966 = vmatprep.subr.bf16.mxu0 0
      %1967 = vmatpush2.bf16.msra.mxu0 0
      %1968 = vmatprep.subr.bf16.mxu0 0
      %1969 = vmatpush2.bf16.msra.mxu0 0
      %1970 = vmatprep.subr.bf16.mxu0 0
      %1971 = vmatpush2.bf16.msra.mxu0 0
      %1972 = vmatprep.subr.bf16.mxu0 0
      %1973 = vmatpush2.bf16.msra.mxu0 0
      %1974 = vmatprep.subr.bf16.mxu0 0
      %1975 = vmatpush2.bf16.msra.mxu0 0
      %1976 = vmatprep.mubr.bf16.mxu0 0
      %1977 = vmatmul.mubr.bf16.gmra.mxu0 %v1942
      %v1978 = vpop.f32.mrf.mxu0
      %v1979 = vadd.f32 %v1912, %v1978
      %v1980 = vpop.f32.mrf.mxu0
      %v1981 = vpop.f32.mrf.mxu0
      %v1982 = vpop.f32.mrf.mxu0
      %1983 = vdwg.mxu0
      %v1984 = vld [vmem:[%s832] sm:$0x1]
      %v1986 = vlaneseq
      %v1987 = vshrl.u32 %v1986, 7
      %v1988 = vsub.s32 0, %v1987
      %v1989 = vrot.slane %v1984, %v1988
      %v1991 = vadd.f32 %v1979, %v1989
      %v1992 = vld [vmem:[%s835] sm:$0x1]
      %v1994 = vlaneseq
      %v1995 = vshrl.u32 %v1994, 7
      %v1996 = vsub.s32 0, %v1995
      %v1997 = vrot.slane %v1992, %v1996
      %v1999 = vmul.f32 %v1991, %v1997
      %v2000 = vadd.f32 %v1314, %v1999
      %v2001 = vld [vmem:[%s838] sm:$0x1]
      %v2002 = vld [vmem:[%s841] sm:$0x1]
      %2003 = vadd.xlane.f32.xlu0 %v2000
      %v2004 = vpop.xlane.xlu0 %2003
      %v2005 = vmul.f32 %v2004, %v1319
      %v2006 = vsub.f32 %v2000, %v2005
      %v2007 = vmul.f32 %v2006, %v2006
      %2008 = vadd.xlane.f32.xlu0 %v2007
      %v2009 = vpop.xlane.xlu0 %2008
      %v2010 = vmul.f32 %v2009, %v1319
      %v2011 = vadd.f32 %v2010, 1e-06
      %v2012 = vrsqrt.pop %v2011
      %v2013 = vmul.f32 %v2006, %v2012
      %v2015 = vlaneseq
      %v2016 = vshrl.u32 %v2015, 7
      %v2017 = vsub.s32 0, %v2016
      %v2018 = vrot.slane %v2001, %v2017
      %v2020 = vmul.f32 %v2013, %v2018
      %v2022 = vlaneseq
      %v2023 = vshrl.u32 %v2022, 7
      %v2024 = vsub.s32 0, %v2023
      %v2025 = vrot.slane %v2002, %v2024
      %v2027 = vadd.f32 %v2020, %v2025
      %v2028 = vld [vmem:[%s846] sm:$0xff]
      %v2029 = vld [vmem:[%s846 + $0x8] sm:$0xff]
      %v2030 = vld [vmem:[%s846 + $0x10] sm:$0xff]
      %v2031 = vld [vmem:[%s846 + $0x18] sm:$0xff]
      %v2032 = vld [vmem:[%s846 + $0x20] sm:$0xff]
      %v2033 = vld [vmem:[%s846 + $0x28] sm:$0xff]
      %v2034 = vld [vmem:[%s846 + $0x30] sm:$0xff]
      %v2035 = vld [vmem:[%s846 + $0x38] sm:$0xff]
      %v2036 = vld [vmem:[%s846 + $0x40] sm:$0xff]
      %v2037 = vld [vmem:[%s846 + $0x48] sm:$0xff]
      %v2038 = vld [vmem:[%s846 + $0x50] sm:$0xff]
      %v2039 = vld [vmem:[%s846 + $0x58] sm:$0xff]
      %v2040 = vld [vmem:[%s846 + $0x60] sm:$0xff]
      %v2041 = vld [vmem:[%s846 + $0x68] sm:$0xff]
      %v2042 = vld [vmem:[%s846 + $0x70] sm:$0xff]
      %v2043 = vld [vmem:[%s846 + $0x78] sm:$0xff]
      %v2044 = vld [vmem:[%s846 + $0x80] sm:$0xff]
      %v2045 = vld [vmem:[%s846 + $0x88] sm:$0xff]
      %v2046 = vld [vmem:[%s846 + $0x90] sm:$0xff]
      %v2047 = vld [vmem:[%s846 + $0x98] sm:$0xff]
      %v2048 = vld [vmem:[%s846 + $0xa0] sm:$0xff]
      %v2049 = vld [vmem:[%s846 + $0xa8] sm:$0xff]
      %v2050 = vld [vmem:[%s846 + $0xb0] sm:$0xff]
      %v2051 = vld [vmem:[%s846 + $0xb8] sm:$0xff]
      %v2052 = vld [vmem:[%s846 + $0xc0] sm:$0xff]
      %v2053 = vld [vmem:[%s846 + $0xc8] sm:$0xff]
      %v2054 = vld [vmem:[%s846 + $0xd0] sm:$0xff]
      %v2055 = vld [vmem:[%s846 + $0xd8] sm:$0xff]
      %v2056 = vld [vmem:[%s846 + $0xe0] sm:$0xff]
      %v2057 = vld [vmem:[%s846 + $0xe8] sm:$0xff]
      %v2058 = vld [vmem:[%s846 + $0xf0] sm:$0xff]
      %v2059 = vld [vmem:[%s846 + $0xf8] sm:$0xff]
      %v2060 = vpack.c.bf16 %v2027, %v2027
      %v2061 = vld [vmem:[%s850] sm:$0xf]
      %v2063 = vlaneseq
      %v2064 = vshrl.u32 %v2063, 7
      %v2065 = vsub.s32 0, %v2064
      %v2066 = vrot.slane %v2061, %v2065
      %v2067 = vlaneseq
      %v2068 = vshrl.u32 %v2067, 7
      %v2069 = vsub.s32 1, %v2068
      %v2070 = vrot.slane %v2061, %v2069
      %v2071 = vlaneseq
      %v2072 = vshrl.u32 %v2071, 7
      %v2073 = vsub.s32 2, %v2072
      %v2074 = vrot.slane %v2061, %v2073
      %v2075 = vlaneseq
      %v2076 = vshrl.u32 %v2075, 7
      %v2077 = vsub.s32 3, %v2076
      %v2078 = vrot.slane %v2061, %v2077
      %v2115 = vunpack.c.l.b16 %v2028
      %v2116 = vunpack.c.h.b16 %v2028
      %v2117 = vunpack.c.l.b16 %v2029
      %v2118 = vunpack.c.h.b16 %v2029
      %v2119 = vunpack.c.l.b16 %v2030
      %v2120 = vunpack.c.h.b16 %v2030
      %v2121 = vunpack.c.l.b16 %v2031
      %v2122 = vunpack.c.h.b16 %v2031
      %v2123 = vunpack.c.l.b16 %v2032
      %v2124 = vunpack.c.h.b16 %v2032
      %v2125 = vunpack.c.l.b16 %v2033
      %v2126 = vunpack.c.h.b16 %v2033
      %v2127 = vunpack.c.l.b16 %v2034
      %v2128 = vunpack.c.h.b16 %v2034
      %v2129 = vunpack.c.l.b16 %v2035
      %v2130 = vunpack.c.h.b16 %v2035
      %v2131 = vunpack.c.l.b16 %v2036
      %v2132 = vunpack.c.h.b16 %v2036
      %v2133 = vunpack.c.l.b16 %v2037
      %v2134 = vunpack.c.h.b16 %v2037
      %v2135 = vunpack.c.l.b16 %v2038
      %v2136 = vunpack.c.h.b16 %v2038
      %v2137 = vunpack.c.l.b16 %v2039
      %v2138 = vunpack.c.h.b16 %v2039
      %v2139 = vunpack.c.l.b16 %v2040
      %v2140 = vunpack.c.h.b16 %v2040
      %v2141 = vunpack.c.l.b16 %v2041
      %v2142 = vunpack.c.h.b16 %v2041
      %v2143 = vunpack.c.l.b16 %v2042
      %v2144 = vunpack.c.h.b16 %v2042
      %v2145 = vunpack.c.l.b16 %v2043
      %v2146 = vunpack.c.h.b16 %v2043
      %v2147 = vunpack.c.l.b16 %v2044
      %v2148 = vunpack.c.h.b16 %v2044
      %v2149 = vunpack.c.l.b16 %v2045
      %v2150 = vunpack.c.h.b16 %v2045
      %v2151 = vunpack.c.l.b16 %v2046
      %v2152 = vunpack.c.h.b16 %v2046
      %v2153 = vunpack.c.l.b16 %v2047
      %v2154 = vunpack.c.h.b16 %v2047
      %v2155 = vunpack.c.l.b16 %v2048
      %v2156 = vunpack.c.h.b16 %v2048
      %v2157 = vunpack.c.l.b16 %v2049
      %v2158 = vunpack.c.h.b16 %v2049
      %v2159 = vunpack.c.l.b16 %v2050
      %v2160 = vunpack.c.h.b16 %v2050
      %v2161 = vunpack.c.l.b16 %v2051
      %v2162 = vunpack.c.h.b16 %v2051
      %v2163 = vunpack.c.l.b16 %v2052
      %v2164 = vunpack.c.h.b16 %v2052
      %v2165 = vunpack.c.l.b16 %v2053
      %v2166 = vunpack.c.h.b16 %v2053
      %v2167 = vunpack.c.l.b16 %v2054
      %v2168 = vunpack.c.h.b16 %v2054
      %v2169 = vunpack.c.l.b16 %v2055
      %v2170 = vunpack.c.h.b16 %v2055
      %v2171 = vunpack.c.l.b16 %v2056
      %v2172 = vunpack.c.h.b16 %v2056
      %v2173 = vunpack.c.l.b16 %v2057
      %v2174 = vunpack.c.h.b16 %v2057
      %v2175 = vunpack.c.l.b16 %v2058
      %v2176 = vunpack.c.h.b16 %v2058
      %v2177 = vunpack.c.l.b16 %v2059
      %v2178 = vunpack.c.h.b16 %v2059
      %v2179 = vpack.c.b16 %v2119, %v2115
      %v2180 = vpack.c.b16 %v2120, %v2116
      %v2181 = vpack.c.b16 %v2121, %v2117
      %v2182 = vpack.c.b16 %v2122, %v2118
      %v2183 = vpack.c.b16 %v2127, %v2123
      %v2184 = vpack.c.b16 %v2128, %v2124
      %v2185 = vpack.c.b16 %v2129, %v2125
      %v2186 = vpack.c.b16 %v2130, %v2126
      %v2187 = vpack.c.b16 %v2135, %v2131
      %v2188 = vpack.c.b16 %v2136, %v2132
      %v2189 = vpack.c.b16 %v2137, %v2133
      %v2190 = vpack.c.b16 %v2138, %v2134
      %v2191 = vpack.c.b16 %v2143, %v2139
      %v2192 = vpack.c.b16 %v2144, %v2140
      %v2193 = vpack.c.b16 %v2145, %v2141
      %v2194 = vpack.c.b16 %v2146, %v2142
      %v2195 = vpack.c.b16 %v2151, %v2147
      %v2196 = vpack.c.b16 %v2152, %v2148
      %v2197 = vpack.c.b16 %v2153, %v2149
      %v2198 = vpack.c.b16 %v2154, %v2150
      %v2199 = vpack.c.b16 %v2159, %v2155
      %v2200 = vpack.c.b16 %v2160, %v2156
      %v2201 = vpack.c.b16 %v2161, %v2157
      %v2202 = vpack.c.b16 %v2162, %v2158
      %v2203 = vpack.c.b16 %v2167, %v2163
      %v2204 = vpack.c.b16 %v2168, %v2164
      %v2205 = vpack.c.b16 %v2169, %v2165
      %v2206 = vpack.c.b16 %v2170, %v2166
      %v2207 = vpack.c.b16 %v2175, %v2171
      %v2208 = vpack.c.b16 %v2176, %v2172
      %v2209 = vpack.c.b16 %v2177, %v2173
      %v2210 = vpack.c.b16 %v2178, %v2174
      %2243 = vmatprep.subr.bf16.mxu0 %v2208
      %2244 = vmatpush1.bf16.msra.mxu0 %v2207
      %2245 = vmatprep.subr.bf16.mxu0 %v2204
      %2246 = vmatpush1.bf16.msra.mxu0 %v2203
      %2247 = vmatprep.subr.bf16.mxu0 %v2200
      %2248 = vmatpush1.bf16.msra.mxu0 %v2199
      %2249 = vmatprep.subr.bf16.mxu0 %v2196
      %2250 = vmatpush1.bf16.msra.mxu0 %v2195
      %2251 = vmatprep.subr.bf16.mxu0 %v2192
      %2252 = vmatpush1.bf16.msra.mxu0 %v2191
      %2253 = vmatprep.subr.bf16.mxu0 %v2188
      %2254 = vmatpush1.bf16.msra.mxu0 %v2187
      %2255 = vmatprep.subr.bf16.mxu0 %v2184
      %2256 = vmatpush1.bf16.msra.mxu0 %v2183
      %2257 = vmatprep.subr.bf16.mxu0 %v2180
      %2258 = vmatpush1.bf16.msra.mxu0 %v2179
      %2259 = vmatprep.subr.bf16.mxu0 0
      %2260 = vmatpush2.bf16.msra.mxu0 0
      %2261 = vmatprep.subr.bf16.mxu0 0
      %2262 = vmatpush2.bf16.msra.mxu0 0
      %2263 = vmatprep.subr.bf16.mxu0 0
      %2264 = vmatpush2.bf16.msra.mxu0 0
      %2265 = vmatprep.subr.bf16.mxu0 0
      %2266 = vmatpush2.bf16.msra.mxu0 0
      %2267 = vmatprep.subr.bf16.mxu0 0
      %2268 = vmatpush2.bf16.msra.mxu0 0
      %2269 = vmatprep.subr.bf16.mxu0 0
      %2270 = vmatpush2.bf16.msra.mxu0 0
      %2271 = vmatprep.subr.bf16.mxu0 0
      %2272 = vmatpush2.bf16.msra.mxu0 0
      %2273 = vmatprep.subr.bf16.mxu0 0
      %2274 = vmatpush2.bf16.msra.mxu0 0
      %2275 = vmatprep.mubr.bf16.mxu0 0
      %2276 = vmatmul.mubr.bf16.gmra.mxu0 %v2060
      %v2277 = vpop.f32.mrf.mxu0
      %v2278 = vadd.f32 %v2066, %v2277
      %v2279 = vpop.f32.mrf.mxu0
      %v2280 = vadd.f32 %v2070, %v2279
      %v2281 = vpop.f32.mrf.mxu0
      %v2282 = vpop.f32.mrf.mxu0
      %2283 = vdwg.mxu0
      %2284 = vmatprep.subr.bf16.mxu0 %v2210
      %2285 = vmatpush1.bf16.msra.mxu0 %v2209
      %2286 = vmatprep.subr.bf16.mxu0 %v2206
      %2287 = vmatpush1.bf16.msra.mxu0 %v2205
      %2288 = vmatprep.subr.bf16.mxu0 %v2202
      %2289 = vmatpush1.bf16.msra.mxu0 %v2201
      %2290 = vmatprep.subr.bf16.mxu0 %v2198
      %2291 = vmatpush1.bf16.msra.mxu0 %v2197
      %2292 = vmatprep.subr.bf16.mxu0 %v2194
      %2293 = vmatpush1.bf16.msra.mxu0 %v2193
      %2294 = vmatprep.subr.bf16.mxu0 %v2190
      %2295 = vmatpush1.bf16.msra.mxu0 %v2189
      %2296 = vmatprep.subr.bf16.mxu0 %v2186
      %2297 = vmatpush1.bf16.msra.mxu0 %v2185
      %2298 = vmatprep.subr.bf16.mxu0 %v2182
      %2299 = vmatpush1.bf16.msra.mxu0 %v2181
      %2300 = vmatprep.subr.bf16.mxu0 0
      %2301 = vmatpush2.bf16.msra.mxu0 0
      %2302 = vmatprep.subr.bf16.mxu0 0
      %2303 = vmatpush2.bf16.msra.mxu0 0
      %2304 = vmatprep.subr.bf16.mxu0 0
      %2305 = vmatpush2.bf16.msra.mxu0 0
      %2306 = vmatprep.subr.bf16.mxu0 0
      %2307 = vmatpush2.bf16.msra.mxu0 0
      %2308 = vmatprep.subr.bf16.mxu0 0
      %2309 = vmatpush2.bf16.msra.mxu0 0
      %2310 = vmatprep.subr.bf16.mxu0 0
      %2311 = vmatpush2.bf16.msra.mxu0 0
      %2312 = vmatprep.subr.bf16.mxu0 0
      %2313 = vmatpush2.bf16.msra.mxu0 0
      %2314 = vmatprep.subr.bf16.mxu0 0
      %2315 = vmatpush2.bf16.msra.mxu0 0
      %2316 = vmatprep.mubr.bf16.mxu0 0
      %2317 = vmatmul.mubr.bf16.gmra.mxu0 %v2060
      %v2318 = vpop.f32.mrf.mxu0
      %v2319 = vadd.f32 %v2074, %v2318
      %v2320 = vpop.f32.mrf.mxu0
      %v2321 = vadd.f32 %v2078, %v2320
      %v2322 = vpop.f32.mrf.mxu0
      %v2323 = vpop.f32.mrf.mxu0
      %2324 = vdwg.mxu0
      %v2325 = vmul.f32 %v2278, 0.5
      %v2326 = vmul.f32 %v2280, 0.5
      %v2327 = vmul.f32 %v2319, 0.5
      %v2328 = vmul.f32 %v2321, 0.5
      %v2329 = vmul.f32 %v2278, 0.044715
      %v2330 = vmul.f32 %v2280, 0.044715
      %v2331 = vmul.f32 %v2319, 0.044715
      %v2332 = vmul.f32 %v2321, 0.044715
      %v2333 = vmul.f32 %v2329, %v2278
      %v2334 = vmul.f32 %v2330, %v2280
      %v2335 = vmul.f32 %v2331, %v2319
      %v2336 = vmul.f32 %v2332, %v2321
      %v2337 = vmul.f32 %v2333, %v2278
      %v2338 = vmul.f32 %v2334, %v2280
      %v2339 = vmul.f32 %v2335, %v2319
      %v2340 = vmul.f32 %v2336, %v2321
      %v2341 = vadd.f32 %v2278, %v2337
      %v2342 = vadd.f32 %v2280, %v2338
      %v2343 = vadd.f32 %v2319, %v2339
      %v2344 = vadd.f32 %v2321, %v2340
      %v2345 = vmul.f32 %v2341, 0.7978846
      %v2346 = vmul.f32 %v2342, 0.7978846
      %v2347 = vmul.f32 %v2343, 0.7978846
      %v2348 = vmul.f32 %v2344, 0.7978846
      %v2349 = vtanh.pop %v2345
      %v2350 = vtanh.pop %v2346
      %v2351 = vtanh.pop %v2347
      %v2352 = vtanh.pop %v2348
      %v2353 = vadd.f32 %v2349, 1.0
      %v2354 = vadd.f32 %v2350, 1.0
      %v2355 = vadd.f32 %v2351, 1.0
      %v2356 = vadd.f32 %v2352, 1.0
      %v2357 = vmul.f32 %v2325, %v2353
      %v2358 = vmul.f32 %v2326, %v2354
      %v2359 = vmul.f32 %v2327, %v2355
      %v2360 = vmul.f32 %v2328, %v2356
      %v2361 = vld [vmem:[%s855] sm:$0xf]
      %v2362 = vld [vmem:[%s855 + $0x4] sm:$0xf]
      %v2363 = vld [vmem:[%s855 + $0x8] sm:$0xf]
      %v2364 = vld [vmem:[%s855 + $0xc] sm:$0xf]
      %v2365 = vld [vmem:[%s855 + $0x10] sm:$0xf]
      %v2366 = vld [vmem:[%s855 + $0x14] sm:$0xf]
      %v2367 = vld [vmem:[%s855 + $0x18] sm:$0xf]
      %v2368 = vld [vmem:[%s855 + $0x1c] sm:$0xf]
      %v2369 = vld [vmem:[%s855 + $0x20] sm:$0xf]
      %v2370 = vld [vmem:[%s855 + $0x24] sm:$0xf]
      %v2371 = vld [vmem:[%s855 + $0x28] sm:$0xf]
      %v2372 = vld [vmem:[%s855 + $0x2c] sm:$0xf]
      %v2373 = vld [vmem:[%s855 + $0x30] sm:$0xf]
      %v2374 = vld [vmem:[%s855 + $0x34] sm:$0xf]
      %v2375 = vld [vmem:[%s855 + $0x38] sm:$0xf]
      %v2376 = vld [vmem:[%s855 + $0x3c] sm:$0xf]
      %v2377 = vld [vmem:[%s855 + $0x40] sm:$0xf]
      %v2378 = vld [vmem:[%s855 + $0x44] sm:$0xf]
      %v2379 = vld [vmem:[%s855 + $0x48] sm:$0xf]
      %v2380 = vld [vmem:[%s855 + $0x4c] sm:$0xf]
      %v2381 = vld [vmem:[%s855 + $0x50] sm:$0xf]
      %v2382 = vld [vmem:[%s855 + $0x54] sm:$0xf]
      %v2383 = vld [vmem:[%s855 + $0x58] sm:$0xf]
      %v2384 = vld [vmem:[%s855 + $0x5c] sm:$0xf]
      %v2385 = vld [vmem:[%s855 + $0x60] sm:$0xf]
      %v2386 = vld [vmem:[%s855 + $0x64] sm:$0xf]
      %v2387 = vld [vmem:[%s855 + $0x68] sm:$0xf]
      %v2388 = vld [vmem:[%s855 + $0x6c] sm:$0xf]
      %v2389 = vld [vmem:[%s855 + $0x70] sm:$0xf]
      %v2390 = vld [vmem:[%s855 + $0x74] sm:$0xf]
      %v2391 = vld [vmem:[%s855 + $0x78] sm:$0xf]
      %v2392 = vld [vmem:[%s855 + $0x7c] sm:$0xf]
      %v2393 = vld [vmem:[%s855 + $0x80] sm:$0xf]
      %v2394 = vld [vmem:[%s855 + $0x84] sm:$0xf]
      %v2395 = vld [vmem:[%s855 + $0x88] sm:$0xf]
      %v2396 = vld [vmem:[%s855 + $0x8c] sm:$0xf]
      %v2397 = vld [vmem:[%s855 + $0x90] sm:$0xf]
      %v2398 = vld [vmem:[%s855 + $0x94] sm:$0xf]
      %v2399 = vld [vmem:[%s855 + $0x98] sm:$0xf]
      %v2400 = vld [vmem:[%s855 + $0x9c] sm:$0xf]
      %v2401 = vld [vmem:[%s855 + $0xa0] sm:$0xf]
      %v2402 = vld [vmem:[%s855 + $0xa4] sm:$0xf]
      %v2403 = vld [vmem:[%s855 + $0xa8] sm:$0xf]
      %v2404 = vld [vmem:[%s855 + $0xac] sm:$0xf]
      %v2405 = vld [vmem:[%s855 + $0xb0] sm:$0xf]
      %v2406 = vld [vmem:[%s855 + $0xb4] sm:$0xf]
      %v2407 = vld [vmem:[%s855 + $0xb8] sm:$0xf]
      %v2408 = vld [vmem:[%s855 + $0xbc] sm:$0xf]
      %v2409 = vld [vmem:[%s855 + $0xc0] sm:$0xf]
      %v2410 = vld [vmem:[%s855 + $0xc4] sm:$0xf]
      %v2411 = vld [vmem:[%s855 + $0xc8] sm:$0xf]
      %v2412 = vld [vmem:[%s855 + $0xcc] sm:$0xf]
      %v2413 = vld [vmem:[%s855 + $0xd0] sm:$0xf]
      %v2414 = vld [vmem:[%s855 + $0xd4] sm:$0xf]
      %v2415 = vld [vmem:[%s855 + $0xd8] sm:$0xf]
      %v2416 = vld [vmem:[%s855 + $0xdc] sm:$0xf]
      %v2417 = vld [vmem:[%s855 + $0xe0] sm:$0xf]
      %v2418 = vld [vmem:[%s855 + $0xe4] sm:$0xf]
      %v2419 = vld [vmem:[%s855 + $0xe8] sm:$0xf]
      %v2420 = vld [vmem:[%s855 + $0xec] sm:$0xf]
      %v2421 = vld [vmem:[%s855 + $0xf0] sm:$0xf]
      %v2422 = vld [vmem:[%s855 + $0xf4] sm:$0xf]
      %v2423 = vld [vmem:[%s855 + $0xf8] sm:$0xf]
      %v2424 = vld [vmem:[%s855 + $0xfc] sm:$0xf]
      %v2425 = vpack.c.bf16 %v2357, %v2357
      %v2426 = vpack.c.bf16 %v2358, %v2358
      %v2427 = vpack.c.bf16 %v2359, %v2359
      %v2428 = vpack.c.bf16 %v2360, %v2360
      %v2429 = vld [vmem:[%s858] sm:$0x1]
      %v2431 = vlaneseq
      %v2432 = vshrl.u32 %v2431, 7
      %v2433 = vsub.s32 0, %v2432
      %v2434 = vrot.slane %v2429, %v2433
      %v2500 = vunpack.c.l.b16 %v2361
      %v2501 = vunpack.c.l.b16 %v2362
      %v2502 = vunpack.c.l.b16 %v2363
      %v2503 = vunpack.c.l.b16 %v2364
      %v2504 = vunpack.c.l.b16 %v2365
      %v2505 = vunpack.c.l.b16 %v2366
      %v2506 = vunpack.c.l.b16 %v2367
      %v2507 = vunpack.c.l.b16 %v2368
      %v2508 = vunpack.c.l.b16 %v2369
      %v2509 = vunpack.c.l.b16 %v2370
      %v2510 = vunpack.c.l.b16 %v2371
      %v2511 = vunpack.c.l.b16 %v2372
      %v2512 = vunpack.c.l.b16 %v2373
      %v2513 = vunpack.c.l.b16 %v2374
      %v2514 = vunpack.c.l.b16 %v2375
      %v2515 = vunpack.c.l.b16 %v2376
      %v2516 = vunpack.c.l.b16 %v2377
      %v2517 = vunpack.c.l.b16 %v2378
      %v2518 = vunpack.c.l.b16 %v2379
      %v2519 = vunpack.c.l.b16 %v2380
      %v2520 = vunpack.c.l.b16 %v2381
      %v2521 = vunpack.c.l.b16 %v2382
      %v2522 = vunpack.c.l.b16 %v2383
      %v2523 = vunpack.c.l.b16 %v2384
      %v2524 = vunpack.c.l.b16 %v2385
      %v2525 = vunpack.c.l.b16 %v2386
      %v2526 = vunpack.c.l.b16 %v2387
      %v2527 = vunpack.c.l.b16 %v2388
      %v2528 = vunpack.c.l.b16 %v2389
      %v2529 = vunpack.c.l.b16 %v2390
      %v2530 = vunpack.c.l.b16 %v2391
      %v2531 = vunpack.c.l.b16 %v2392
      %v2532 = vunpack.c.l.b16 %v2393
      %v2533 = vunpack.c.l.b16 %v2394
      %v2534 = vunpack.c.l.b16 %v2395
      %v2535 = vunpack.c.l.b16 %v2396
      %v2536 = vunpack.c.l.b16 %v2397
      %v2537 = vunpack.c.l.b16 %v2398
      %v2538 = vunpack.c.l.b16 %v2399
      %v2539 = vunpack.c.l.b16 %v2400
      %v2540 = vunpack.c.l.b16 %v2401
      %v2541 = vunpack.c.l.b16 %v2402
      %v2542 = vunpack.c.l.b16 %v2403
      %v2543 = vunpack.c.l.b16 %v2404
      %v2544 = vunpack.c.l.b16 %v2405
      %v2545 = vunpack.c.l.b16 %v2406
      %v2546 = vunpack.c.l.b16 %v2407
      %v2547 = vunpack.c.l.b16 %v2408
      %v2548 = vunpack.c.l.b16 %v2409
      %v2549 = vunpack.c.l.b16 %v2410
      %v2550 = vunpack.c.l.b16 %v2411
      %v2551 = vunpack.c.l.b16 %v2412
      %v2552 = vunpack.c.l.b16 %v2413
      %v2553 = vunpack.c.l.b16 %v2414
      %v2554 = vunpack.c.l.b16 %v2415
      %v2555 = vunpack.c.l.b16 %v2416
      %v2556 = vunpack.c.l.b16 %v2417
      %v2557 = vunpack.c.l.b16 %v2418
      %v2558 = vunpack.c.l.b16 %v2419
      %v2559 = vunpack.c.l.b16 %v2420
      %v2560 = vunpack.c.l.b16 %v2421
      %v2561 = vunpack.c.l.b16 %v2422
      %v2562 = vunpack.c.l.b16 %v2423
      %v2563 = vunpack.c.l.b16 %v2424
      %v2564 = vpack.c.b16 %v2501, %v2500
      %v2565 = vpack.c.b16 %v2503, %v2502
      %v2566 = vpack.c.b16 %v2505, %v2504
      %v2567 = vpack.c.b16 %v2507, %v2506
      %v2568 = vpack.c.b16 %v2509, %v2508
      %v2569 = vpack.c.b16 %v2511, %v2510
      %v2570 = vpack.c.b16 %v2513, %v2512
      %v2571 = vpack.c.b16 %v2515, %v2514
      %v2572 = vpack.c.b16 %v2517, %v2516
      %v2573 = vpack.c.b16 %v2519, %v2518
      %v2574 = vpack.c.b16 %v2521, %v2520
      %v2575 = vpack.c.b16 %v2523, %v2522
      %v2576 = vpack.c.b16 %v2525, %v2524
      %v2577 = vpack.c.b16 %v2527, %v2526
      %v2578 = vpack.c.b16 %v2529, %v2528
      %v2579 = vpack.c.b16 %v2531, %v2530
      %v2580 = vpack.c.b16 %v2533, %v2532
      %v2581 = vpack.c.b16 %v2535, %v2534
      %v2582 = vpack.c.b16 %v2537, %v2536
      %v2583 = vpack.c.b16 %v2539, %v2538
      %v2584 = vpack.c.b16 %v2541, %v2540
      %v2585 = vpack.c.b16 %v2543, %v2542
      %v2586 = vpack.c.b16 %v2545, %v2544
      %v2587 = vpack.c.b16 %v2547, %v2546
      %v2588 = vpack.c.b16 %v2549, %v2548
      %v2589 = vpack.c.b16 %v2551, %v2550
      %v2590 = vpack.c.b16 %v2553, %v2552
      %v2591 = vpack.c.b16 %v2555, %v2554
      %v2592 = vpack.c.b16 %v2557, %v2556
      %v2593 = vpack.c.b16 %v2559, %v2558
      %v2594 = vpack.c.b16 %v2561, %v2560
      %v2595 = vpack.c.b16 %v2563, %v2562
      %2628 = vmatprep.subr.bf16.mxu0 0
      %2629 = vmatpush1.bf16.msra.mxu0 %v2571
      %2630 = vmatprep.subr.bf16.mxu0 0
      %2631 = vmatpush1.bf16.msra.mxu0 %v2570
      %2632 = vmatprep.subr.bf16.mxu0 0
      %2633 = vmatpush1.bf16.msra.mxu0 %v2569
      %2634 = vmatprep.subr.bf16.mxu0 0
      %2635 = vmatpush1.bf16.msra.mxu0 %v2568
      %2636 = vmatprep.subr.bf16.mxu0 0
      %2637 = vmatpush1.bf16.msra.mxu0 %v2567
      %2638 = vmatprep.subr.bf16.mxu0 0
      %2639 = vmatpush1.bf16.msra.mxu0 %v2566
      %2640 = vmatprep.subr.bf16.mxu0 0
      %2641 = vmatpush1.bf16.msra.mxu0 %v2565
      %2642 = vmatprep.subr.bf16.mxu0 0
      %2643 = vmatpush1.bf16.msra.mxu0 %v2564
      %2644 = vmatprep.subr.bf16.mxu0 0
      %2645 = vmatpush2.bf16.msra.mxu0 %v2579
      %2646 = vmatprep.subr.bf16.mxu0 0
      %2647 = vmatpush2.bf16.msra.mxu0 %v2578
      %2648 = vmatprep.subr.bf16.mxu0 0
      %2649 = vmatpush2.bf16.msra.mxu0 %v2577
      %2650 = vmatprep.subr.bf16.mxu0 0
      %2651 = vmatpush2.bf16.msra.mxu0 %v2576
      %2652 = vmatprep.subr.bf16.mxu0 0
      %2653 = vmatpush2.bf16.msra.mxu0 %v2575
      %2654 = vmatprep.subr.bf16.mxu0 0
      %2655 = vmatpush2.bf16.msra.mxu0 %v2574
      %2656 = vmatprep.subr.bf16.mxu0 0
      %2657 = vmatpush2.bf16.msra.mxu0 %v2573
      %2658 = vmatprep.subr.bf16.mxu0 0
      %2659 = vmatpush2.bf16.msra.mxu0 %v2572
      %2660 = vmatprep.mubr.bf16.mxu0 %v2426
      %2661 = vmatmul.mubr.bf16.gmra.mxu0 %v2425
      %v2662 = vpop.f32.mrf.mxu0
      %v2663 = vadd.f32 %v2434, %v2662
      %v2664 = vpop.f32.mrf.mxu0
      %v2665 = vpop.f32.mrf.mxu0
      %v2666 = vpop.f32.mrf.mxu0
      %2667 = vdwg.mxu0
      %2668 = vmatprep.subr.bf16.mxu0 0
      %2669 = vmatpush1.bf16.msra.mxu0 %v2587
      %2670 = vmatprep.subr.bf16.mxu0 0
      %2671 = vmatpush1.bf16.msra.mxu0 %v2586
      %2672 = vmatprep.subr.bf16.mxu0 0
      %2673 = vmatpush1.bf16.msra.mxu0 %v2585
      %2674 = vmatprep.subr.bf16.mxu0 0
      %2675 = vmatpush1.bf16.msra.mxu0 %v2584
      %2676 = vmatprep.subr.bf16.mxu0 0
      %2677 = vmatpush1.bf16.msra.mxu0 %v2583
      %2678 = vmatprep.subr.bf16.mxu0 0
      %2679 = vmatpush1.bf16.msra.mxu0 %v2582
      %2680 = vmatprep.subr.bf16.mxu0 0
      %2681 = vmatpush1.bf16.msra.mxu0 %v2581
      %2682 = vmatprep.subr.bf16.mxu0 0
      %2683 = vmatpush1.bf16.msra.mxu0 %v2580
      %2684 = vmatprep.subr.bf16.mxu0 0
      %2685 = vmatpush2.bf16.msra.mxu0 %v2595
      %2686 = vmatprep.subr.bf16.mxu0 0
      %2687 = vmatpush2.bf16.msra.mxu0 %v2594
      %2688 = vmatprep.subr.bf16.mxu0 0
      %2689 = vmatpush2.bf16.msra.mxu0 %v2593
      %2690 = vmatprep.subr.bf16.mxu0 0
      %2691 = vmatpush2.bf16.msra.mxu0 %v2592
      %2692 = vmatprep.subr.bf16.mxu0 0
      %2693 = vmatpush2.bf16.msra.mxu0 %v2591
      %2694 = vmatprep.subr.bf16.mxu0 0
      %2695 = vmatpush2.bf16.msra.mxu0 %v2590
      %2696 = vmatprep.subr.bf16.mxu0 0
      %2697 = vmatpush2.bf16.msra.mxu0 %v2589
      %2698 = vmatprep.subr.bf16.mxu0 0
      %2699 = vmatpush2.bf16.msra.mxu0 %v2588
      %2700 = vmatprep.mubr.bf16.mxu0 %v2428
      %2701 = vmatmul.mubr.bf16.gmra.mxu0 %v2427
      %v2702 = vpop.f32.mrf.mxu0
      %v2703 = vadd.f32 %v2663, %v2702
      %v2704 = vpop.f32.mrf.mxu0
      %v2705 = vpop.f32.mrf.mxu0
      %v2706 = vpop.f32.mrf.mxu0
      %2707 = vdwg.mxu0
      %v2708 = vld [vmem:[%s861] sm:$0x1]
      %v2710 = vlaneseq
      %v2711 = vshrl.u32 %v2710, 7
      %v2712 = vsub.s32 0, %v2711
      %v2713 = vrot.slane %v2708, %v2712
      %v2715 = vmul.f32 %v2703, %v2713
      %v2716 = vadd.f32 %v2000, %v2715
      %2717 = vst [vmem:[#allocation2] sm:$0xff] %v2716
      %p2718 = scmp.eq.s32.totalorder %s36, 1
      // Predicated region
      $region105: #{dino_v2_encoder.3} parent=99 // pred_check
        %p2719 = pneg %p2718
      $region106: #{dino_v2_encoder.3} parent=99 // pred_check_branch
        %2721 = sbr.rel (%p2719) target = $region108
      $region107: #{dino_v2_encoder.3} parent=99 // pred_region
        %v2722 = vld [vmem:[%s18] sm:$0x1]
        %v2723 = vld [vmem:[%s19] sm:$0x1]
        %2724 = vadd.xlane.f32.xlu0 %v2716
        %v2725 = vpop.xlane.xlu0 %2724
        %v2726 = vmul.f32 %v2725, %v1319
        %v2727 = vsub.f32 %v2716, %v2726
        %v2728 = vmul.f32 %v2727, %v2727
        %2729 = vadd.xlane.f32.xlu0 %v2728
        %v2730 = vpop.xlane.xlu0 %2729
        %v2731 = vmul.f32 %v2730, %v1319
        %v2732 = vadd.f32 %v2731, 1e-06
        %v2733 = vrsqrt.pop %v2732
        %v2734 = vmul.f32 %v2727, %v2733
        %v2736 = vlaneseq
        %v2737 = vshrl.u32 %v2736, 7
        %v2738 = vsub.s32 0, %v2737
        %v2739 = vrot.slane %v2722, %v2738
        %v2741 = vmul.f32 %v2734, %v2739
        %v2743 = vlaneseq
        %v2744 = vshrl.u32 %v2743, 7
        %v2745 = vsub.s32 0, %v2744
        %v2746 = vrot.slane %v2723, %v2745
        %v2748 = vadd.f32 %v2741, %v2746
        %2749 = vst [vmem:[%s865] sm:$0xff] %v2748
      $region108: #{dino_v2_encoder.3} parent=99 // pred_fallthru
        _
      %p2750 = scmp.lt.s32.totalorder %s35, 1
      %s2751 = scalar_select %p2750, %s35, 1
      %s2752 = smul.addr %s2751, 8
      %s2753 = scalar_lea.vmem %s20, %s2752
      // Predicated region
      $region109: #{dino_v2_encoder.3} parent=99 // pred_check
        %p2754 = pneg %p556
      $region110: #{dino_v2_encoder.3} parent=99 // pred_check_branch
        %2756 = sbr.rel (%p2754) target = $region112
      $region111: #{dino_v2_encoder.3} parent=99 // pred_region
        _
      $region112: #{dino_v2_encoder.3} parent=99 // pred_fallthru
        _
    $region100: #{dino_v2_encoder.3} parent=5 // pred_fallthru
      _
    %p2757 = scmp.le.s32.totalorder 2, %s26
    // Predicated region
    $region113: #{dino_v2_encoder.3} parent=5 // pred_check
      %p2758 = pneg %p2757
    $region114: #{dino_v2_encoder.3} parent=5 // pred_check_branch
      %2760 = sbr.rel (%p2758) target = $region116
    $region115: #{dino_v2_encoder.3} parent=5 // pred_region
      %s2761 = ssub.s32 %s26, 2
      // Predicated region
      $region117: #{dino_v2_encoder.3} parent=115 // pred_check
        %p2762 = pneg %p562
      $region118: #{dino_v2_encoder.3} parent=115 // pred_check_branch
        %2764 = sbr.rel (%p2762) target = $region120
      $region119: #{dino_v2_encoder.3} parent=115 // pred_region
        %p2765 = scmp.lt.s32.totalorder %s37, 1
        %s2766 = scalar_select %p2765, %s37, 1
        %s2767 = smul.addr %s2766, 8
        %s2768 = scalar_lea.vmem %s20, %s2767
      $region120: #{dino_v2_encoder.3} parent=115 // pred_fallthru
        _
    $region116: #{dino_v2_encoder.3} parent=5 // pred_fallthru
      _
  $region6: #{dino_v2_encoder.3} parent=0 // loop_footer
    %s30 = sadd.s32 1, %s26
  $region7: #{dino_v2_encoder.3} parent=0 // loop_footer_branch
    %25 = sbr.rel target = $region3
  $region8: #{dino_v2_encoder.3} parent=0 // loop_exit
    _

</llo_original>
